<compile_context>
chip_gen: v7x
topology: tpu7x:2x2x1
jax: 0.10.0
libtpu: 0.0.40
codegen_flags: <defaults>
</compile_context>

<pallas_src>
import functools

import jax
import jax.numpy as jnp
from jax.experimental import pallas as pl
from jax.experimental.pallas import tpu as pltpu

_LN_EPS = 1e-5
_INV_SQRT2 = 0.7071067811865476


# --------------------------------- kernel -------------------------------------

def _encoder_kernel(
    x_ref,
    c1w_ref, c1b_ref, c2w_ref, c2b_ref,
    ln1g_ref, ln1b_ref, qkvw_ref, qkvb_ref, projw_ref, projb_ref,
    ln2g_ref, ln2b_ref, fc1w_ref, fc1b_ref, fc2w_ref, fc2b_ref,
    ng_ref, nb_ref, c3w_ref, c3b_ref,
    c4wa_ref, c4wb_ref, c4b_ref, c5w_ref, c5b_ref,
    o_ref, *, num_heads):
    """Whole SVTR encoder for one batch element, VMEM-resident end to end."""
    f32 = jnp.float32
    h = x_ref[0].astype(f32)                                  # (W, Cin)
    W = h.shape[0]

    def swish(x):
        return x * jax.nn.sigmoid(x)

    def gelu(x):                                              # exact erf GELU
        return 0.5 * x * (1.0 + jax.lax.erf(x * _INV_SQRT2))

    def layernorm(x, g, b):                                   # stats in f32
        mu = jnp.mean(x, axis=-1, keepdims=True)
        xc = x - mu
        var = jnp.mean(xc * xc, axis=-1, keepdims=True)
        return xc * jax.lax.rsqrt(var + _LN_EPS) * g + b

    def mm(x, w, b):                                          # bf16 MXU, f32 acc
        return jnp.dot(x.astype(jnp.bfloat16), w,
                       preferred_element_type=f32) + b

    def shift_cat(x):
        # [x[w-1], x[w], x[w+1]] concatenated on the channel axis (zero padded)
        # so a width-3 conv becomes ONE (W, 3*C) @ (3*C, Cout) contraction.
        z = jnp.zeros((1, x.shape[1]), f32)
        xp = jnp.concatenate([z, x[:W - 1, :]], axis=0)
        xn = jnp.concatenate([x[1:, :], z], axis=0)
        return jnp.concatenate([xp, x, xn], axis=-1).astype(jnp.bfloat16)

    # --- conv1 (3x3, BN folded, swish)  +  conv2 (1x1, BN folded, swish) ---
    h_cat = shift_cat(h)                                      # (W, 3*Cin) bf16
    z = swish(jnp.dot(h_cat, c1w_ref[...], preferred_element_type=f32)
              + c1b_ref[...])
    z = swish(mm(z, c2w_ref[...], c2b_ref[...]))              # (W, Hd)

    Hd = z.shape[1]
    dh = Hd // num_heads
    scale = float(dh) ** -0.5
    depth = qkvw_ref.shape[0]

    # --- SVTR transformer blocks (global self-attention over the width axis) ---
    for d in range(depth):
        y = layernorm(z, ln1g_ref[d], ln1b_ref[d])
        qkv = mm(y, qkvw_ref[d], qkvb_ref[d])                 # (W, 3*Hd)
        q, k, v = qkv[:, :Hd], qkv[:, Hd:2 * Hd], qkv[:, 2 * Hd:]
        heads = []
        for hh in range(num_heads):
            sl = slice(hh * dh, (hh + 1) * dh)
            qh = q[:, sl].astype(jnp.bfloat16)
            kh = k[:, sl].astype(jnp.bfloat16)
            vh = v[:, sl].astype(jnp.bfloat16)
            s = jax.lax.dot_general(qh, kh, (((1,), (1,)), ((), ())),
                                    preferred_element_type=f32) * scale
            s = s - jnp.max(s, axis=-1, keepdims=True)        # softmax in f32
            p = jnp.exp(s)
            p = p * pl.reciprocal(jnp.sum(p, axis=-1, keepdims=True), approx=True)
            heads.append(jnp.dot(p.astype(jnp.bfloat16), vh,
                                 preferred_element_type=f32))
        attn = jnp.concatenate(heads, axis=-1)                # (W, Hd)
        z = z + mm(attn, projw_ref[d], projb_ref[d])          # x + attn(norm1(x))
        y = layernorm(z, ln2g_ref[d], ln2b_ref[d])
        y = gelu(mm(y, fc1w_ref[d], fc1b_ref[d]))
        z = z + mm(y, fc2w_ref[d], fc2b_ref[d])               # x + mlp(norm2(x))

    z = layernorm(z, ng_ref[...], nb_ref[...])

    # --- conv3 (1x1) -> [concat fused] -> conv4 (3x3) -> conv1x1 ---
    z3 = swish(mm(z, c3w_ref[...], c3b_ref[...]))             # (W, Cin)
    z4 = (jnp.dot(h_cat, c4wa_ref[...], preferred_element_type=f32)
          + jnp.dot(shift_cat(z3), c4wb_ref[...], preferred_element_type=f32)
          + c4b_ref[...])
    z4 = swish(z4)
    out = swish(mm(z4, c5w_ref[...], c5b_ref[...]))           # (W, dims)
    o_ref[0] = out.astype(o_ref.dtype)


# ------------------------------ parameter setup ------------------------------

def make_params(key, c_in, dims, hidden_dims, depth, num_heads, mlp_ratio):
    c8 = c_in // 8
    keys = iter(jax.random.split(key, 256))

    def nrm(shape, std=0.05):
        return std * jax.random.normal(next(keys), shape, jnp.float32)

    def bn(c):
        return (1.0 + 0.1 * nrm((c,)),                # gamma
                0.1 * nrm((c,)),                      # beta
                0.1 * nrm((c,)),                      # running_mean
                1.0 + 0.1 * jnp.abs(nrm((c,))))       # running_var

    def fold_bn(gamma, beta, mean, var, eps=1e-5):
        s = gamma / jnp.sqrt(var + eps)
        return s, beta - mean * s

    def conv3x3(cin_total, cout):
        # PyTorch OIHW; H==1 with padding=1 -> only the middle kernel row (kh=1)
        # ever touches real data.  BN folded in, weight laid out (3, Cin, Cout).
        w = nrm((cout, cin_total, 3, 3))
        w3 = jnp.transpose(w[:, :, 1, :], (2, 1, 0))
        s, b = fold_bn(*bn(cout))
        return w3 * s[None, None, :], b.reshape(1, cout)

    def conv1x1(cin, cout):
        w = nrm((cout, cin, 1, 1))[:, :, 0, 0].T      # (Cin, Cout)
        s, b = fold_bn(*bn(cout))
        return (w * s[None, :]).astype(jnp.bfloat16), b.reshape(1, cout)

    p = {}
    w3, b = conv3x3(c_in, c8)
    p["conv1_w"] = w3.reshape(3 * c_in, c8).astype(jnp.bfloat16)
    p["conv1_b"] = b
    p["conv2_w"], p["conv2_b"] = conv1x1(c8, hidden_dims)

    Hd = hidden_dims
    hid = int(hidden_dims * mlp_ratio)
    blk = {k: [] for k in ("ln1_g", "ln1_b", "qkv_w", "qkv_b", "proj_w", "proj_b",
                           "ln2_g", "ln2_b", "fc1_w", "fc1_b", "fc2_w", "fc2_b")}
    for _ in range(depth):
        blk["ln1_g"].append(jnp.ones((1, Hd), jnp.float32))
        blk["ln1_b"].append(jnp.zeros((1, Hd), jnp.float32))
        blk["qkv_w"].append(nrm((3 * Hd, Hd), 0.02).T.astype(jnp.bfloat16))
        blk["qkv_b"].append(jnp.zeros((1, 3 * Hd), jnp.float32))
        blk["proj_w"].append(nrm((Hd, Hd), 0.02).T.astype(jnp.bfloat16))
        blk["proj_b"].append(jnp.zeros((1, Hd), jnp.float32))
        blk["ln2_g"].append(jnp.ones((1, Hd), jnp.float32))
        blk["ln2_b"].append(jnp.zeros((1, Hd), jnp.float32))
        blk["fc1_w"].append(nrm((hid, Hd), 0.02).T.astype(jnp.bfloat16))
        blk["fc1_b"].append(jnp.zeros((1, hid), jnp.float32))
        blk["fc2_w"].append(nrm((Hd, hid), 0.02).T.astype(jnp.bfloat16))
        blk["fc2_b"].append(jnp.zeros((1, Hd), jnp.float32))
    for k, v in blk.items():
        p[k] = jnp.stack(v, axis=0)                   # (depth, ...)

    p["norm_g"] = jnp.ones((1, Hd), jnp.float32)
    p["norm_b"] = jnp.zeros((1, Hd), jnp.float32)
    p["conv3_w"], p["conv3_b"] = conv1x1(Hd, c_in)

    w3, b = conv3x3(2 * c_in, c8)                     # conv4 on concat([h, z3])
    p["conv4_wa"] = w3[:, :c_in, :].reshape(3 * c_in, c8).astype(jnp.bfloat16)
    p["conv4_wb"] = w3[:, c_in:, :].reshape(3 * c_in, c8).astype(jnp.bfloat16)
    p["conv4_b"] = b
    p["conv1x1_w"], p["conv1x1_b"] = conv1x1(c8, dims)
    return p


# --------------------------------- forward ------------------------------------

_PARAM_ORDER = (
    "conv1_w", "conv1_b", "conv2_w", "conv2_b",
    "ln1_g", "ln1_b", "qkv_w", "qkv_b", "proj_w", "proj_b",
    "ln2_g", "ln2_b", "fc1_w", "fc1_b", "fc2_w", "fc2_b",
    "norm_g", "norm_b", "conv3_w", "conv3_b",
    "conv4_wa", "conv4_wb", "conv4_b", "conv1x1_w", "conv1x1_b",
)


def sequence_encoder_svtr(x_nchw, p, num_heads):
    B, Cin, H, W = x_nchw.shape
    assert H == 1  # Im2Seq contract
    # TODO(synk): general H>1 3x3 conv path not implemented; Im2Seq asserts H==1.
    x_seq = jnp.transpose(x_nchw[:, :, 0, :], (0, 2, 1))      # (B, W, Cin)
    dims = p["conv1x1_w"].shape[1]
    weights = [p[k] for k in _PARAM_ORDER]

    def full_spec(a):
        zeros = (0,) * a.ndim
        return pl.BlockSpec(a.shape, lambda b, _z=zeros: _z)

    in_specs = ([pl.BlockSpec((1, W, Cin), lambda b: (b, 0, 0))]
                + [full_spec(a) for a in weights])
    out_spec = pl.BlockSpec((1, W, dims), lambda b: (b, 0, 0))

    out = pl.pallas_call(
        functools.partial(_encoder_kernel, num_heads=num_heads),
        out_shape=jax.ShapeDtypeStruct((B, W, dims), jnp.float32),
        grid=(B,),
        in_specs=in_specs,
        out_specs=out_spec,
        compiler_params=pltpu.CompilerParams(dimension_semantics=("parallel",)),
    )(x_seq, *weights)
    # Im2Seq: (B, dims, 1, W) -> (B, W, dims); kernel already emits that layout.
    return out


# ----------------------------------- main -------------------------------------

if __name__ == "__main__":
    B, C_in, H, W = 2, 32, 1, 16
    dims, hidden_dims, depth, num_heads, mlp_ratio = 16, 32, 2, 4, 2.0

    key = jax.random.PRNGKey(0)
    kx, kp = jax.random.split(key)
    x = jax.random.normal(kx, (B, C_in, H, W), jnp.float32)   # NCHW input
    params = make_params(kp, C_in, dims, hidden_dims, depth, num_heads, mlp_ratio)

    fwd = jax.jit(sequence_encoder_svtr, static_argnums=2)
    out = jax.block_until_ready(fwd(x, params, num_heads))
    assert out.shape == (B, W, dims), out.shape
    assert bool(jnp.all(jnp.isfinite(out)))
    print("KERNEL_OK")
</pallas_src>

<mosaic_0001>
module attributes {stable_mosaic.version = 11 : i64} {
  func.func @_encoder_kernel(%arg0: i32, %arg1: memref<1x16x32xf32, #tpu.memory_space<vmem>>, %arg2: memref<96x4xbf16, #tpu.memory_space<vmem>>, %arg3: memref<1x4xf32, #tpu.memory_space<vmem>>, %arg4: memref<4x32xbf16, #tpu.memory_space<vmem>>, %arg5: memref<1x32xf32, #tpu.memory_space<vmem>>, %arg6: memref<2x1x32xf32, #tpu.memory_space<vmem>>, %arg7: memref<2x1x32xf32, #tpu.memory_space<vmem>>, %arg8: memref<2x32x96xbf16, #tpu.memory_space<vmem>>, %arg9: memref<2x1x96xf32, #tpu.memory_space<vmem>>, %arg10: memref<2x32x32xbf16, #tpu.memory_space<vmem>>, %arg11: memref<2x1x32xf32, #tpu.memory_space<vmem>>, %arg12: memref<2x1x32xf32, #tpu.memory_space<vmem>>, %arg13: memref<2x1x32xf32, #tpu.memory_space<vmem>>, %arg14: memref<2x32x64xbf16, #tpu.memory_space<vmem>>, %arg15: memref<2x1x64xf32, #tpu.memory_space<vmem>>, %arg16: memref<2x64x32xbf16, #tpu.memory_space<vmem>>, %arg17: memref<2x1x32xf32, #tpu.memory_space<vmem>>, %arg18: memref<1x32xf32, #tpu.memory_space<vmem>>, %arg19: memref<1x32xf32, #tpu.memory_space<vmem>>, %arg20: memref<32x32xbf16, #tpu.memory_space<vmem>>, %arg21: memref<1x32xf32, #tpu.memory_space<vmem>>, %arg22: memref<96x4xbf16, #tpu.memory_space<vmem>>, %arg23: memref<96x4xbf16, #tpu.memory_space<vmem>>, %arg24: memref<1x4xf32, #tpu.memory_space<vmem>>, %arg25: memref<4x16xbf16, #tpu.memory_space<vmem>>, %arg26: memref<1x16xf32, #tpu.memory_space<vmem>>, %arg27: memref<1x16x16xf32, #tpu.memory_space<vmem>>) attributes {dimension_semantics = [#tpu.dimension_semantics<parallel>], iteration_bounds = array<i64: 2>, scalar_prefetch = 0 : i64, scratch_operands = 0 : i64, tpu.core_type = #tpu.core_type<tc>, window_params = [{transform_indices = @transform_0, window_bounds = array<i64: 1, 16, 32>}, {pipeline_mode = #tpu.pipeline_mode<synchronous>, transform_indices = @transform_1, window_bounds = array<i64: 96, 4>}, {pipeline_mode = #tpu.pipeline_mode<synchronous>, transform_indices = @transform_2, window_bounds = array<i64: 1, 4>}, {pipeline_mode = #tpu.pipeline_mode<synchronous>, transform_indices = @transform_3, window_bounds = array<i64: 4, 32>}, {pipeline_mode = #tpu.pipeline_mode<synchronous>, transform_indices = @transform_4, window_bounds = array<i64: 1, 32>}, {pipeline_mode = #tpu.pipeline_mode<synchronous>, transform_indices = @transform_5, window_bounds = array<i64: 2, 1, 32>}, {pipeline_mode = #tpu.pipeline_mode<synchronous>, transform_indices = @transform_6, window_bounds = array<i64: 2, 1, 32>}, {pipeline_mode = #tpu.pipeline_mode<synchronous>, transform_indices = @transform_7, window_bounds = array<i64: 2, 32, 96>}, {pipeline_mode = #tpu.pipeline_mode<synchronous>, transform_indices = @transform_8, window_bounds = array<i64: 2, 1, 96>}, {pipeline_mode = #tpu.pipeline_mode<synchronous>, transform_indices = @transform_9, window_bounds = array<i64: 2, 32, 32>}, {pipeline_mode = #tpu.pipeline_mode<synchronous>, transform_indices = @transform_10, window_bounds = array<i64: 2, 1, 32>}, {pipeline_mode = #tpu.pipeline_mode<synchronous>, transform_indices = @transform_11, window_bounds = array<i64: 2, 1, 32>}, {pipeline_mode = #tpu.pipeline_mode<synchronous>, transform_indices = @transform_12, window_bounds = array<i64: 2, 1, 32>}, {pipeline_mode = #tpu.pipeline_mode<synchronous>, transform_indices = @transform_13, window_bounds = array<i64: 2, 32, 64>}, {pipeline_mode = #tpu.pipeline_mode<synchronous>, transform_indices = @transform_14, window_bounds = array<i64: 2, 1, 64>}, {pipeline_mode = #tpu.pipeline_mode<synchronous>, transform_indices = @transform_15, window_bounds = array<i64: 2, 64, 32>}, {pipeline_mode = #tpu.pipeline_mode<synchronous>, transform_indices = @transform_16, window_bounds = array<i64: 2, 1, 32>}, {pipeline_mode = #tpu.pipeline_mode<synchronous>, transform_indices = @transform_17, window_bounds = array<i64: 1, 32>}, {pipeline_mode = #tpu.pipeline_mode<synchronous>, transform_indices = @transform_18, window_bounds = array<i64: 1, 32>}, {pipeline_mode = #tpu.pipeline_mode<synchronous>, transform_indices = @transform_19, window_bounds = array<i64: 32, 32>}, {pipeline_mode = #tpu.pipeline_mode<synchronous>, transform_indices = @transform_20, window_bounds = array<i64: 1, 32>}, {pipeline_mode = #tpu.pipeline_mode<synchronous>, transform_indices = @transform_21, window_bounds = array<i64: 96, 4>}, {pipeline_mode = #tpu.pipeline_mode<synchronous>, transform_indices = @transform_22, window_bounds = array<i64: 96, 4>}, {pipeline_mode = #tpu.pipeline_mode<synchronous>, transform_indices = @transform_23, window_bounds = array<i64: 1, 4>}, {pipeline_mode = #tpu.pipeline_mode<synchronous>, transform_indices = @transform_24, window_bounds = array<i64: 4, 16>}, {pipeline_mode = #tpu.pipeline_mode<synchronous>, transform_indices = @transform_25, window_bounds = array<i64: 1, 16>}, {transform_indices = @transform_26, window_bounds = array<i64: 1, 16, 16>}]} {
    %c0 = arith.constant 0 : index
    %c0_0 = arith.constant 0 : index
    %c0_1 = arith.constant 0 : index
    %0 = vector.load %arg1[%c0, %c0_0, %c0_1] : memref<1x16x32xf32, #tpu.memory_space<vmem>>, vector<1x16x32xf32>
    %1 = vector.shape_cast %0 : vector<1x16x32xf32> to vector<16x32xf32>
    %cst = arith.constant 0.000000e+00 : f32
    %2 = vector.broadcast %cst : f32 to vector<1x32xf32>
    %3 = vector.extract_strided_slice %1 {offsets = [0, 0], sizes = [15, 32], strides = [1, 1]} : vector<16x32xf32> to vector<15x32xf32>
    %4 = tpu.concatenate %2, %3 in 0 : vector<1x32xf32>, vector<15x32xf32> -> vector<16x32xf32>
    %5 = vector.extract_strided_slice %1 {offsets = [1, 0], sizes = [15, 32], strides = [1, 1]} : vector<16x32xf32> to vector<15x32xf32>
    %6 = tpu.concatenate %5, %2 in 0 : vector<15x32xf32>, vector<1x32xf32> -> vector<16x32xf32>
    %7 = tpu.concatenate %4, %1, %6 in 1 : vector<16x32xf32>, vector<16x32xf32>, vector<16x32xf32> -> vector<16x96xf32>
    %8 = arith.truncf %7 : vector<16x96xf32> to vector<16x96xbf16>
    %c0_2 = arith.constant 0 : index
    %c0_3 = arith.constant 0 : index
    %9 = vector.load %arg2[%c0_2, %c0_3] : memref<96x4xbf16, #tpu.memory_space<vmem>>, vector<96x4xbf16>
    %cst_4 = arith.constant dense<0.000000e+00> : vector<16x4xf32>
    %10 = tpu.matmul %8, %9, %cst_4 {dimension_numbers = #tpu.dot_dimension_numbers<[1], [0], [0], [1], [0, 0, 1, 1], [], []>} : vector<16x96xbf16>, vector<96x4xbf16>, vector<16x4xf32> -> vector<16x4xf32>
    %c0_5 = arith.constant 0 : index
    %c0_6 = arith.constant 0 : index
    %11 = vector.load %arg3[%c0_5, %c0_6] : memref<1x4xf32, #tpu.memory_space<vmem>>, vector<1x4xf32>
    %12 = vector.broadcast %11 : vector<1x4xf32> to vector<16x4xf32>
    %13 = arith.addf %10, %12 : vector<16x4xf32>
    %14 = arith.negf %13 : vector<16x4xf32>
    %15 = math.exp %14 : vector<16x4xf32>
    %cst_7 = arith.constant 1.000000e+00 : f32
    %16 = vector.broadcast %cst_7 : f32 to vector<16x4xf32>
    %17 = arith.addf %16, %15 : vector<16x4xf32>
    %18 = arith.divf %16, %17 : vector<16x4xf32>
    %19 = arith.mulf %13, %18 : vector<16x4xf32>
    %c0_8 = arith.constant 0 : index
    %c0_9 = arith.constant 0 : index
    %20 = vector.load %arg4[%c0_8, %c0_9] : memref<4x32xbf16, #tpu.memory_space<vmem>>, vector<4x32xbf16>
    %c0_10 = arith.constant 0 : index
    %c0_11 = arith.constant 0 : index
    %21 = vector.load %arg5[%c0_10, %c0_11] : memref<1x32xf32, #tpu.memory_space<vmem>>, vector<1x32xf32>
    %22 = arith.truncf %19 : vector<16x4xf32> to vector<16x4xbf16>
    %cst_12 = arith.constant dense<0.000000e+00> : vector<16x32xf32>
    %23 = tpu.matmul %22, %20, %cst_12 {dimension_numbers = #tpu.dot_dimension_numbers<[1], [0], [0], [1], [0, 0, 1, 1], [], []>} : vector<16x4xbf16>, vector<4x32xbf16>, vector<16x32xf32> -> vector<16x32xf32>
    %24 = vector.broadcast %21 : vector<1x32xf32> to vector<16x32xf32>
    %25 = arith.addf %23, %24 : vector<16x32xf32>
    %26 = arith.negf %25 : vector<16x32xf32>
    %27 = math.exp %26 : vector<16x32xf32>
    %cst_13 = arith.constant 1.000000e+00 : f32
    %28 = vector.broadcast %cst_13 : f32 to vector<16x32xf32>
    %29 = arith.addf %28, %27 : vector<16x32xf32>
    %30 = arith.divf %28, %29 : vector<16x32xf32>
    %31 = arith.mulf %25, %30 : vector<16x32xf32>
    %c0_14 = arith.constant 0 : index
    %c0_15 = arith.constant 0 : index
    %c0_16 = arith.constant 0 : index
    %32 = vector.load %arg6[%c0_14, %c0_15, %c0_16] : memref<2x1x32xf32, #tpu.memory_space<vmem>>, vector<1x1x32xf32>
    %33 = vector.shape_cast %32 : vector<1x1x32xf32> to vector<1x32xf32>
    %c0_17 = arith.constant 0 : index
    %c0_18 = arith.constant 0 : index
    %c0_19 = arith.constant 0 : index
    %34 = vector.load %arg7[%c0_17, %c0_18, %c0_19] : memref<2x1x32xf32, #tpu.memory_space<vmem>>, vector<1x1x32xf32>
    %35 = vector.shape_cast %34 : vector<1x1x32xf32> to vector<1x32xf32>
    %cst_20 = arith.constant dense<0.000000e+00> : vector<16xf32>
    %36 = vector.multi_reduction <add>, %31, %cst_20 [1] : vector<16x32xf32> to vector<16xf32>
    %37 = vector.shape_cast %36 : vector<16xf32> to vector<16x1xf32>
    %cst_21 = arith.constant 3.200000e+01 : f32
    %38 = vector.broadcast %cst_21 : f32 to vector<16x1xf32>
    %39 = arith.divf %37, %38 : vector<16x1xf32>
    %40 = vector.broadcast %39 : vector<16x1xf32> to vector<16x32xf32>
    %41 = arith.subf %31, %40 : vector<16x32xf32>
    %42 = arith.mulf %41, %41 : vector<16x32xf32>
    %cst_22 = arith.constant dense<0.000000e+00> : vector<16xf32>
    %43 = vector.multi_reduction <add>, %42, %cst_22 [1] : vector<16x32xf32> to vector<16xf32>
    %44 = vector.shape_cast %43 : vector<16xf32> to vector<16x1xf32>
    %cst_23 = arith.constant 3.200000e+01 : f32
    %45 = vector.broadcast %cst_23 : f32 to vector<16x1xf32>
    %46 = arith.divf %44, %45 : vector<16x1xf32>
    %cst_24 = arith.constant 9.99999974E-6 : f32
    %47 = vector.broadcast %cst_24 : f32 to vector<16x1xf32>
    %48 = arith.addf %46, %47 : vector<16x1xf32>
    %49 = math.rsqrt %48 : vector<16x1xf32>
    %50 = vector.broadcast %49 : vector<16x1xf32> to vector<16x32xf32>
    %51 = arith.mulf %41, %50 : vector<16x32xf32>
    %52 = vector.broadcast %33 : vector<1x32xf32> to vector<16x32xf32>
    %53 = arith.mulf %51, %52 : vector<16x32xf32>
    %54 = vector.broadcast %35 : vector<1x32xf32> to vector<16x32xf32>
    %55 = arith.addf %53, %54 : vector<16x32xf32>
    %c0_25 = arith.constant 0 : index
    %c0_26 = arith.constant 0 : index
    %c0_27 = arith.constant 0 : index
    %56 = vector.load %arg8[%c0_25, %c0_26, %c0_27] : memref<2x32x96xbf16, #tpu.memory_space<vmem>>, vector<1x32x96xbf16>
    %57 = vector.shape_cast %56 : vector<1x32x96xbf16> to vector<32x96xbf16>
    %c0_28 = arith.constant 0 : index
    %c0_29 = arith.constant 0 : index
    %c0_30 = arith.constant 0 : index
    %58 = vector.load %arg9[%c0_28, %c0_29, %c0_30] : memref<2x1x96xf32, #tpu.memory_space<vmem>>, vector<1x1x96xf32>
    %59 = vector.shape_cast %58 : vector<1x1x96xf32> to vector<1x96xf32>
    %60 = arith.truncf %55 : vector<16x32xf32> to vector<16x32xbf16>
    %cst_31 = arith.constant dense<0.000000e+00> : vector<16x96xf32>
    %61 = tpu.matmul %60, %57, %cst_31 {dimension_numbers = #tpu.dot_dimension_numbers<[1], [0], [0], [1], [0, 0, 1, 1], [], []>} : vector<16x32xbf16>, vector<32x96xbf16>, vector<16x96xf32> -> vector<16x96xf32>
    %62 = vector.broadcast %59 : vector<1x96xf32> to vector<16x96xf32>
    %63 = arith.addf %61, %62 : vector<16x96xf32>
    %64 = vector.extract_strided_slice %63 {offsets = [0, 0], sizes = [16, 32], strides = [1, 1]} : vector<16x96xf32> to vector<16x32xf32>
    %65 = vector.extract_strided_slice %63 {offsets = [0, 32], sizes = [16, 32], strides = [1, 1]} : vector<16x96xf32> to vector<16x32xf32>
    %66 = vector.extract_strided_slice %63 {offsets = [0, 64], sizes = [16, 32], strides = [1, 1]} : vector<16x96xf32> to vector<16x32xf32>
    %67 = vector.extract_strided_slice %64 {offsets = [0, 0], sizes = [16, 8], strides = [1, 1]} : vector<16x32xf32> to vector<16x8xf32>
    %68 = arith.truncf %67 : vector<16x8xf32> to vector<16x8xbf16>
    %69 = vector.extract_strided_slice %65 {offsets = [0, 0], sizes = [16, 8], strides = [1, 1]} : vector<16x32xf32> to vector<16x8xf32>
    %70 = arith.truncf %69 : vector<16x8xf32> to vector<16x8xbf16>
    %71 = vector.extract_strided_slice %66 {offsets = [0, 0], sizes = [16, 8], strides = [1, 1]} : vector<16x32xf32> to vector<16x8xf32>
    %72 = arith.truncf %71 : vector<16x8xf32> to vector<16x8xbf16>
    %cst_32 = arith.constant dense<0.000000e+00> : vector<16x16xf32>
    %73 = tpu.matmul %68, %70, %cst_32 {dimension_numbers = #tpu.dot_dimension_numbers<[1], [1], [0], [0], [0, 0, 1, 0], [], []>} : vector<16x8xbf16>, vector<16x8xbf16>, vector<16x16xf32> -> vector<16x16xf32>
    %cst_33 = arith.constant 0.353553385 : f32
    %74 = vector.broadcast %cst_33 : f32 to vector<16x16xf32>
    %75 = arith.mulf %73, %74 : vector<16x16xf32>
    %cst_34 = arith.constant dense<0xFF800000> : vector<16xf32>
    %76 = vector.multi_reduction <maximumf>, %75, %cst_34 [1] : vector<16x16xf32> to vector<16xf32>
    %77 = vector.shape_cast %76 : vector<16xf32> to vector<16x1xf32>
    %78 = vector.broadcast %77 : vector<16x1xf32> to vector<16x16xf32>
    %79 = arith.subf %75, %78 : vector<16x16xf32>
    %80 = math.exp %79 : vector<16x16xf32>
    %cst_35 = arith.constant dense<0.000000e+00> : vector<16xf32>
    %81 = vector.multi_reduction <add>, %80, %cst_35 [1] : vector<16x16xf32> to vector<16xf32>
    %82 = vector.shape_cast %81 : vector<16xf32> to vector<16x1xf32>
    %83 = tpu.reciprocal %82 {approx = true} : vector<16x1xf32> -> vector<16x1xf32>
    %84 = vector.broadcast %83 : vector<16x1xf32> to vector<16x16xf32>
    %85 = arith.mulf %80, %84 : vector<16x16xf32>
    %86 = arith.truncf %85 : vector<16x16xf32> to vector<16x16xbf16>
    %cst_36 = arith.constant dense<0.000000e+00> : vector<16x8xf32>
    %87 = tpu.matmul %86, %72, %cst_36 {dimension_numbers = #tpu.dot_dimension_numbers<[1], [0], [0], [1], [0, 0, 1, 1], [], []>} : vector<16x16xbf16>, vector<16x8xbf16>, vector<16x8xf32> -> vector<16x8xf32>
    %88 = vector.extract_strided_slice %64 {offsets = [0, 8], sizes = [16, 8], strides = [1, 1]} : vector<16x32xf32> to vector<16x8xf32>
    %89 = arith.truncf %88 : vector<16x8xf32> to vector<16x8xbf16>
    %90 = vector.extract_strided_slice %65 {offsets = [0, 8], sizes = [16, 8], strides = [1, 1]} : vector<16x32xf32> to vector<16x8xf32>
    %91 = arith.truncf %90 : vector<16x8xf32> to vector<16x8xbf16>
    %92 = vector.extract_strided_slice %66 {offsets = [0, 8], sizes = [16, 8], strides = [1, 1]} : vector<16x32xf32> to vector<16x8xf32>
    %93 = arith.truncf %92 : vector<16x8xf32> to vector<16x8xbf16>
    %cst_37 = arith.constant dense<0.000000e+00> : vector<16x16xf32>
    %94 = tpu.matmul %89, %91, %cst_37 {dimension_numbers = #tpu.dot_dimension_numbers<[1], [1], [0], [0], [0, 0, 1, 0], [], []>} : vector<16x8xbf16>, vector<16x8xbf16>, vector<16x16xf32> -> vector<16x16xf32>
    %cst_38 = arith.constant 0.353553385 : f32
    %95 = vector.broadcast %cst_38 : f32 to vector<16x16xf32>
    %96 = arith.mulf %94, %95 : vector<16x16xf32>
    %cst_39 = arith.constant dense<0xFF800000> : vector<16xf32>
    %97 = vector.multi_reduction <maximumf>, %96, %cst_39 [1] : vector<16x16xf32> to vector<16xf32>
    %98 = vector.shape_cast %97 : vector<16xf32> to vector<16x1xf32>
    %99 = vector.broadcast %98 : vector<16x1xf32> to vector<16x16xf32>
    %100 = arith.subf %96, %99 : vector<16x16xf32>
    %101 = math.exp %100 : vector<16x16xf32>
    %cst_40 = arith.constant dense<0.000000e+00> : vector<16xf32>
    %102 = vector.multi_reduction <add>, %101, %cst_40 [1] : vector<16x16xf32> to vector<16xf32>
    %103 = vector.shape_cast %102 : vector<16xf32> to vector<16x1xf32>
    %104 = tpu.reciprocal %103 {approx = true} : vector<16x1xf32> -> vector<16x1xf32>
    %105 = vector.broadcast %104 : vector<16x1xf32> to vector<16x16xf32>
    %106 = arith.mulf %101, %105 : vector<16x16xf32>
    %107 = arith.truncf %106 : vector<16x16xf32> to vector<16x16xbf16>
    %cst_41 = arith.constant dense<0.000000e+00> : vector<16x8xf32>
    %108 = tpu.matmul %107, %93, %cst_41 {dimension_numbers = #tpu.dot_dimension_numbers<[1], [0], [0], [1], [0, 0, 1, 1], [], []>} : vector<16x16xbf16>, vector<16x8xbf16>, vector<16x8xf32> -> vector<16x8xf32>
    %109 = vector.extract_strided_slice %64 {offsets = [0, 16], sizes = [16, 8], strides = [1, 1]} : vector<16x32xf32> to vector<16x8xf32>
    %110 = arith.truncf %109 : vector<16x8xf32> to vector<16x8xbf16>
    %111 = vector.extract_strided_slice %65 {offsets = [0, 16], sizes = [16, 8], strides = [1, 1]} : vector<16x32xf32> to vector<16x8xf32>
    %112 = arith.truncf %111 : vector<16x8xf32> to vector<16x8xbf16>
    %113 = vector.extract_strided_slice %66 {offsets = [0, 16], sizes = [16, 8], strides = [1, 1]} : vector<16x32xf32> to vector<16x8xf32>
    %114 = arith.truncf %113 : vector<16x8xf32> to vector<16x8xbf16>
    %cst_42 = arith.constant dense<0.000000e+00> : vector<16x16xf32>
    %115 = tpu.matmul %110, %112, %cst_42 {dimension_numbers = #tpu.dot_dimension_numbers<[1], [1], [0], [0], [0, 0, 1, 0], [], []>} : vector<16x8xbf16>, vector<16x8xbf16>, vector<16x16xf32> -> vector<16x16xf32>
    %cst_43 = arith.constant 0.353553385 : f32
    %116 = vector.broadcast %cst_43 : f32 to vector<16x16xf32>
    %117 = arith.mulf %115, %116 : vector<16x16xf32>
    %cst_44 = arith.constant dense<0xFF800000> : vector<16xf32>
    %118 = vector.multi_reduction <maximumf>, %117, %cst_44 [1] : vector<16x16xf32> to vector<16xf32>
    %119 = vector.shape_cast %118 : vector<16xf32> to vector<16x1xf32>
    %120 = vector.broadcast %119 : vector<16x1xf32> to vector<16x16xf32>
    %121 = arith.subf %117, %120 : vector<16x16xf32>
    %122 = math.exp %121 : vector<16x16xf32>
    %cst_45 = arith.constant dense<0.000000e+00> : vector<16xf32>
    %123 = vector.multi_reduction <add>, %122, %cst_45 [1] : vector<16x16xf32> to vector<16xf32>
    %124 = vector.shape_cast %123 : vector<16xf32> to vector<16x1xf32>
    %125 = tpu.reciprocal %124 {approx = true} : vector<16x1xf32> -> vector<16x1xf32>
    %126 = vector.broadcast %125 : vector<16x1xf32> to vector<16x16xf32>
    %127 = arith.mulf %122, %126 : vector<16x16xf32>
    %128 = arith.truncf %127 : vector<16x16xf32> to vector<16x16xbf16>
    %cst_46 = arith.constant dense<0.000000e+00> : vector<16x8xf32>
    %129 = tpu.matmul %128, %114, %cst_46 {dimension_numbers = #tpu.dot_dimension_numbers<[1], [0], [0], [1], [0, 0, 1, 1], [], []>} : vector<16x16xbf16>, vector<16x8xbf16>, vector<16x8xf32> -> vector<16x8xf32>
    %130 = vector.extract_strided_slice %64 {offsets = [0, 24], sizes = [16, 8], strides = [1, 1]} : vector<16x32xf32> to vector<16x8xf32>
    %131 = arith.truncf %130 : vector<16x8xf32> to vector<16x8xbf16>
    %132 = vector.extract_strided_slice %65 {offsets = [0, 24], sizes = [16, 8], strides = [1, 1]} : vector<16x32xf32> to vector<16x8xf32>
    %133 = arith.truncf %132 : vector<16x8xf32> to vector<16x8xbf16>
    %134 = vector.extract_strided_slice %66 {offsets = [0, 24], sizes = [16, 8], strides = [1, 1]} : vector<16x32xf32> to vector<16x8xf32>
    %135 = arith.truncf %134 : vector<16x8xf32> to vector<16x8xbf16>
    %cst_47 = arith.constant dense<0.000000e+00> : vector<16x16xf32>
    %136 = tpu.matmul %131, %133, %cst_47 {dimension_numbers = #tpu.dot_dimension_numbers<[1], [1], [0], [0], [0, 0, 1, 0], [], []>} : vector<16x8xbf16>, vector<16x8xbf16>, vector<16x16xf32> -> vector<16x16xf32>
    %cst_48 = arith.constant 0.353553385 : f32
    %137 = vector.broadcast %cst_48 : f32 to vector<16x16xf32>
    %138 = arith.mulf %136, %137 : vector<16x16xf32>
    %cst_49 = arith.constant dense<0xFF800000> : vector<16xf32>
    %139 = vector.multi_reduction <maximumf>, %138, %cst_49 [1] : vector<16x16xf32> to vector<16xf32>
    %140 = vector.shape_cast %139 : vector<16xf32> to vector<16x1xf32>
    %141 = vector.broadcast %140 : vector<16x1xf32> to vector<16x16xf32>
    %142 = arith.subf %138, %141 : vector<16x16xf32>
    %143 = math.exp %142 : vector<16x16xf32>
    %cst_50 = arith.constant dense<0.000000e+00> : vector<16xf32>
    %144 = vector.multi_reduction <add>, %143, %cst_50 [1] : vector<16x16xf32> to vector<16xf32>
    %145 = vector.shape_cast %144 : vector<16xf32> to vector<16x1xf32>
    %146 = tpu.reciprocal %145 {approx = true} : vector<16x1xf32> -> vector<16x1xf32>
    %147 = vector.broadcast %146 : vector<16x1xf32> to vector<16x16xf32>
    %148 = arith.mulf %143, %147 : vector<16x16xf32>
    %149 = arith.truncf %148 : vector<16x16xf32> to vector<16x16xbf16>
    %cst_51 = arith.constant dense<0.000000e+00> : vector<16x8xf32>
    %150 = tpu.matmul %149, %135, %cst_51 {dimension_numbers = #tpu.dot_dimension_numbers<[1], [0], [0], [1], [0, 0, 1, 1], [], []>} : vector<16x16xbf16>, vector<16x8xbf16>, vector<16x8xf32> -> vector<16x8xf32>
    %151 = tpu.concatenate %87, %108, %129, %150 in 1 : vector<16x8xf32>, vector<16x8xf32>, vector<16x8xf32>, vector<16x8xf32> -> vector<16x32xf32>
    %c0_52 = arith.constant 0 : index
    %c0_53 = arith.constant 0 : index
    %c0_54 = arith.constant 0 : index
    %152 = vector.load %arg10[%c0_52, %c0_53, %c0_54] : memref<2x32x32xbf16, #tpu.memory_space<vmem>>, vector<1x32x32xbf16>
    %153 = vector.shape_cast %152 : vector<1x32x32xbf16> to vector<32x32xbf16>
    %c0_55 = arith.constant 0 : index
    %c0_56 = arith.constant 0 : index
    %c0_57 = arith.constant 0 : index
    %154 = vector.load %arg11[%c0_55, %c0_56, %c0_57] : memref<2x1x32xf32, #tpu.memory_space<vmem>>, vector<1x1x32xf32>
    %155 = vector.shape_cast %154 : vector<1x1x32xf32> to vector<1x32xf32>
    %156 = arith.truncf %151 : vector<16x32xf32> to vector<16x32xbf16>
    %cst_58 = arith.constant dense<0.000000e+00> : vector<16x32xf32>
    %157 = tpu.matmul %156, %153, %cst_58 {dimension_numbers = #tpu.dot_dimension_numbers<[1], [0], [0], [1], [0, 0, 1, 1], [], []>} : vector<16x32xbf16>, vector<32x32xbf16>, vector<16x32xf32> -> vector<16x32xf32>
    %158 = vector.broadcast %155 : vector<1x32xf32> to vector<16x32xf32>
    %159 = arith.addf %157, %158 : vector<16x32xf32>
    %160 = arith.addf %31, %159 : vector<16x32xf32>
    %c0_59 = arith.constant 0 : index
    %c0_60 = arith.constant 0 : index
    %c0_61 = arith.constant 0 : index
    %161 = vector.load %arg12[%c0_59, %c0_60, %c0_61] : memref<2x1x32xf32, #tpu.memory_space<vmem>>, vector<1x1x32xf32>
    %162 = vector.shape_cast %161 : vector<1x1x32xf32> to vector<1x32xf32>
    %c0_62 = arith.constant 0 : index
    %c0_63 = arith.constant 0 : index
    %c0_64 = arith.constant 0 : index
    %163 = vector.load %arg13[%c0_62, %c0_63, %c0_64] : memref<2x1x32xf32, #tpu.memory_space<vmem>>, vector<1x1x32xf32>
    %164 = vector.shape_cast %163 : vector<1x1x32xf32> to vector<1x32xf32>
    %cst_65 = arith.constant dense<0.000000e+00> : vector<16xf32>
    %165 = vector.multi_reduction <add>, %160, %cst_65 [1] : vector<16x32xf32> to vector<16xf32>
    %166 = vector.shape_cast %165 : vector<16xf32> to vector<16x1xf32>
    %cst_66 = arith.constant 3.200000e+01 : f32
    %167 = vector.broadcast %cst_66 : f32 to vector<16x1xf32>
    %168 = arith.divf %166, %167 : vector<16x1xf32>
    %169 = vector.broadcast %168 : vector<16x1xf32> to vector<16x32xf32>
    %170 = arith.subf %160, %169 : vector<16x32xf32>
    %171 = arith.mulf %170, %170 : vector<16x32xf32>
    %cst_67 = arith.constant dense<0.000000e+00> : vector<16xf32>
    %172 = vector.multi_reduction <add>, %171, %cst_67 [1] : vector<16x32xf32> to vector<16xf32>
    %173 = vector.shape_cast %172 : vector<16xf32> to vector<16x1xf32>
    %cst_68 = arith.constant 3.200000e+01 : f32
    %174 = vector.broadcast %cst_68 : f32 to vector<16x1xf32>
    %175 = arith.divf %173, %174 : vector<16x1xf32>
    %cst_69 = arith.constant 9.99999974E-6 : f32
    %176 = vector.broadcast %cst_69 : f32 to vector<16x1xf32>
    %177 = arith.addf %175, %176 : vector<16x1xf32>
    %178 = math.rsqrt %177 : vector<16x1xf32>
    %179 = vector.broadcast %178 : vector<16x1xf32> to vector<16x32xf32>
    %180 = arith.mulf %170, %179 : vector<16x32xf32>
    %181 = vector.broadcast %162 : vector<1x32xf32> to vector<16x32xf32>
    %182 = arith.mulf %180, %181 : vector<16x32xf32>
    %183 = vector.broadcast %164 : vector<1x32xf32> to vector<16x32xf32>
    %184 = arith.addf %182, %183 : vector<16x32xf32>
    %c0_70 = arith.constant 0 : index
    %c0_71 = arith.constant 0 : index
    %c0_72 = arith.constant 0 : index
    %185 = vector.load %arg14[%c0_70, %c0_71, %c0_72] : memref<2x32x64xbf16, #tpu.memory_space<vmem>>, vector<1x32x64xbf16>
    %186 = vector.shape_cast %185 : vector<1x32x64xbf16> to vector<32x64xbf16>
    %c0_73 = arith.constant 0 : index
    %c0_74 = arith.constant 0 : index
    %c0_75 = arith.constant 0 : index
    %187 = vector.load %arg15[%c0_73, %c0_74, %c0_75] : memref<2x1x64xf32, #tpu.memory_space<vmem>>, vector<1x1x64xf32>
    %188 = vector.shape_cast %187 : vector<1x1x64xf32> to vector<1x64xf32>
    %189 = arith.truncf %184 : vector<16x32xf32> to vector<16x32xbf16>
    %cst_76 = arith.constant dense<0.000000e+00> : vector<16x64xf32>
    %190 = tpu.matmul %189, %186, %cst_76 {dimension_numbers = #tpu.dot_dimension_numbers<[1], [0], [0], [1], [0, 0, 1, 1], [], []>} : vector<16x32xbf16>, vector<32x64xbf16>, vector<16x64xf32> -> vector<16x64xf32>
    %191 = vector.broadcast %188 : vector<1x64xf32> to vector<16x64xf32>
    %192 = arith.addf %190, %191 : vector<16x64xf32>
    %cst_77 = arith.constant 5.000000e-01 : f32
    %193 = vector.broadcast %cst_77 : f32 to vector<16x64xf32>
    %194 = arith.mulf %193, %192 : vector<16x64xf32>
    %cst_78 = arith.constant 0.707106769 : f32
    %195 = vector.broadcast %cst_78 : f32 to vector<16x64xf32>
    %196 = arith.mulf %192, %195 : vector<16x64xf32>
    %197 = math.erf %196 : vector<16x64xf32>
    %cst_79 = arith.constant 1.000000e+00 : f32
    %198 = vector.broadcast %cst_79 : f32 to vector<16x64xf32>
    %199 = arith.addf %198, %197 : vector<16x64xf32>
    %200 = arith.mulf %194, %199 : vector<16x64xf32>
    %c0_80 = arith.constant 0 : index
    %c0_81 = arith.constant 0 : index
    %c0_82 = arith.constant 0 : index
    %201 = vector.load %arg16[%c0_80, %c0_81, %c0_82] : memref<2x64x32xbf16, #tpu.memory_space<vmem>>, vector<1x64x32xbf16>
    %202 = vector.shape_cast %201 : vector<1x64x32xbf16> to vector<64x32xbf16>
    %c0_83 = arith.constant 0 : index
    %c0_84 = arith.constant 0 : index
    %c0_85 = arith.constant 0 : index
    %203 = vector.load %arg17[%c0_83, %c0_84, %c0_85] : memref<2x1x32xf32, #tpu.memory_space<vmem>>, vector<1x1x32xf32>
    %204 = vector.shape_cast %203 : vector<1x1x32xf32> to vector<1x32xf32>
    %205 = arith.truncf %200 : vector<16x64xf32> to vector<16x64xbf16>
    %cst_86 = arith.constant dense<0.000000e+00> : vector<16x32xf32>
    %206 = tpu.matmul %205, %202, %cst_86 {dimension_numbers = #tpu.dot_dimension_numbers<[1], [0], [0], [1], [0, 0, 1, 1], [], []>} : vector<16x64xbf16>, vector<64x32xbf16>, vector<16x32xf32> -> vector<16x32xf32>
    %207 = vector.broadcast %204 : vector<1x32xf32> to vector<16x32xf32>
    %208 = arith.addf %206, %207 : vector<16x32xf32>
    %209 = arith.addf %160, %208 : vector<16x32xf32>
    %c1 = arith.constant 1 : index
    %c0_87 = arith.constant 0 : index
    %c0_88 = arith.constant 0 : index
    %210 = vector.load %arg6[%c1, %c0_87, %c0_88] : memref<2x1x32xf32, #tpu.memory_space<vmem>>, vector<1x1x32xf32>
    %211 = vector.shape_cast %210 : vector<1x1x32xf32> to vector<1x32xf32>
    %c1_89 = arith.constant 1 : index
    %c0_90 = arith.constant 0 : index
    %c0_91 = arith.constant 0 : index
    %212 = vector.load %arg7[%c1_89, %c0_90, %c0_91] : memref<2x1x32xf32, #tpu.memory_space<vmem>>, vector<1x1x32xf32>
    %213 = vector.shape_cast %212 : vector<1x1x32xf32> to vector<1x32xf32>
    %cst_92 = arith.constant dense<0.000000e+00> : vector<16xf32>
    %214 = vector.multi_reduction <add>, %209, %cst_92 [1] : vector<16x32xf32> to vector<16xf32>
    %215 = vector.shape_cast %214 : vector<16xf32> to vector<16x1xf32>
    %cst_93 = arith.constant 3.200000e+01 : f32
    %216 = vector.broadcast %cst_93 : f32 to vector<16x1xf32>
    %217 = arith.divf %215, %216 : vector<16x1xf32>
    %218 = vector.broadcast %217 : vector<16x1xf32> to vector<16x32xf32>
    %219 = arith.subf %209, %218 : vector<16x32xf32>
    %220 = arith.mulf %219, %219 : vector<16x32xf32>
    %cst_94 = arith.constant dense<0.000000e+00> : vector<16xf32>
    %221 = vector.multi_reduction <add>, %220, %cst_94 [1] : vector<16x32xf32> to vector<16xf32>
    %222 = vector.shape_cast %221 : vector<16xf32> to vector<16x1xf32>
    %cst_95 = arith.constant 3.200000e+01 : f32
    %223 = vector.broadcast %cst_95 : f32 to vector<16x1xf32>
    %224 = arith.divf %222, %223 : vector<16x1xf32>
    %cst_96 = arith.constant 9.99999974E-6 : f32
    %225 = vector.broadcast %cst_96 : f32 to vector<16x1xf32>
    %226 = arith.addf %224, %225 : vector<16x1xf32>
    %227 = math.rsqrt %226 : vector<16x1xf32>
    %228 = vector.broadcast %227 : vector<16x1xf32> to vector<16x32xf32>
    %229 = arith.mulf %219, %228 : vector<16x32xf32>
    %230 = vector.broadcast %211 : vector<1x32xf32> to vector<16x32xf32>
    %231 = arith.mulf %229, %230 : vector<16x32xf32>
    %232 = vector.broadcast %213 : vector<1x32xf32> to vector<16x32xf32>
    %233 = arith.addf %231, %232 : vector<16x32xf32>
    %c1_97 = arith.constant 1 : index
    %c0_98 = arith.constant 0 : index
    %c0_99 = arith.constant 0 : index
    %234 = vector.load %arg8[%c1_97, %c0_98, %c0_99] : memref<2x32x96xbf16, #tpu.memory_space<vmem>>, vector<1x32x96xbf16>
    %235 = vector.shape_cast %234 : vector<1x32x96xbf16> to vector<32x96xbf16>
    %c1_100 = arith.constant 1 : index
    %c0_101 = arith.constant 0 : index
    %c0_102 = arith.constant 0 : index
    %236 = vector.load %arg9[%c1_100, %c0_101, %c0_102] : memref<2x1x96xf32, #tpu.memory_space<vmem>>, vector<1x1x96xf32>
    %237 = vector.shape_cast %236 : vector<1x1x96xf32> to vector<1x96xf32>
    %238 = arith.truncf %233 : vector<16x32xf32> to vector<16x32xbf16>
    %cst_103 = arith.constant dense<0.000000e+00> : vector<16x96xf32>
    %239 = tpu.matmul %238, %235, %cst_103 {dimension_numbers = #tpu.dot_dimension_numbers<[1], [0], [0], [1], [0, 0, 1, 1], [], []>} : vector<16x32xbf16>, vector<32x96xbf16>, vector<16x96xf32> -> vector<16x96xf32>
    %240 = vector.broadcast %237 : vector<1x96xf32> to vector<16x96xf32>
    %241 = arith.addf %239, %240 : vector<16x96xf32>
    %242 = vector.extract_strided_slice %241 {offsets = [0, 0], sizes = [16, 32], strides = [1, 1]} : vector<16x96xf32> to vector<16x32xf32>
    %243 = vector.extract_strided_slice %241 {offsets = [0, 32], sizes = [16, 32], strides = [1, 1]} : vector<16x96xf32> to vector<16x32xf32>
    %244 = vector.extract_strided_slice %241 {offsets = [0, 64], sizes = [16, 32], strides = [1, 1]} : vector<16x96xf32> to vector<16x32xf32>
    %245 = vector.extract_strided_slice %242 {offsets = [0, 0], sizes = [16, 8], strides = [1, 1]} : vector<16x32xf32> to vector<16x8xf32>
    %246 = arith.truncf %245 : vector<16x8xf32> to vector<16x8xbf16>
    %247 = vector.extract_strided_slice %243 {offsets = [0, 0], sizes = [16, 8], strides = [1, 1]} : vector<16x32xf32> to vector<16x8xf32>
    %248 = arith.truncf %247 : vector<16x8xf32> to vector<16x8xbf16>
    %249 = vector.extract_strided_slice %244 {offsets = [0, 0], sizes = [16, 8], strides = [1, 1]} : vector<16x32xf32> to vector<16x8xf32>
    %250 = arith.truncf %249 : vector<16x8xf32> to vector<16x8xbf16>
    %cst_104 = arith.constant dense<0.000000e+00> : vector<16x16xf32>
    %251 = tpu.matmul %246, %248, %cst_104 {dimension_numbers = #tpu.dot_dimension_numbers<[1], [1], [0], [0], [0, 0, 1, 0], [], []>} : vector<16x8xbf16>, vector<16x8xbf16>, vector<16x16xf32> -> vector<16x16xf32>
    %cst_105 = arith.constant 0.353553385 : f32
    %252 = vector.broadcast %cst_105 : f32 to vector<16x16xf32>
    %253 = arith.mulf %251, %252 : vector<16x16xf32>
    %cst_106 = arith.constant dense<0xFF800000> : vector<16xf32>
    %254 = vector.multi_reduction <maximumf>, %253, %cst_106 [1] : vector<16x16xf32> to vector<16xf32>
    %255 = vector.shape_cast %254 : vector<16xf32> to vector<16x1xf32>
    %256 = vector.broadcast %255 : vector<16x1xf32> to vector<16x16xf32>
    %257 = arith.subf %253, %256 : vector<16x16xf32>
    %258 = math.exp %257 : vector<16x16xf32>
    %cst_107 = arith.constant dense<0.000000e+00> : vector<16xf32>
    %259 = vector.multi_reduction <add>, %258, %cst_107 [1] : vector<16x16xf32> to vector<16xf32>
    %260 = vector.shape_cast %259 : vector<16xf32> to vector<16x1xf32>
    %261 = tpu.reciprocal %260 {approx = true} : vector<16x1xf32> -> vector<16x1xf32>
    %262 = vector.broadcast %261 : vector<16x1xf32> to vector<16x16xf32>
    %263 = arith.mulf %258, %262 : vector<16x16xf32>
    %264 = arith.truncf %263 : vector<16x16xf32> to vector<16x16xbf16>
    %cst_108 = arith.constant dense<0.000000e+00> : vector<16x8xf32>
    %265 = tpu.matmul %264, %250, %cst_108 {dimension_numbers = #tpu.dot_dimension_numbers<[1], [0], [0], [1], [0, 0, 1, 1], [], []>} : vector<16x16xbf16>, vector<16x8xbf16>, vector<16x8xf32> -> vector<16x8xf32>
    %266 = vector.extract_strided_slice %242 {offsets = [0, 8], sizes = [16, 8], strides = [1, 1]} : vector<16x32xf32> to vector<16x8xf32>
    %267 = arith.truncf %266 : vector<16x8xf32> to vector<16x8xbf16>
    %268 = vector.extract_strided_slice %243 {offsets = [0, 8], sizes = [16, 8], strides = [1, 1]} : vector<16x32xf32> to vector<16x8xf32>
    %269 = arith.truncf %268 : vector<16x8xf32> to vector<16x8xbf16>
    %270 = vector.extract_strided_slice %244 {offsets = [0, 8], sizes = [16, 8], strides = [1, 1]} : vector<16x32xf32> to vector<16x8xf32>
    %271 = arith.truncf %270 : vector<16x8xf32> to vector<16x8xbf16>
    %cst_109 = arith.constant dense<0.000000e+00> : vector<16x16xf32>
    %272 = tpu.matmul %267, %269, %cst_109 {dimension_numbers = #tpu.dot_dimension_numbers<[1], [1], [0], [0], [0, 0, 1, 0], [], []>} : vector<16x8xbf16>, vector<16x8xbf16>, vector<16x16xf32> -> vector<16x16xf32>
    %cst_110 = arith.constant 0.353553385 : f32
    %273 = vector.broadcast %cst_110 : f32 to vector<16x16xf32>
    %274 = arith.mulf %272, %273 : vector<16x16xf32>
    %cst_111 = arith.constant dense<0xFF800000> : vector<16xf32>
    %275 = vector.multi_reduction <maximumf>, %274, %cst_111 [1] : vector<16x16xf32> to vector<16xf32>
    %276 = vector.shape_cast %275 : vector<16xf32> to vector<16x1xf32>
    %277 = vector.broadcast %276 : vector<16x1xf32> to vector<16x16xf32>
    %278 = arith.subf %274, %277 : vector<16x16xf32>
    %279 = math.exp %278 : vector<16x16xf32>
    %cst_112 = arith.constant dense<0.000000e+00> : vector<16xf32>
    %280 = vector.multi_reduction <add>, %279, %cst_112 [1] : vector<16x16xf32> to vector<16xf32>
    %281 = vector.shape_cast %280 : vector<16xf32> to vector<16x1xf32>
    %282 = tpu.reciprocal %281 {approx = true} : vector<16x1xf32> -> vector<16x1xf32>
    %283 = vector.broadcast %282 : vector<16x1xf32> to vector<16x16xf32>
    %284 = arith.mulf %279, %283 : vector<16x16xf32>
    %285 = arith.truncf %284 : vector<16x16xf32> to vector<16x16xbf16>
    %cst_113 = arith.constant dense<0.000000e+00> : vector<16x8xf32>
    %286 = tpu.matmul %285, %271, %cst_113 {dimension_numbers = #tpu.dot_dimension_numbers<[1], [0], [0], [1], [0, 0, 1, 1], [], []>} : vector<16x16xbf16>, vector<16x8xbf16>, vector<16x8xf32> -> vector<16x8xf32>
    %287 = vector.extract_strided_slice %242 {offsets = [0, 16], sizes = [16, 8], strides = [1, 1]} : vector<16x32xf32> to vector<16x8xf32>
    %288 = arith.truncf %287 : vector<16x8xf32> to vector<16x8xbf16>
    %289 = vector.extract_strided_slice %243 {offsets = [0, 16], sizes = [16, 8], strides = [1, 1]} : vector<16x32xf32> to vector<16x8xf32>
    %290 = arith.truncf %289 : vector<16x8xf32> to vector<16x8xbf16>
    %291 = vector.extract_strided_slice %244 {offsets = [0, 16], sizes = [16, 8], strides = [1, 1]} : vector<16x32xf32> to vector<16x8xf32>
    %292 = arith.truncf %291 : vector<16x8xf32> to vector<16x8xbf16>
    %cst_114 = arith.constant dense<0.000000e+00> : vector<16x16xf32>
    %293 = tpu.matmul %288, %290, %cst_114 {dimension_numbers = #tpu.dot_dimension_numbers<[1], [1], [0], [0], [0, 0, 1, 0], [], []>} : vector<16x8xbf16>, vector<16x8xbf16>, vector<16x16xf32> -> vector<16x16xf32>
    %cst_115 = arith.constant 0.353553385 : f32
    %294 = vector.broadcast %cst_115 : f32 to vector<16x16xf32>
    %295 = arith.mulf %293, %294 : vector<16x16xf32>
    %cst_116 = arith.constant dense<0xFF800000> : vector<16xf32>
    %296 = vector.multi_reduction <maximumf>, %295, %cst_116 [1] : vector<16x16xf32> to vector<16xf32>
    %297 = vector.shape_cast %296 : vector<16xf32> to vector<16x1xf32>
    %298 = vector.broadcast %297 : vector<16x1xf32> to vector<16x16xf32>
    %299 = arith.subf %295, %298 : vector<16x16xf32>
    %300 = math.exp %299 : vector<16x16xf32>
    %cst_117 = arith.constant dense<0.000000e+00> : vector<16xf32>
    %301 = vector.multi_reduction <add>, %300, %cst_117 [1] : vector<16x16xf32> to vector<16xf32>
    %302 = vector.shape_cast %301 : vector<16xf32> to vector<16x1xf32>
    %303 = tpu.reciprocal %302 {approx = true} : vector<16x1xf32> -> vector<16x1xf32>
    %304 = vector.broadcast %303 : vector<16x1xf32> to vector<16x16xf32>
    %305 = arith.mulf %300, %304 : vector<16x16xf32>
    %306 = arith.truncf %305 : vector<16x16xf32> to vector<16x16xbf16>
    %cst_118 = arith.constant dense<0.000000e+00> : vector<16x8xf32>
    %307 = tpu.matmul %306, %292, %cst_118 {dimension_numbers = #tpu.dot_dimension_numbers<[1], [0], [0], [1], [0, 0, 1, 1], [], []>} : vector<16x16xbf16>, vector<16x8xbf16>, vector<16x8xf32> -> vector<16x8xf32>
    %308 = vector.extract_strided_slice %242 {offsets = [0, 24], sizes = [16, 8], strides = [1, 1]} : vector<16x32xf32> to vector<16x8xf32>
    %309 = arith.truncf %308 : vector<16x8xf32> to vector<16x8xbf16>
    %310 = vector.extract_strided_slice %243 {offsets = [0, 24], sizes = [16, 8], strides = [1, 1]} : vector<16x32xf32> to vector<16x8xf32>
    %311 = arith.truncf %310 : vector<16x8xf32> to vector<16x8xbf16>
    %312 = vector.extract_strided_slice %244 {offsets = [0, 24], sizes = [16, 8], strides = [1, 1]} : vector<16x32xf32> to vector<16x8xf32>
    %313 = arith.truncf %312 : vector<16x8xf32> to vector<16x8xbf16>
    %cst_119 = arith.constant dense<0.000000e+00> : vector<16x16xf32>
    %314 = tpu.matmul %309, %311, %cst_119 {dimension_numbers = #tpu.dot_dimension_numbers<[1], [1], [0], [0], [0, 0, 1, 0], [], []>} : vector<16x8xbf16>, vector<16x8xbf16>, vector<16x16xf32> -> vector<16x16xf32>
    %cst_120 = arith.constant 0.353553385 : f32
    %315 = vector.broadcast %cst_120 : f32 to vector<16x16xf32>
    %316 = arith.mulf %314, %315 : vector<16x16xf32>
    %cst_121 = arith.constant dense<0xFF800000> : vector<16xf32>
    %317 = vector.multi_reduction <maximumf>, %316, %cst_121 [1] : vector<16x16xf32> to vector<16xf32>
    %318 = vector.shape_cast %317 : vector<16xf32> to vector<16x1xf32>
    %319 = vector.broadcast %318 : vector<16x1xf32> to vector<16x16xf32>
    %320 = arith.subf %316, %319 : vector<16x16xf32>
    %321 = math.exp %320 : vector<16x16xf32>
    %cst_122 = arith.constant dense<0.000000e+00> : vector<16xf32>
    %322 = vector.multi_reduction <add>, %321, %cst_122 [1] : vector<16x16xf32> to vector<16xf32>
    %323 = vector.shape_cast %322 : vector<16xf32> to vector<16x1xf32>
    %324 = tpu.reciprocal %323 {approx = true} : vector<16x1xf32> -> vector<16x1xf32>
    %325 = vector.broadcast %324 : vector<16x1xf32> to vector<16x16xf32>
    %326 = arith.mulf %321, %325 : vector<16x16xf32>
    %327 = arith.truncf %326 : vector<16x16xf32> to vector<16x16xbf16>
    %cst_123 = arith.constant dense<0.000000e+00> : vector<16x8xf32>
    %328 = tpu.matmul %327, %313, %cst_123 {dimension_numbers = #tpu.dot_dimension_numbers<[1], [0], [0], [1], [0, 0, 1, 1], [], []>} : vector<16x16xbf16>, vector<16x8xbf16>, vector<16x8xf32> -> vector<16x8xf32>
    %329 = tpu.concatenate %265, %286, %307, %328 in 1 : vector<16x8xf32>, vector<16x8xf32>, vector<16x8xf32>, vector<16x8xf32> -> vector<16x32xf32>
    %c1_124 = arith.constant 1 : index
    %c0_125 = arith.constant 0 : index
    %c0_126 = arith.constant 0 : index
    %330 = vector.load %arg10[%c1_124, %c0_125, %c0_126] : memref<2x32x32xbf16, #tpu.memory_space<vmem>>, vector<1x32x32xbf16>
    %331 = vector.shape_cast %330 : vector<1x32x32xbf16> to vector<32x32xbf16>
    %c1_127 = arith.constant 1 : index
    %c0_128 = arith.constant 0 : index
    %c0_129 = arith.constant 0 : index
    %332 = vector.load %arg11[%c1_127, %c0_128, %c0_129] : memref<2x1x32xf32, #tpu.memory_space<vmem>>, vector<1x1x32xf32>
    %333 = vector.shape_cast %332 : vector<1x1x32xf32> to vector<1x32xf32>
    %334 = arith.truncf %329 : vector<16x32xf32> to vector<16x32xbf16>
    %cst_130 = arith.constant dense<0.000000e+00> : vector<16x32xf32>
    %335 = tpu.matmul %334, %331, %cst_130 {dimension_numbers = #tpu.dot_dimension_numbers<[1], [0], [0], [1], [0, 0, 1, 1], [], []>} : vector<16x32xbf16>, vector<32x32xbf16>, vector<16x32xf32> -> vector<16x32xf32>
    %336 = vector.broadcast %333 : vector<1x32xf32> to vector<16x32xf32>
    %337 = arith.addf %335, %336 : vector<16x32xf32>
    %338 = arith.addf %209, %337 : vector<16x32xf32>
    %c1_131 = arith.constant 1 : index
    %c0_132 = arith.constant 0 : index
    %c0_133 = arith.constant 0 : index
    %339 = vector.load %arg12[%c1_131, %c0_132, %c0_133] : memref<2x1x32xf32, #tpu.memory_space<vmem>>, vector<1x1x32xf32>
    %340 = vector.shape_cast %339 : vector<1x1x32xf32> to vector<1x32xf32>
    %c1_134 = arith.constant 1 : index
    %c0_135 = arith.constant 0 : index
    %c0_136 = arith.constant 0 : index
    %341 = vector.load %arg13[%c1_134, %c0_135, %c0_136] : memref<2x1x32xf32, #tpu.memory_space<vmem>>, vector<1x1x32xf32>
    %342 = vector.shape_cast %341 : vector<1x1x32xf32> to vector<1x32xf32>
    %cst_137 = arith.constant dense<0.000000e+00> : vector<16xf32>
    %343 = vector.multi_reduction <add>, %338, %cst_137 [1] : vector<16x32xf32> to vector<16xf32>
    %344 = vector.shape_cast %343 : vector<16xf32> to vector<16x1xf32>
    %cst_138 = arith.constant 3.200000e+01 : f32
    %345 = vector.broadcast %cst_138 : f32 to vector<16x1xf32>
    %346 = arith.divf %344, %345 : vector<16x1xf32>
    %347 = vector.broadcast %346 : vector<16x1xf32> to vector<16x32xf32>
    %348 = arith.subf %338, %347 : vector<16x32xf32>
    %349 = arith.mulf %348, %348 : vector<16x32xf32>
    %cst_139 = arith.constant dense<0.000000e+00> : vector<16xf32>
    %350 = vector.multi_reduction <add>, %349, %cst_139 [1] : vector<16x32xf32> to vector<16xf32>
    %351 = vector.shape_cast %350 : vector<16xf32> to vector<16x1xf32>
    %cst_140 = arith.constant 3.200000e+01 : f32
    %352 = vector.broadcast %cst_140 : f32 to vector<16x1xf32>
    %353 = arith.divf %351, %352 : vector<16x1xf32>
    %cst_141 = arith.constant 9.99999974E-6 : f32
    %354 = vector.broadcast %cst_141 : f32 to vector<16x1xf32>
    %355 = arith.addf %353, %354 : vector<16x1xf32>
    %356 = math.rsqrt %355 : vector<16x1xf32>
    %357 = vector.broadcast %356 : vector<16x1xf32> to vector<16x32xf32>
    %358 = arith.mulf %348, %357 : vector<16x32xf32>
    %359 = vector.broadcast %340 : vector<1x32xf32> to vector<16x32xf32>
    %360 = arith.mulf %358, %359 : vector<16x32xf32>
    %361 = vector.broadcast %342 : vector<1x32xf32> to vector<16x32xf32>
    %362 = arith.addf %360, %361 : vector<16x32xf32>
    %c1_142 = arith.constant 1 : index
    %c0_143 = arith.constant 0 : index
    %c0_144 = arith.constant 0 : index
    %363 = vector.load %arg14[%c1_142, %c0_143, %c0_144] : memref<2x32x64xbf16, #tpu.memory_space<vmem>>, vector<1x32x64xbf16>
    %364 = vector.shape_cast %363 : vector<1x32x64xbf16> to vector<32x64xbf16>
    %c1_145 = arith.constant 1 : index
    %c0_146 = arith.constant 0 : index
    %c0_147 = arith.constant 0 : index
    %365 = vector.load %arg15[%c1_145, %c0_146, %c0_147] : memref<2x1x64xf32, #tpu.memory_space<vmem>>, vector<1x1x64xf32>
    %366 = vector.shape_cast %365 : vector<1x1x64xf32> to vector<1x64xf32>
    %367 = arith.truncf %362 : vector<16x32xf32> to vector<16x32xbf16>
    %cst_148 = arith.constant dense<0.000000e+00> : vector<16x64xf32>
    %368 = tpu.matmul %367, %364, %cst_148 {dimension_numbers = #tpu.dot_dimension_numbers<[1], [0], [0], [1], [0, 0, 1, 1], [], []>} : vector<16x32xbf16>, vector<32x64xbf16>, vector<16x64xf32> -> vector<16x64xf32>
    %369 = vector.broadcast %366 : vector<1x64xf32> to vector<16x64xf32>
    %370 = arith.addf %368, %369 : vector<16x64xf32>
    %cst_149 = arith.constant 5.000000e-01 : f32
    %371 = vector.broadcast %cst_149 : f32 to vector<16x64xf32>
    %372 = arith.mulf %371, %370 : vector<16x64xf32>
    %cst_150 = arith.constant 0.707106769 : f32
    %373 = vector.broadcast %cst_150 : f32 to vector<16x64xf32>
    %374 = arith.mulf %370, %373 : vector<16x64xf32>
    %375 = math.erf %374 : vector<16x64xf32>
    %cst_151 = arith.constant 1.000000e+00 : f32
    %376 = vector.broadcast %cst_151 : f32 to vector<16x64xf32>
    %377 = arith.addf %376, %375 : vector<16x64xf32>
    %378 = arith.mulf %372, %377 : vector<16x64xf32>
    %c1_152 = arith.constant 1 : index
    %c0_153 = arith.constant 0 : index
    %c0_154 = arith.constant 0 : index
    %379 = vector.load %arg16[%c1_152, %c0_153, %c0_154] : memref<2x64x32xbf16, #tpu.memory_space<vmem>>, vector<1x64x32xbf16>
    %380 = vector.shape_cast %379 : vector<1x64x32xbf16> to vector<64x32xbf16>
    %c1_155 = arith.constant 1 : index
    %c0_156 = arith.constant 0 : index
    %c0_157 = arith.constant 0 : index
    %381 = vector.load %arg17[%c1_155, %c0_156, %c0_157] : memref<2x1x32xf32, #tpu.memory_space<vmem>>, vector<1x1x32xf32>
    %382 = vector.shape_cast %381 : vector<1x1x32xf32> to vector<1x32xf32>
    %383 = arith.truncf %378 : vector<16x64xf32> to vector<16x64xbf16>
    %cst_158 = arith.constant dense<0.000000e+00> : vector<16x32xf32>
    %384 = tpu.matmul %383, %380, %cst_158 {dimension_numbers = #tpu.dot_dimension_numbers<[1], [0], [0], [1], [0, 0, 1, 1], [], []>} : vector<16x64xbf16>, vector<64x32xbf16>, vector<16x32xf32> -> vector<16x32xf32>
    %385 = vector.broadcast %382 : vector<1x32xf32> to vector<16x32xf32>
    %386 = arith.addf %384, %385 : vector<16x32xf32>
    %387 = arith.addf %338, %386 : vector<16x32xf32>
    %c0_159 = arith.constant 0 : index
    %c0_160 = arith.constant 0 : index
    %388 = vector.load %arg18[%c0_159, %c0_160] : memref<1x32xf32, #tpu.memory_space<vmem>>, vector<1x32xf32>
    %c0_161 = arith.constant 0 : index
    %c0_162 = arith.constant 0 : index
    %389 = vector.load %arg19[%c0_161, %c0_162] : memref<1x32xf32, #tpu.memory_space<vmem>>, vector<1x32xf32>
    %cst_163 = arith.constant dense<0.000000e+00> : vector<16xf32>
    %390 = vector.multi_reduction <add>, %387, %cst_163 [1] : vector<16x32xf32> to vector<16xf32>
    %391 = vector.shape_cast %390 : vector<16xf32> to vector<16x1xf32>
    %cst_164 = arith.constant 3.200000e+01 : f32
    %392 = vector.broadcast %cst_164 : f32 to vector<16x1xf32>
    %393 = arith.divf %391, %392 : vector<16x1xf32>
    %394 = vector.broadcast %393 : vector<16x1xf32> to vector<16x32xf32>
    %395 = arith.subf %387, %394 : vector<16x32xf32>
    %396 = arith.mulf %395, %395 : vector<16x32xf32>
    %cst_165 = arith.constant dense<0.000000e+00> : vector<16xf32>
    %397 = vector.multi_reduction <add>, %396, %cst_165 [1] : vector<16x32xf32> to vector<16xf32>
    %398 = vector.shape_cast %397 : vector<16xf32> to vector<16x1xf32>
    %cst_166 = arith.constant 3.200000e+01 : f32
    %399 = vector.broadcast %cst_166 : f32 to vector<16x1xf32>
    %400 = arith.divf %398, %399 : vector<16x1xf32>
    %cst_167 = arith.constant 9.99999974E-6 : f32
    %401 = vector.broadcast %cst_167 : f32 to vector<16x1xf32>
    %402 = arith.addf %400, %401 : vector<16x1xf32>
    %403 = math.rsqrt %402 : vector<16x1xf32>
    %404 = vector.broadcast %403 : vector<16x1xf32> to vector<16x32xf32>
    %405 = arith.mulf %395, %404 : vector<16x32xf32>
    %406 = vector.broadcast %388 : vector<1x32xf32> to vector<16x32xf32>
    %407 = arith.mulf %405, %406 : vector<16x32xf32>
    %408 = vector.broadcast %389 : vector<1x32xf32> to vector<16x32xf32>
    %409 = arith.addf %407, %408 : vector<16x32xf32>
    %c0_168 = arith.constant 0 : index
    %c0_169 = arith.constant 0 : index
    %410 = vector.load %arg20[%c0_168, %c0_169] : memref<32x32xbf16, #tpu.memory_space<vmem>>, vector<32x32xbf16>
    %c0_170 = arith.constant 0 : index
    %c0_171 = arith.constant 0 : index
    %411 = vector.load %arg21[%c0_170, %c0_171] : memref<1x32xf32, #tpu.memory_space<vmem>>, vector<1x32xf32>
    %412 = arith.truncf %409 : vector<16x32xf32> to vector<16x32xbf16>
    %cst_172 = arith.constant dense<0.000000e+00> : vector<16x32xf32>
    %413 = tpu.matmul %412, %410, %cst_172 {dimension_numbers = #tpu.dot_dimension_numbers<[1], [0], [0], [1], [0, 0, 1, 1], [], []>} : vector<16x32xbf16>, vector<32x32xbf16>, vector<16x32xf32> -> vector<16x32xf32>
    %414 = vector.broadcast %411 : vector<1x32xf32> to vector<16x32xf32>
    %415 = arith.addf %413, %414 : vector<16x32xf32>
    %416 = arith.negf %415 : vector<16x32xf32>
    %417 = math.exp %416 : vector<16x32xf32>
    %cst_173 = arith.constant 1.000000e+00 : f32
    %418 = vector.broadcast %cst_173 : f32 to vector<16x32xf32>
    %419 = arith.addf %418, %417 : vector<16x32xf32>
    %420 = arith.divf %418, %419 : vector<16x32xf32>
    %421 = arith.mulf %415, %420 : vector<16x32xf32>
    %c0_174 = arith.constant 0 : index
    %c0_175 = arith.constant 0 : index
    %422 = vector.load %arg22[%c0_174, %c0_175] : memref<96x4xbf16, #tpu.memory_space<vmem>>, vector<96x4xbf16>
    %cst_176 = arith.constant dense<0.000000e+00> : vector<16x4xf32>
    %423 = tpu.matmul %8, %422, %cst_176 {dimension_numbers = #tpu.dot_dimension_numbers<[1], [0], [0], [1], [0, 0, 1, 1], [], []>} : vector<16x96xbf16>, vector<96x4xbf16>, vector<16x4xf32> -> vector<16x4xf32>
    %cst_177 = arith.constant 0.000000e+00 : f32
    %424 = vector.broadcast %cst_177 : f32 to vector<1x32xf32>
    %425 = vector.extract_strided_slice %421 {offsets = [0, 0], sizes = [15, 32], strides = [1, 1]} : vector<16x32xf32> to vector<15x32xf32>
    %426 = tpu.concatenate %424, %425 in 0 : vector<1x32xf32>, vector<15x32xf32> -> vector<16x32xf32>
    %427 = vector.extract_strided_slice %421 {offsets = [1, 0], sizes = [15, 32], strides = [1, 1]} : vector<16x32xf32> to vector<15x32xf32>
    %428 = tpu.concatenate %427, %424 in 0 : vector<15x32xf32>, vector<1x32xf32> -> vector<16x32xf32>
    %429 = tpu.concatenate %426, %421, %428 in 1 : vector<16x32xf32>, vector<16x32xf32>, vector<16x32xf32> -> vector<16x96xf32>
    %430 = arith.truncf %429 : vector<16x96xf32> to vector<16x96xbf16>
    %c0_178 = arith.constant 0 : index
    %c0_179 = arith.constant 0 : index
    %431 = vector.load %arg23[%c0_178, %c0_179] : memref<96x4xbf16, #tpu.memory_space<vmem>>, vector<96x4xbf16>
    %cst_180 = arith.constant dense<0.000000e+00> : vector<16x4xf32>
    %432 = tpu.matmul %430, %431, %cst_180 {dimension_numbers = #tpu.dot_dimension_numbers<[1], [0], [0], [1], [0, 0, 1, 1], [], []>} : vector<16x96xbf16>, vector<96x4xbf16>, vector<16x4xf32> -> vector<16x4xf32>
    %433 = arith.addf %423, %432 : vector<16x4xf32>
    %c0_181 = arith.constant 0 : index
    %c0_182 = arith.constant 0 : index
    %434 = vector.load %arg24[%c0_181, %c0_182] : memref<1x4xf32, #tpu.memory_space<vmem>>, vector<1x4xf32>
    %435 = vector.broadcast %434 : vector<1x4xf32> to vector<16x4xf32>
    %436 = arith.addf %433, %435 : vector<16x4xf32>
    %437 = arith.negf %436 : vector<16x4xf32>
    %438 = math.exp %437 : vector<16x4xf32>
    %cst_183 = arith.constant 1.000000e+00 : f32
    %439 = vector.broadcast %cst_183 : f32 to vector<16x4xf32>
    %440 = arith.addf %439, %438 : vector<16x4xf32>
    %441 = arith.divf %439, %440 : vector<16x4xf32>
    %442 = arith.mulf %436, %441 : vector<16x4xf32>
    %c0_184 = arith.constant 0 : index
    %c0_185 = arith.constant 0 : index
    %443 = vector.load %arg25[%c0_184, %c0_185] : memref<4x16xbf16, #tpu.memory_space<vmem>>, vector<4x16xbf16>
    %c0_186 = arith.constant 0 : index
    %c0_187 = arith.constant 0 : index
    %444 = vector.load %arg26[%c0_186, %c0_187] : memref<1x16xf32, #tpu.memory_space<vmem>>, vector<1x16xf32>
    %445 = arith.truncf %442 : vector<16x4xf32> to vector<16x4xbf16>
    %cst_188 = arith.constant dense<0.000000e+00> : vector<16x16xf32>
    %446 = tpu.matmul %445, %443, %cst_188 {dimension_numbers = #tpu.dot_dimension_numbers<[1], [0], [0], [1], [0, 0, 1, 1], [], []>} : vector<16x4xbf16>, vector<4x16xbf16>, vector<16x16xf32> -> vector<16x16xf32>
    %447 = vector.broadcast %444 : vector<1x16xf32> to vector<16x16xf32>
    %448 = arith.addf %446, %447 : vector<16x16xf32>
    %449 = arith.negf %448 : vector<16x16xf32>
    %450 = math.exp %449 : vector<16x16xf32>
    %cst_189 = arith.constant 1.000000e+00 : f32
    %451 = vector.broadcast %cst_189 : f32 to vector<16x16xf32>
    %452 = arith.addf %451, %450 : vector<16x16xf32>
    %453 = arith.divf %451, %452 : vector<16x16xf32>
    %454 = arith.mulf %448, %453 : vector<16x16xf32>
    %c0_190 = arith.constant 0 : index
    %c0_191 = arith.constant 0 : index
    %c0_192 = arith.constant 0 : index
    %455 = vector.load %arg27[%c0_190, %c0_191, %c0_192] : memref<1x16x16xf32, #tpu.memory_space<vmem>>, vector<1x16x16xf32>
    %456 = vector.shape_cast %455 : vector<1x16x16xf32> to vector<16x16xf32>
    %457 = vector.shape_cast %454 : vector<16x16xf32> to vector<1x16x16xf32>
    tpu.vector_store %arg27[%c0_190, %c0_191, %c0_192], %457 {strides = array<i32>} : memref<1x16x16xf32, #tpu.memory_space<vmem>>, vector<1x16x16xf32>,
    return
  }
  func.func @transform_0(%arg0: i32) -> (i32, i32, i32) {
    %c0_i32 = arith.constant 0 : i32
    %c0_i32_0 = arith.constant 0 : i32
    %c0_i32_1 = arith.constant 0 : i32
    return %arg0, %c0_i32, %c0_i32_0 : i32, i32, i32
  }
  func.func @transform_1(%arg0: i32) -> (i32, i32) {
    %c0_i32 = arith.constant 0 : i32
    %c0_i32_0 = arith.constant 0 : i32
    %c0_i32_1 = arith.constant 0 : i32
    return %c0_i32, %c0_i32_0 : i32, i32
  }
  func.func @transform_2(%arg0: i32) -> (i32, i32) {
    %c0_i32 = arith.constant 0 : i32
    %c0_i32_0 = arith.constant 0 : i32
    %c0_i32_1 = arith.constant 0 : i32
    return %c0_i32, %c0_i32_0 : i32, i32
  }
  func.func @transform_3(%arg0: i32) -> (i32, i32) {
    %c0_i32 = arith.constant 0 : i32
    %c0_i32_0 = arith.constant 0 : i32
    %c0_i32_1 = arith.constant 0 : i32
    return %c0_i32, %c0_i32_0 : i32, i32
  }
  func.func @transform_4(%arg0: i32) -> (i32, i32) {
    %c0_i32 = arith.constant 0 : i32
    %c0_i32_0 = arith.constant 0 : i32
    %c0_i32_1 = arith.constant 0 : i32
    return %c0_i32, %c0_i32_0 : i32, i32
  }
  func.func @transform_5(%arg0: i32) -> (i32, i32, i32) {
    %c0_i32 = arith.constant 0 : i32
    %c0_i32_0 = arith.constant 0 : i32
    %c0_i32_1 = arith.constant 0 : i32
    %c0_i32_2 = arith.constant 0 : i32
    return %c0_i32, %c0_i32_0, %c0_i32_1 : i32, i32, i32
  }
  func.func @transform_6(%arg0: i32) -> (i32, i32, i32) {
    %c0_i32 = arith.constant 0 : i32
    %c0_i32_0 = arith.constant 0 : i32
    %c0_i32_1 = arith.constant 0 : i32
    %c0_i32_2 = arith.constant 0 : i32
    return %c0_i32, %c0_i32_0, %c0_i32_1 : i32, i32, i32
  }
  func.func @transform_7(%arg0: i32) -> (i32, i32, i32) {
    %c0_i32 = arith.constant 0 : i32
    %c0_i32_0 = arith.constant 0 : i32
    %c0_i32_1 = arith.constant 0 : i32
    %c0_i32_2 = arith.constant 0 : i32
    return %c0_i32, %c0_i32_0, %c0_i32_1 : i32, i32, i32
  }
  func.func @transform_8(%arg0: i32) -> (i32, i32, i32) {
    %c0_i32 = arith.constant 0 : i32
    %c0_i32_0 = arith.constant 0 : i32
    %c0_i32_1 = arith.constant 0 : i32
    %c0_i32_2 = arith.constant 0 : i32
    return %c0_i32, %c0_i32_0, %c0_i32_1 : i32, i32, i32
  }
  func.func @transform_9(%arg0: i32) -> (i32, i32, i32) {
    %c0_i32 = arith.constant 0 : i32
    %c0_i32_0 = arith.constant 0 : i32
    %c0_i32_1 = arith.constant 0 : i32
    %c0_i32_2 = arith.constant 0 : i32
    return %c0_i32, %c0_i32_0, %c0_i32_1 : i32, i32, i32
  }
  func.func @transform_10(%arg0: i32) -> (i32, i32, i32) {
    %c0_i32 = arith.constant 0 : i32
    %c0_i32_0 = arith.constant 0 : i32
    %c0_i32_1 = arith.constant 0 : i32
    %c0_i32_2 = arith.constant 0 : i32
    return %c0_i32, %c0_i32_0, %c0_i32_1 : i32, i32, i32
  }
  func.func @transform_11(%arg0: i32) -> (i32, i32, i32) {
    %c0_i32 = arith.constant 0 : i32
    %c0_i32_0 = arith.constant 0 : i32
    %c0_i32_1 = arith.constant 0 : i32
    %c0_i32_2 = arith.constant 0 : i32
    return %c0_i32, %c0_i32_0, %c0_i32_1 : i32, i32, i32
  }
  func.func @transform_12(%arg0: i32) -> (i32, i32, i32) {
    %c0_i32 = arith.constant 0 : i32
    %c0_i32_0 = arith.constant 0 : i32
    %c0_i32_1 = arith.constant 0 : i32
    %c0_i32_2 = arith.constant 0 : i32
    return %c0_i32, %c0_i32_0, %c0_i32_1 : i32, i32, i32
  }
  func.func @transform_13(%arg0: i32) -> (i32, i32, i32) {
    %c0_i32 = arith.constant 0 : i32
    %c0_i32_0 = arith.constant 0 : i32
    %c0_i32_1 = arith.constant 0 : i32
    %c0_i32_2 = arith.constant 0 : i32
    return %c0_i32, %c0_i32_0, %c0_i32_1 : i32, i32, i32
  }
  func.func @transform_14(%arg0: i32) -> (i32, i32, i32) {
    %c0_i32 = arith.constant 0 : i32
    %c0_i32_0 = arith.constant 0 : i32
    %c0_i32_1 = arith.constant 0 : i32
    %c0_i32_2 = arith.constant 0 : i32
    return %c0_i32, %c0_i32_0, %c0_i32_1 : i32, i32, i32
  }
  func.func @transform_15(%arg0: i32) -> (i32, i32, i32) {
    %c0_i32 = arith.constant 0 : i32
    %c0_i32_0 = arith.constant 0 : i32
    %c0_i32_1 = arith.constant 0 : i32
    %c0_i32_2 = arith.constant 0 : i32
    return %c0_i32, %c0_i32_0, %c0_i32_1 : i32, i32, i32
  }
  func.func @transform_16(%arg0: i32) -> (i32, i32, i32) {
    %c0_i32 = arith.constant 0 : i32
    %c0_i32_0 = arith.constant 0 : i32
    %c0_i32_1 = arith.constant 0 : i32
    %c0_i32_2 = arith.constant 0 : i32
    return %c0_i32, %c0_i32_0, %c0_i32_1 : i32, i32, i32
  }
  func.func @transform_17(%arg0: i32) -> (i32, i32) {
    %c0_i32 = arith.constant 0 : i32
    %c0_i32_0 = arith.constant 0 : i32
    %c0_i32_1 = arith.constant 0 : i32
    return %c0_i32, %c0_i32_0 : i32, i32
  }
  func.func @transform_18(%arg0: i32) -> (i32, i32) {
    %c0_i32 = arith.constant 0 : i32
    %c0_i32_0 = arith.constant 0 : i32
    %c0_i32_1 = arith.constant 0 : i32
    return %c0_i32, %c0_i32_0 : i32, i32
  }
  func.func @transform_19(%arg0: i32) -> (i32, i32) {
    %c0_i32 = arith.constant 0 : i32
    %c0_i32_0 = arith.constant 0 : i32
    %c0_i32_1 = arith.constant 0 : i32
    return %c0_i32, %c0_i32_0 : i32, i32
  }
  func.func @transform_20(%arg0: i32) -> (i32, i32) {
    %c0_i32 = arith.constant 0 : i32
    %c0_i32_0 = arith.constant 0 : i32
    %c0_i32_1 = arith.constant 0 : i32
    return %c0_i32, %c0_i32_0 : i32, i32
  }
  func.func @transform_21(%arg0: i32) -> (i32, i32) {
    %c0_i32 = arith.constant 0 : i32
    %c0_i32_0 = arith.constant 0 : i32
    %c0_i32_1 = arith.constant 0 : i32
    return %c0_i32, %c0_i32_0 : i32, i32
  }
  func.func @transform_22(%arg0: i32) -> (i32, i32) {
    %c0_i32 = arith.constant 0 : i32
    %c0_i32_0 = arith.constant 0 : i32
    %c0_i32_1 = arith.constant 0 : i32
    return %c0_i32, %c0_i32_0 : i32, i32
  }
  func.func @transform_23(%arg0: i32) -> (i32, i32) {
    %c0_i32 = arith.constant 0 : i32
    %c0_i32_0 = arith.constant 0 : i32
    %c0_i32_1 = arith.constant 0 : i32
    return %c0_i32, %c0_i32_0 : i32, i32
  }
  func.func @transform_24(%arg0: i32) -> (i32, i32) {
    %c0_i32 = arith.constant 0 : i32
    %c0_i32_0 = arith.constant 0 : i32
    %c0_i32_1 = arith.constant 0 : i32
    return %c0_i32, %c0_i32_0 : i32, i32
  }
  func.func @transform_25(%arg0: i32) -> (i32, i32) {
    %c0_i32 = arith.constant 0 : i32
    %c0_i32_0 = arith.constant 0 : i32
    %c0_i32_1 = arith.constant 0 : i32
    return %c0_i32, %c0_i32_0 : i32, i32
  }
  func.func @transform_26(%arg0: i32) -> (i32, i32, i32) {
    %c0_i32 = arith.constant 0 : i32
    %c0_i32_0 = arith.constant 0 : i32
    %c0_i32_1 = arith.constant 0 : i32
    return %arg0, %c0_i32, %c0_i32_0 : i32, i32, i32
  }
}

</mosaic_0001>

<llo_original>
// kernel: sequence_encoder_svtr.1
$region0: #{sequence_encoder_svtr.1}
  #allocation0 [shape = 'u32[]', space=smem, size = 0x4, offset = 0x4, fixed_abs, tag = 'smem constant byte address 0x4 - core index']
  #allocation1 [shape = 'u32[144,128]{1,0:T(1,128)}', space=vmem, size = 0x12000, scoped, tag = 'internal scratch']
  %s0 = inlined_call_operand.vmem [shape: f32[2,16,32], index: 0, kind: input, shape index: {}]
  %s1 = inlined_call_operand.vmem [shape: bf16[96,4], index: 1, kind: input, shape index: {}]
  %s2 = inlined_call_operand.vmem [shape: f32[1,4], index: 2, kind: input, shape index: {}]
  %s3 = inlined_call_operand.vmem [shape: bf16[4,32], index: 3, kind: input, shape index: {}]
  %s4 = inlined_call_operand.vmem [shape: f32[1,32], index: 4, kind: input, shape index: {}]
  %s5 = inlined_call_operand.vmem [shape: f32[2,1,32], index: 5, kind: input, shape index: {}]
  %s6 = inlined_call_operand.vmem [shape: f32[2,1,32], index: 6, kind: input, shape index: {}]
  %s7 = inlined_call_operand.vmem [shape: bf16[2,32,96], index: 7, kind: input, shape index: {}]
  %s8 = inlined_call_operand.vmem [shape: f32[2,1,96], index: 8, kind: input, shape index: {}]
  %s9 = inlined_call_operand.vmem [shape: bf16[2,32,32], index: 9, kind: input, shape index: {}]
  %s10 = inlined_call_operand.vmem [shape: f32[2,1,32], index: 10, kind: input, shape index: {}]
  %s11 = inlined_call_operand.vmem [shape: f32[2,1,32], index: 11, kind: input, shape index: {}]
  %s12 = inlined_call_operand.vmem [shape: f32[2,1,32], index: 12, kind: input, shape index: {}]
  %s13 = inlined_call_operand.vmem [shape: bf16[2,32,64], index: 13, kind: input, shape index: {}]
  %s14 = inlined_call_operand.vmem [shape: f32[2,1,64], index: 14, kind: input, shape index: {}]
  %s15 = inlined_call_operand.vmem [shape: bf16[2,64,32], index: 15, kind: input, shape index: {}]
  %s16 = inlined_call_operand.vmem [shape: f32[2,1,32], index: 16, kind: input, shape index: {}]
  %s17 = inlined_call_operand.vmem [shape: f32[1,32], index: 17, kind: input, shape index: {}]
  %s18 = inlined_call_operand.vmem [shape: f32[1,32], index: 18, kind: input, shape index: {}]
  %s19 = inlined_call_operand.vmem [shape: bf16[32,32], index: 19, kind: input, shape index: {}]
  %s20 = inlined_call_operand.vmem [shape: f32[1,32], index: 20, kind: input, shape index: {}]
  %s21 = inlined_call_operand.vmem [shape: bf16[96,4], index: 21, kind: input, shape index: {}]
  %s22 = inlined_call_operand.vmem [shape: bf16[96,4], index: 22, kind: input, shape index: {}]
  %s23 = inlined_call_operand.vmem [shape: f32[1,4], index: 23, kind: input, shape index: {}]
  %s24 = inlined_call_operand.vmem [shape: bf16[4,16], index: 24, kind: input, shape index: {}]
  %s25 = inlined_call_operand.vmem [shape: f32[1,16], index: 25, kind: input, shape index: {}]
  %s26 = inlined_call_operand.hbm [shape: f32[2,16,16], index: 26, kind: output, shape index: {}]
  %s27 = sld [smem:[#allocation0]]
  $region137: #{sequence_encoder_svtr.1} parent=0
    _
  %s29 = ssub.s32 1, %s27
  %s30 = scalar_select 0, %s29, %s27
  $region1: #{sequence_encoder_svtr.1} parent=0
    #allocation2 [shape = 'u8[16384]{0}', space=vmem, size = 0x4000, scoped, tag = 'output window, operand 0']
    #allocation3 [shape = 's32[2]{0}', space=sflag, size = 0x8, scoped, tag = 'scoped memory for sequence_encoder_svtr.1']
    %31 = vsyncpa [#allocation3], 0
    %s32 = scalar_lea.sflag [#allocation3], 1
    %33 = vsyncpa %s32, 0
    loop: start=0, step=1, limit=4
    $region2: #{sequence_encoder_svtr.1} parent=1 // loop_pre_header
      _
    $region3: #{sequence_encoder_svtr.1} parent=1 // loop_header
      %s35 = sphi 0, %s39
      %p36 = scmp.ge.s32.totalorder %s35, 4
      %s45 = sphi 0, %s47
      %s48 = sphi 0, %s45
      %s49 = sphi 0, %s48
      %s65 = sphi 0, %s49
      %s69 = sphi 0, %s69
      %s71 = sphi 0, %s69
      %s72 = sphi 0, %s71
      %s86 = sphi 0, %s72
      %s90 = sphi 0, %s90
      %s92 = sphi 0, %s90
      %s93 = sphi 0, %s92
      %s107 = sphi 0, %s93
      %s111 = sphi 0, %s111
      %s113 = sphi 0, %s111
      %s114 = sphi 0, %s113
      %s128 = sphi 0, %s114
      %s132 = sphi 0, %s132
      %s134 = sphi 0, %s132
      %s135 = sphi 0, %s134
      %s149 = sphi 0, %s135
      %s153 = sphi 0, %s153
      %s155 = sphi 0, %s153
      %s156 = sphi 0, %s155
      %s170 = sphi 0, %s156
      %s174 = sphi 0, %s174
      %s176 = sphi 0, %s174
      %s177 = sphi 0, %s176
      %s191 = sphi 0, %s177
      %s195 = sphi 0, %s195
      %s197 = sphi 0, %s195
      %s198 = sphi 0, %s197
      %s212 = sphi 0, %s198
      %s216 = sphi 0, %s216
      %s218 = sphi 0, %s216
      %s219 = sphi 0, %s218
      %s233 = sphi 0, %s219
      %s237 = sphi 0, %s237
      %s239 = sphi 0, %s237
      %s240 = sphi 0, %s239
      %s254 = sphi 0, %s240
      %s258 = sphi 0, %s258
      %s260 = sphi 0, %s258
      %s261 = sphi 0, %s260
      %s275 = sphi 0, %s261
      %s279 = sphi 0, %s279
      %s281 = sphi 0, %s279
      %s282 = sphi 0, %s281
      %s296 = sphi 0, %s282
      %s300 = sphi 0, %s300
      %s302 = sphi 0, %s300
      %s303 = sphi 0, %s302
      %s317 = sphi 0, %s303
      %s321 = sphi 0, %s321
      %s323 = sphi 0, %s321
      %s324 = sphi 0, %s323
      %s338 = sphi 0, %s324
      %s342 = sphi 0, %s342
      %s344 = sphi 0, %s342
      %s345 = sphi 0, %s344
      %s359 = sphi 0, %s345
      %s363 = sphi 0, %s363
      %s365 = sphi 0, %s363
      %s366 = sphi 0, %s365
      %s380 = sphi 0, %s366
      %s384 = sphi 0, %s384
      %s386 = sphi 0, %s384
      %s387 = sphi 0, %s386
      %s401 = sphi 0, %s387
      %s405 = sphi 0, %s405
      %s407 = sphi 0, %s405
      %s408 = sphi 0, %s407
      %s422 = sphi 0, %s408
      %s426 = sphi 0, %s426
      %s428 = sphi 0, %s426
      %s429 = sphi 0, %s428
      %s443 = sphi 0, %s429
      %s447 = sphi 0, %s447
      %s449 = sphi 0, %s447
      %s450 = sphi 0, %s449
      %s464 = sphi 0, %s450
      %s468 = sphi 0, %s468
      %s470 = sphi 0, %s468
      %s471 = sphi 0, %s470
      %s485 = sphi 0, %s471
      %s489 = sphi 0, %s489
      %s491 = sphi 0, %s489
      %s492 = sphi 0, %s491
      %s506 = sphi 0, %s492
      %s510 = sphi 0, %s510
      %s512 = sphi 0, %s510
      %s513 = sphi 0, %s512
      %s527 = sphi 0, %s513
      %s531 = sphi 0, %s531
      %s533 = sphi 0, %s531
      %s534 = sphi 0, %s533
      %s548 = sphi 0, %s534
      %s552 = sphi 0, %s552
      %s554 = sphi 0, %s552
      %s555 = sphi 0, %s554
      %s569 = sphi 0, %s555
      %s573 = sphi 0, %s573
      %s575 = sphi 0, %s573
      %s576 = sphi 0, %s575
      %s590 = sphi 0, %s576
      %s596 = sphi 0, %s598
      %s599 = sphi 0, %s596
      %s600 = sphi 0, %s599
      %s616 = sphi 0, %s600
    $region4: #{sequence_encoder_svtr.1} parent=1 // loop_header_branch
      %38 = sbr.rel (%p36) target = $region8
    $region5: #{sequence_encoder_svtr.1} parent=1 // loop_body
      %s40 = ssub.s32 %s35, 1
      %s41 = ssub.s32 %s35, 2
      %s42 = sadd.s32 %s35, 1
      %s43 = ssub.s32 %s35, %s42
      %p44 = scmp.eq.s32.totalorder %s43, 0
      %s46 = sadd.s32 %s45, 1
      %s47 = scalar_select %p44, %s45, %s46
      %p50 = pneg %p44
      %p51 = scmp.eq.s32.totalorder %s35, 1
      %p52 = por %p50, %p51
      %p53 = scmp.ne.s32.totalorder %s45, %s48
      %p54 = scmp.eq.s32.totalorder %s35, 0
      %p55 = por %p53, %p54
      %p56 = scmp.ne.s32.totalorder %s45, %s48
      %p57 = scmp.eq.s32.totalorder %s40, 1
      %p58 = por %p56, %p57
      %p59 = scmp.ne.s32.totalorder %s48, %s49
      %p60 = scmp.eq.s32.totalorder %s40, 0
      %p61 = por %p59, %p60
      %p62 = scmp.ne.s32.totalorder %s48, %s49
      %p63 = scmp.eq.s32.totalorder %s41, 1
      %p64 = por %p62, %p63
      %p66 = scmp.ne.s32.totalorder %s49, %s65
      %p67 = scmp.eq.s32.totalorder %s41, 0
      %p68 = por %p66, %p67
      %s70 = sadd.s32 %s69, 1
      %p73 = scmp.eq.s32.totalorder %s35, 1
      %p74 = scmp.ne.s32.totalorder %s69, %s71
      %p75 = scmp.eq.s32.totalorder %s35, 0
      %p76 = por %p74, %p75
      %p77 = scmp.ne.s32.totalorder %s69, %s71
      %p78 = scmp.eq.s32.totalorder %s40, 1
      %p79 = por %p77, %p78
      %p80 = scmp.ne.s32.totalorder %s71, %s72
      %p81 = scmp.eq.s32.totalorder %s40, 0
      %p82 = por %p80, %p81
      %p83 = scmp.ne.s32.totalorder %s71, %s72
      %p84 = scmp.eq.s32.totalorder %s41, 1
      %p85 = por %p83, %p84
      %p87 = scmp.ne.s32.totalorder %s72, %s86
      %p88 = scmp.eq.s32.totalorder %s41, 0
      %p89 = por %p87, %p88
      %s91 = sadd.s32 %s90, 1
      %p94 = scmp.eq.s32.totalorder %s35, 1
      %p95 = scmp.ne.s32.totalorder %s90, %s92
      %p96 = scmp.eq.s32.totalorder %s35, 0
      %p97 = por %p95, %p96
      %p98 = scmp.ne.s32.totalorder %s90, %s92
      %p99 = scmp.eq.s32.totalorder %s40, 1
      %p100 = por %p98, %p99
      %p101 = scmp.ne.s32.totalorder %s92, %s93
      %p102 = scmp.eq.s32.totalorder %s40, 0
      %p103 = por %p101, %p102
      %p104 = scmp.ne.s32.totalorder %s92, %s93
      %p105 = scmp.eq.s32.totalorder %s41, 1
      %p106 = por %p104, %p105
      %p108 = scmp.ne.s32.totalorder %s93, %s107
      %p109 = scmp.eq.s32.totalorder %s41, 0
      %p110 = por %p108, %p109
      %s112 = sadd.s32 %s111, 1
      %p115 = scmp.eq.s32.totalorder %s35, 1
      %p116 = scmp.ne.s32.totalorder %s111, %s113
      %p117 = scmp.eq.s32.totalorder %s35, 0
      %p118 = por %p116, %p117
      %p119 = scmp.ne.s32.totalorder %s111, %s113
      %p120 = scmp.eq.s32.totalorder %s40, 1
      %p121 = por %p119, %p120
      %p122 = scmp.ne.s32.totalorder %s113, %s114
      %p123 = scmp.eq.s32.totalorder %s40, 0
      %p124 = por %p122, %p123
      %p125 = scmp.ne.s32.totalorder %s113, %s114
      %p126 = scmp.eq.s32.totalorder %s41, 1
      %p127 = por %p125, %p126
      %p129 = scmp.ne.s32.totalorder %s114, %s128
      %p130 = scmp.eq.s32.totalorder %s41, 0
      %p131 = por %p129, %p130
      %s133 = sadd.s32 %s132, 1
      %p136 = scmp.eq.s32.totalorder %s35, 1
      %p137 = scmp.ne.s32.totalorder %s132, %s134
      %p138 = scmp.eq.s32.totalorder %s35, 0
      %p139 = por %p137, %p138
      %p140 = scmp.ne.s32.totalorder %s132, %s134
      %p141 = scmp.eq.s32.totalorder %s40, 1
      %p142 = por %p140, %p141
      %p143 = scmp.ne.s32.totalorder %s134, %s135
      %p144 = scmp.eq.s32.totalorder %s40, 0
      %p145 = por %p143, %p144
      %p146 = scmp.ne.s32.totalorder %s134, %s135
      %p147 = scmp.eq.s32.totalorder %s41, 1
      %p148 = por %p146, %p147
      %p150 = scmp.ne.s32.totalorder %s135, %s149
      %p151 = scmp.eq.s32.totalorder %s41, 0
      %p152 = por %p150, %p151
      %s154 = sadd.s32 %s153, 1
      %p157 = scmp.eq.s32.totalorder %s35, 1
      %p158 = scmp.ne.s32.totalorder %s153, %s155
      %p159 = scmp.eq.s32.totalorder %s35, 0
      %p160 = por %p158, %p159
      %p161 = scmp.ne.s32.totalorder %s153, %s155
      %p162 = scmp.eq.s32.totalorder %s40, 1
      %p163 = por %p161, %p162
      %p164 = scmp.ne.s32.totalorder %s155, %s156
      %p165 = scmp.eq.s32.totalorder %s40, 0
      %p166 = por %p164, %p165
      %p167 = scmp.ne.s32.totalorder %s155, %s156
      %p168 = scmp.eq.s32.totalorder %s41, 1
      %p169 = por %p167, %p168
      %p171 = scmp.ne.s32.totalorder %s156, %s170
      %p172 = scmp.eq.s32.totalorder %s41, 0
      %p173 = por %p171, %p172
      %s175 = sadd.s32 %s174, 1
      %p178 = scmp.eq.s32.totalorder %s35, 1
      %p179 = scmp.ne.s32.totalorder %s174, %s176
      %p180 = scmp.eq.s32.totalorder %s35, 0
      %p181 = por %p179, %p180
      %p182 = scmp.ne.s32.totalorder %s174, %s176
      %p183 = scmp.eq.s32.totalorder %s40, 1
      %p184 = por %p182, %p183
      %p185 = scmp.ne.s32.totalorder %s176, %s177
      %p186 = scmp.eq.s32.totalorder %s40, 0
      %p187 = por %p185, %p186
      %p188 = scmp.ne.s32.totalorder %s176, %s177
      %p189 = scmp.eq.s32.totalorder %s41, 1
      %p190 = por %p188, %p189
      %p192 = scmp.ne.s32.totalorder %s177, %s191
      %p193 = scmp.eq.s32.totalorder %s41, 0
      %p194 = por %p192, %p193
      %s196 = sadd.s32 %s195, 1
      %p199 = scmp.eq.s32.totalorder %s35, 1
      %p200 = scmp.ne.s32.totalorder %s195, %s197
      %p201 = scmp.eq.s32.totalorder %s35, 0
      %p202 = por %p200, %p201
      %p203 = scmp.ne.s32.totalorder %s195, %s197
      %p204 = scmp.eq.s32.totalorder %s40, 1
      %p205 = por %p203, %p204
      %p206 = scmp.ne.s32.totalorder %s197, %s198
      %p207 = scmp.eq.s32.totalorder %s40, 0
      %p208 = por %p206, %p207
      %p209 = scmp.ne.s32.totalorder %s197, %s198
      %p210 = scmp.eq.s32.totalorder %s41, 1
      %p211 = por %p209, %p210
      %p213 = scmp.ne.s32.totalorder %s198, %s212
      %p214 = scmp.eq.s32.totalorder %s41, 0
      %p215 = por %p213, %p214
      %s217 = sadd.s32 %s216, 1
      %p220 = scmp.eq.s32.totalorder %s35, 1
      %p221 = scmp.ne.s32.totalorder %s216, %s218
      %p222 = scmp.eq.s32.totalorder %s35, 0
      %p223 = por %p221, %p222
      %p224 = scmp.ne.s32.totalorder %s216, %s218
      %p225 = scmp.eq.s32.totalorder %s40, 1
      %p226 = por %p224, %p225
      %p227 = scmp.ne.s32.totalorder %s218, %s219
      %p228 = scmp.eq.s32.totalorder %s40, 0
      %p229 = por %p227, %p228
      %p230 = scmp.ne.s32.totalorder %s218, %s219
      %p231 = scmp.eq.s32.totalorder %s41, 1
      %p232 = por %p230, %p231
      %p234 = scmp.ne.s32.totalorder %s219, %s233
      %p235 = scmp.eq.s32.totalorder %s41, 0
      %p236 = por %p234, %p235
      %s238 = sadd.s32 %s237, 1
      %p241 = scmp.eq.s32.totalorder %s35, 1
      %p242 = scmp.ne.s32.totalorder %s237, %s239
      %p243 = scmp.eq.s32.totalorder %s35, 0
      %p244 = por %p242, %p243
      %p245 = scmp.ne.s32.totalorder %s237, %s239
      %p246 = scmp.eq.s32.totalorder %s40, 1
      %p247 = por %p245, %p246
      %p248 = scmp.ne.s32.totalorder %s239, %s240
      %p249 = scmp.eq.s32.totalorder %s40, 0
      %p250 = por %p248, %p249
      %p251 = scmp.ne.s32.totalorder %s239, %s240
      %p252 = scmp.eq.s32.totalorder %s41, 1
      %p253 = por %p251, %p252
      %p255 = scmp.ne.s32.totalorder %s240, %s254
      %p256 = scmp.eq.s32.totalorder %s41, 0
      %p257 = por %p255, %p256
      %s259 = sadd.s32 %s258, 1
      %p262 = scmp.eq.s32.totalorder %s35, 1
      %p263 = scmp.ne.s32.totalorder %s258, %s260
      %p264 = scmp.eq.s32.totalorder %s35, 0
      %p265 = por %p263, %p264
      %p266 = scmp.ne.s32.totalorder %s258, %s260
      %p267 = scmp.eq.s32.totalorder %s40, 1
      %p268 = por %p266, %p267
      %p269 = scmp.ne.s32.totalorder %s260, %s261
      %p270 = scmp.eq.s32.totalorder %s40, 0
      %p271 = por %p269, %p270
      %p272 = scmp.ne.s32.totalorder %s260, %s261
      %p273 = scmp.eq.s32.totalorder %s41, 1
      %p274 = por %p272, %p273
      %p276 = scmp.ne.s32.totalorder %s261, %s275
      %p277 = scmp.eq.s32.totalorder %s41, 0
      %p278 = por %p276, %p277
      %s280 = sadd.s32 %s279, 1
      %p283 = scmp.eq.s32.totalorder %s35, 1
      %p284 = scmp.ne.s32.totalorder %s279, %s281
      %p285 = scmp.eq.s32.totalorder %s35, 0
      %p286 = por %p284, %p285
      %p287 = scmp.ne.s32.totalorder %s279, %s281
      %p288 = scmp.eq.s32.totalorder %s40, 1
      %p289 = por %p287, %p288
      %p290 = scmp.ne.s32.totalorder %s281, %s282
      %p291 = scmp.eq.s32.totalorder %s40, 0
      %p292 = por %p290, %p291
      %p293 = scmp.ne.s32.totalorder %s281, %s282
      %p294 = scmp.eq.s32.totalorder %s41, 1
      %p295 = por %p293, %p294
      %p297 = scmp.ne.s32.totalorder %s282, %s296
      %p298 = scmp.eq.s32.totalorder %s41, 0
      %p299 = por %p297, %p298
      %s301 = sadd.s32 %s300, 1
      %p304 = scmp.eq.s32.totalorder %s35, 1
      %p305 = scmp.ne.s32.totalorder %s300, %s302
      %p306 = scmp.eq.s32.totalorder %s35, 0
      %p307 = por %p305, %p306
      %p308 = scmp.ne.s32.totalorder %s300, %s302
      %p309 = scmp.eq.s32.totalorder %s40, 1
      %p310 = por %p308, %p309
      %p311 = scmp.ne.s32.totalorder %s302, %s303
      %p312 = scmp.eq.s32.totalorder %s40, 0
      %p313 = por %p311, %p312
      %p314 = scmp.ne.s32.totalorder %s302, %s303
      %p315 = scmp.eq.s32.totalorder %s41, 1
      %p316 = por %p314, %p315
      %p318 = scmp.ne.s32.totalorder %s303, %s317
      %p319 = scmp.eq.s32.totalorder %s41, 0
      %p320 = por %p318, %p319
      %s322 = sadd.s32 %s321, 1
      %p325 = scmp.eq.s32.totalorder %s35, 1
      %p326 = scmp.ne.s32.totalorder %s321, %s323
      %p327 = scmp.eq.s32.totalorder %s35, 0
      %p328 = por %p326, %p327
      %p329 = scmp.ne.s32.totalorder %s321, %s323
      %p330 = scmp.eq.s32.totalorder %s40, 1
      %p331 = por %p329, %p330
      %p332 = scmp.ne.s32.totalorder %s323, %s324
      %p333 = scmp.eq.s32.totalorder %s40, 0
      %p334 = por %p332, %p333
      %p335 = scmp.ne.s32.totalorder %s323, %s324
      %p336 = scmp.eq.s32.totalorder %s41, 1
      %p337 = por %p335, %p336
      %p339 = scmp.ne.s32.totalorder %s324, %s338
      %p340 = scmp.eq.s32.totalorder %s41, 0
      %p341 = por %p339, %p340
      %s343 = sadd.s32 %s342, 1
      %p346 = scmp.eq.s32.totalorder %s35, 1
      %p347 = scmp.ne.s32.totalorder %s342, %s344
      %p348 = scmp.eq.s32.totalorder %s35, 0
      %p349 = por %p347, %p348
      %p350 = scmp.ne.s32.totalorder %s342, %s344
      %p351 = scmp.eq.s32.totalorder %s40, 1
      %p352 = por %p350, %p351
      %p353 = scmp.ne.s32.totalorder %s344, %s345
      %p354 = scmp.eq.s32.totalorder %s40, 0
      %p355 = por %p353, %p354
      %p356 = scmp.ne.s32.totalorder %s344, %s345
      %p357 = scmp.eq.s32.totalorder %s41, 1
      %p358 = por %p356, %p357
      %p360 = scmp.ne.s32.totalorder %s345, %s359
      %p361 = scmp.eq.s32.totalorder %s41, 0
      %p362 = por %p360, %p361
      %s364 = sadd.s32 %s363, 1
      %p367 = scmp.eq.s32.totalorder %s35, 1
      %p368 = scmp.ne.s32.totalorder %s363, %s365
      %p369 = scmp.eq.s32.totalorder %s35, 0
      %p370 = por %p368, %p369
      %p371 = scmp.ne.s32.totalorder %s363, %s365
      %p372 = scmp.eq.s32.totalorder %s40, 1
      %p373 = por %p371, %p372
      %p374 = scmp.ne.s32.totalorder %s365, %s366
      %p375 = scmp.eq.s32.totalorder %s40, 0
      %p376 = por %p374, %p375
      %p377 = scmp.ne.s32.totalorder %s365, %s366
      %p378 = scmp.eq.s32.totalorder %s41, 1
      %p379 = por %p377, %p378
      %p381 = scmp.ne.s32.totalorder %s366, %s380
      %p382 = scmp.eq.s32.totalorder %s41, 0
      %p383 = por %p381, %p382
      %s385 = sadd.s32 %s384, 1
      %p388 = scmp.eq.s32.totalorder %s35, 1
      %p389 = scmp.ne.s32.totalorder %s384, %s386
      %p390 = scmp.eq.s32.totalorder %s35, 0
      %p391 = por %p389, %p390
      %p392 = scmp.ne.s32.totalorder %s384, %s386
      %p393 = scmp.eq.s32.totalorder %s40, 1
      %p394 = por %p392, %p393
      %p395 = scmp.ne.s32.totalorder %s386, %s387
      %p396 = scmp.eq.s32.totalorder %s40, 0
      %p397 = por %p395, %p396
      %p398 = scmp.ne.s32.totalorder %s386, %s387
      %p399 = scmp.eq.s32.totalorder %s41, 1
      %p400 = por %p398, %p399
      %p402 = scmp.ne.s32.totalorder %s387, %s401
      %p403 = scmp.eq.s32.totalorder %s41, 0
      %p404 = por %p402, %p403
      %s406 = sadd.s32 %s405, 1
      %p409 = scmp.eq.s32.totalorder %s35, 1
      %p410 = scmp.ne.s32.totalorder %s405, %s407
      %p411 = scmp.eq.s32.totalorder %s35, 0
      %p412 = por %p410, %p411
      %p413 = scmp.ne.s32.totalorder %s405, %s407
      %p414 = scmp.eq.s32.totalorder %s40, 1
      %p415 = por %p413, %p414
      %p416 = scmp.ne.s32.totalorder %s407, %s408
      %p417 = scmp.eq.s32.totalorder %s40, 0
      %p418 = por %p416, %p417
      %p419 = scmp.ne.s32.totalorder %s407, %s408
      %p420 = scmp.eq.s32.totalorder %s41, 1
      %p421 = por %p419, %p420
      %p423 = scmp.ne.s32.totalorder %s408, %s422
      %p424 = scmp.eq.s32.totalorder %s41, 0
      %p425 = por %p423, %p424
      %s427 = sadd.s32 %s426, 1
      %p430 = scmp.eq.s32.totalorder %s35, 1
      %p431 = scmp.ne.s32.totalorder %s426, %s428
      %p432 = scmp.eq.s32.totalorder %s35, 0
      %p433 = por %p431, %p432
      %p434 = scmp.ne.s32.totalorder %s426, %s428
      %p435 = scmp.eq.s32.totalorder %s40, 1
      %p436 = por %p434, %p435
      %p437 = scmp.ne.s32.totalorder %s428, %s429
      %p438 = scmp.eq.s32.totalorder %s40, 0
      %p439 = por %p437, %p438
      %p440 = scmp.ne.s32.totalorder %s428, %s429
      %p441 = scmp.eq.s32.totalorder %s41, 1
      %p442 = por %p440, %p441
      %p444 = scmp.ne.s32.totalorder %s429, %s443
      %p445 = scmp.eq.s32.totalorder %s41, 0
      %p446 = por %p444, %p445
      %s448 = sadd.s32 %s447, 1
      %p451 = scmp.eq.s32.totalorder %s35, 1
      %p452 = scmp.ne.s32.totalorder %s447, %s449
      %p453 = scmp.eq.s32.totalorder %s35, 0
      %p454 = por %p452, %p453
      %p455 = scmp.ne.s32.totalorder %s447, %s449
      %p456 = scmp.eq.s32.totalorder %s40, 1
      %p457 = por %p455, %p456
      %p458 = scmp.ne.s32.totalorder %s449, %s450
      %p459 = scmp.eq.s32.totalorder %s40, 0
      %p460 = por %p458, %p459
      %p461 = scmp.ne.s32.totalorder %s449, %s450
      %p462 = scmp.eq.s32.totalorder %s41, 1
      %p463 = por %p461, %p462
      %p465 = scmp.ne.s32.totalorder %s450, %s464
      %p466 = scmp.eq.s32.totalorder %s41, 0
      %p467 = por %p465, %p466
      %s469 = sadd.s32 %s468, 1
      %p472 = scmp.eq.s32.totalorder %s35, 1
      %p473 = scmp.ne.s32.totalorder %s468, %s470
      %p474 = scmp.eq.s32.totalorder %s35, 0
      %p475 = por %p473, %p474
      %p476 = scmp.ne.s32.totalorder %s468, %s470
      %p477 = scmp.eq.s32.totalorder %s40, 1
      %p478 = por %p476, %p477
      %p479 = scmp.ne.s32.totalorder %s470, %s471
      %p480 = scmp.eq.s32.totalorder %s40, 0
      %p481 = por %p479, %p480
      %p482 = scmp.ne.s32.totalorder %s470, %s471
      %p483 = scmp.eq.s32.totalorder %s41, 1
      %p484 = por %p482, %p483
      %p486 = scmp.ne.s32.totalorder %s471, %s485
      %p487 = scmp.eq.s32.totalorder %s41, 0
      %p488 = por %p486, %p487
      %s490 = sadd.s32 %s489, 1
      %p493 = scmp.eq.s32.totalorder %s35, 1
      %p494 = scmp.ne.s32.totalorder %s489, %s491
      %p495 = scmp.eq.s32.totalorder %s35, 0
      %p496 = por %p494, %p495
      %p497 = scmp.ne.s32.totalorder %s489, %s491
      %p498 = scmp.eq.s32.totalorder %s40, 1
      %p499 = por %p497, %p498
      %p500 = scmp.ne.s32.totalorder %s491, %s492
      %p501 = scmp.eq.s32.totalorder %s40, 0
      %p502 = por %p500, %p501
      %p503 = scmp.ne.s32.totalorder %s491, %s492
      %p504 = scmp.eq.s32.totalorder %s41, 1
      %p505 = por %p503, %p504
      %p507 = scmp.ne.s32.totalorder %s492, %s506
      %p508 = scmp.eq.s32.totalorder %s41, 0
      %p509 = por %p507, %p508
      %s511 = sadd.s32 %s510, 1
      %p514 = scmp.eq.s32.totalorder %s35, 1
      %p515 = scmp.ne.s32.totalorder %s510, %s512
      %p516 = scmp.eq.s32.totalorder %s35, 0
      %p517 = por %p515, %p516
      %p518 = scmp.ne.s32.totalorder %s510, %s512
      %p519 = scmp.eq.s32.totalorder %s40, 1
      %p520 = por %p518, %p519
      %p521 = scmp.ne.s32.totalorder %s512, %s513
      %p522 = scmp.eq.s32.totalorder %s40, 0
      %p523 = por %p521, %p522
      %p524 = scmp.ne.s32.totalorder %s512, %s513
      %p525 = scmp.eq.s32.totalorder %s41, 1
      %p526 = por %p524, %p525
      %p528 = scmp.ne.s32.totalorder %s513, %s527
      %p529 = scmp.eq.s32.totalorder %s41, 0
      %p530 = por %p528, %p529
      %s532 = sadd.s32 %s531, 1
      %p535 = scmp.eq.s32.totalorder %s35, 1
      %p536 = scmp.ne.s32.totalorder %s531, %s533
      %p537 = scmp.eq.s32.totalorder %s35, 0
      %p538 = por %p536, %p537
      %p539 = scmp.ne.s32.totalorder %s531, %s533
      %p540 = scmp.eq.s32.totalorder %s40, 1
      %p541 = por %p539, %p540
      %p542 = scmp.ne.s32.totalorder %s533, %s534
      %p543 = scmp.eq.s32.totalorder %s40, 0
      %p544 = por %p542, %p543
      %p545 = scmp.ne.s32.totalorder %s533, %s534
      %p546 = scmp.eq.s32.totalorder %s41, 1
      %p547 = por %p545, %p546
      %p549 = scmp.ne.s32.totalorder %s534, %s548
      %p550 = scmp.eq.s32.totalorder %s41, 0
      %p551 = por %p549, %p550
      %s553 = sadd.s32 %s552, 1
      %p556 = scmp.eq.s32.totalorder %s35, 1
      %p557 = scmp.ne.s32.totalorder %s552, %s554
      %p558 = scmp.eq.s32.totalorder %s35, 0
      %p559 = por %p557, %p558
      %p560 = scmp.ne.s32.totalorder %s552, %s554
      %p561 = scmp.eq.s32.totalorder %s40, 1
      %p562 = por %p560, %p561
      %p563 = scmp.ne.s32.totalorder %s554, %s555
      %p564 = scmp.eq.s32.totalorder %s40, 0
      %p565 = por %p563, %p564
      %p566 = scmp.ne.s32.totalorder %s554, %s555
      %p567 = scmp.eq.s32.totalorder %s41, 1
      %p568 = por %p566, %p567
      %p570 = scmp.ne.s32.totalorder %s555, %s569
      %p571 = scmp.eq.s32.totalorder %s41, 0
      %p572 = por %p570, %p571
      %s574 = sadd.s32 %s573, 1
      %p577 = scmp.eq.s32.totalorder %s35, 1
      %p578 = scmp.ne.s32.totalorder %s573, %s575
      %p579 = scmp.eq.s32.totalorder %s35, 0
      %p580 = por %p578, %p579
      %p581 = scmp.ne.s32.totalorder %s573, %s575
      %p582 = scmp.eq.s32.totalorder %s40, 1
      %p583 = por %p581, %p582
      %p584 = scmp.ne.s32.totalorder %s575, %s576
      %p585 = scmp.eq.s32.totalorder %s40, 0
      %p586 = por %p584, %p585
      %p587 = scmp.ne.s32.totalorder %s575, %s576
      %p588 = scmp.eq.s32.totalorder %s41, 1
      %p589 = por %p587, %p588
      %p591 = scmp.ne.s32.totalorder %s576, %s590
      %p592 = scmp.eq.s32.totalorder %s41, 0
      %p593 = por %p591, %p592
      %s594 = ssub.s32 %s35, %s42
      %p595 = scmp.eq.s32.totalorder %s594, 0
      %s597 = sadd.s32 %s596, 1
      %s598 = scalar_select %p595, %s596, %s597
      %p601 = pneg %p595
      %p602 = scmp.eq.s32.totalorder %s35, 1
      %p603 = por %p601, %p602
      %p604 = scmp.ne.s32.totalorder %s596, %s599
      %p605 = scmp.eq.s32.totalorder %s35, 0
      %p606 = por %p604, %p605
      %p607 = scmp.ne.s32.totalorder %s596, %s599
      %p608 = scmp.eq.s32.totalorder %s40, 1
      %p609 = por %p607, %p608
      %p610 = scmp.ne.s32.totalorder %s599, %s600
      %p611 = scmp.eq.s32.totalorder %s40, 0
      %p612 = por %p610, %p611
      %p613 = scmp.ne.s32.totalorder %s599, %s600
      %p614 = scmp.eq.s32.totalorder %s41, 1
      %p615 = por %p613, %p614
      %p617 = scmp.ne.s32.totalorder %s600, %s616
      %p618 = scmp.eq.s32.totalorder %s41, 0
      %p619 = por %p617, %p618
      %p620 = scmp.le.s32.totalorder 1, %s35
      %p621 = scmp.lt.s32.totalorder %s35, 3
      %p622 = pnand %p620, %p621
      %p623 = pneg %p622
      // Predicated region
      $region9: #{sequence_encoder_svtr.1} parent=5 // pred_check
        _
      $region10: #{sequence_encoder_svtr.1} parent=5 // pred_check_branch
        %625 = sbr.rel (%p622) target = $region12
      $region11: #{sequence_encoder_svtr.1} parent=5 // pred_region
        %s626 = ssub.s32 %s35, 1
        // Predicated region
        $region13: #{sequence_encoder_svtr.1} parent=11 // pred_check
          %p627 = pneg %p82
        $region14: #{sequence_encoder_svtr.1} parent=11 // pred_check_branch
          %629 = sbr.rel (%p627) target = $region16
        $region15: #{sequence_encoder_svtr.1} parent=11 // pred_region
          _
        $region16: #{sequence_encoder_svtr.1} parent=11 // pred_fallthru
          _
        // Predicated region
        $region17: #{sequence_encoder_svtr.1} parent=11 // pred_check
          %p630 = pneg %p103
        $region18: #{sequence_encoder_svtr.1} parent=11 // pred_check_branch
          %632 = sbr.rel (%p630) target = $region20
        $region19: #{sequence_encoder_svtr.1} parent=11 // pred_region
          _
        $region20: #{sequence_encoder_svtr.1} parent=11 // pred_fallthru
          _
        // Predicated region
        $region21: #{sequence_encoder_svtr.1} parent=11 // pred_check
          %p633 = pneg %p124
        $region22: #{sequence_encoder_svtr.1} parent=11 // pred_check_branch
          %635 = sbr.rel (%p633) target = $region24
        $region23: #{sequence_encoder_svtr.1} parent=11 // pred_region
          _
        $region24: #{sequence_encoder_svtr.1} parent=11 // pred_fallthru
          _
        // Predicated region
        $region25: #{sequence_encoder_svtr.1} parent=11 // pred_check
          %p636 = pneg %p145
        $region26: #{sequence_encoder_svtr.1} parent=11 // pred_check_branch
          %638 = sbr.rel (%p636) target = $region28
        $region27: #{sequence_encoder_svtr.1} parent=11 // pred_region
          _
        $region28: #{sequence_encoder_svtr.1} parent=11 // pred_fallthru
          _
        // Predicated region
        $region29: #{sequence_encoder_svtr.1} parent=11 // pred_check
          %p639 = pneg %p166
        $region30: #{sequence_encoder_svtr.1} parent=11 // pred_check_branch
          %641 = sbr.rel (%p639) target = $region32
        $region31: #{sequence_encoder_svtr.1} parent=11 // pred_region
          _
        $region32: #{sequence_encoder_svtr.1} parent=11 // pred_fallthru
          _
        // Predicated region
        $region33: #{sequence_encoder_svtr.1} parent=11 // pred_check
          %p642 = pneg %p187
        $region34: #{sequence_encoder_svtr.1} parent=11 // pred_check_branch
          %644 = sbr.rel (%p642) target = $region36
        $region35: #{sequence_encoder_svtr.1} parent=11 // pred_region
          _
        $region36: #{sequence_encoder_svtr.1} parent=11 // pred_fallthru
          _
        // Predicated region
        $region37: #{sequence_encoder_svtr.1} parent=11 // pred_check
          %p645 = pneg %p208
        $region38: #{sequence_encoder_svtr.1} parent=11 // pred_check_branch
          %647 = sbr.rel (%p645) target = $region40
        $region39: #{sequence_encoder_svtr.1} parent=11 // pred_region
          _
        $region40: #{sequence_encoder_svtr.1} parent=11 // pred_fallthru
          _
        // Predicated region
        $region41: #{sequence_encoder_svtr.1} parent=11 // pred_check
          %p648 = pneg %p229
        $region42: #{sequence_encoder_svtr.1} parent=11 // pred_check_branch
          %650 = sbr.rel (%p648) target = $region44
        $region43: #{sequence_encoder_svtr.1} parent=11 // pred_region
          _
        $region44: #{sequence_encoder_svtr.1} parent=11 // pred_fallthru
          _
        // Predicated region
        $region45: #{sequence_encoder_svtr.1} parent=11 // pred_check
          %p651 = pneg %p250
        $region46: #{sequence_encoder_svtr.1} parent=11 // pred_check_branch
          %653 = sbr.rel (%p651) target = $region48
        $region47: #{sequence_encoder_svtr.1} parent=11 // pred_region
          _
        $region48: #{sequence_encoder_svtr.1} parent=11 // pred_fallthru
          _
        // Predicated region
        $region49: #{sequence_encoder_svtr.1} parent=11 // pred_check
          %p654 = pneg %p271
        $region50: #{sequence_encoder_svtr.1} parent=11 // pred_check_branch
          %656 = sbr.rel (%p654) target = $region52
        $region51: #{sequence_encoder_svtr.1} parent=11 // pred_region
          _
        $region52: #{sequence_encoder_svtr.1} parent=11 // pred_fallthru
          _
        // Predicated region
        $region53: #{sequence_encoder_svtr.1} parent=11 // pred_check
          %p657 = pneg %p292
        $region54: #{sequence_encoder_svtr.1} parent=11 // pred_check_branch
          %659 = sbr.rel (%p657) target = $region56
        $region55: #{sequence_encoder_svtr.1} parent=11 // pred_region
          _
        $region56: #{sequence_encoder_svtr.1} parent=11 // pred_fallthru
          _
        // Predicated region
        $region57: #{sequence_encoder_svtr.1} parent=11 // pred_check
          %p660 = pneg %p313
        $region58: #{sequence_encoder_svtr.1} parent=11 // pred_check_branch
          %662 = sbr.rel (%p660) target = $region60
        $region59: #{sequence_encoder_svtr.1} parent=11 // pred_region
          _
        $region60: #{sequence_encoder_svtr.1} parent=11 // pred_fallthru
          _
        // Predicated region
        $region61: #{sequence_encoder_svtr.1} parent=11 // pred_check
          %p663 = pneg %p334
        $region62: #{sequence_encoder_svtr.1} parent=11 // pred_check_branch
          %665 = sbr.rel (%p663) target = $region64
        $region63: #{sequence_encoder_svtr.1} parent=11 // pred_region
          _
        $region64: #{sequence_encoder_svtr.1} parent=11 // pred_fallthru
          _
        // Predicated region
        $region65: #{sequence_encoder_svtr.1} parent=11 // pred_check
          %p666 = pneg %p355
        $region66: #{sequence_encoder_svtr.1} parent=11 // pred_check_branch
          %668 = sbr.rel (%p666) target = $region68
        $region67: #{sequence_encoder_svtr.1} parent=11 // pred_region
          _
        $region68: #{sequence_encoder_svtr.1} parent=11 // pred_fallthru
          _
        // Predicated region
        $region69: #{sequence_encoder_svtr.1} parent=11 // pred_check
          %p669 = pneg %p376
        $region70: #{sequence_encoder_svtr.1} parent=11 // pred_check_branch
          %671 = sbr.rel (%p669) target = $region72
        $region71: #{sequence_encoder_svtr.1} parent=11 // pred_region
          _
        $region72: #{sequence_encoder_svtr.1} parent=11 // pred_fallthru
          _
        // Predicated region
        $region73: #{sequence_encoder_svtr.1} parent=11 // pred_check
          %p672 = pneg %p397
        $region74: #{sequence_encoder_svtr.1} parent=11 // pred_check_branch
          %674 = sbr.rel (%p672) target = $region76
        $region75: #{sequence_encoder_svtr.1} parent=11 // pred_region
          _
        $region76: #{sequence_encoder_svtr.1} parent=11 // pred_fallthru
          _
        // Predicated region
        $region77: #{sequence_encoder_svtr.1} parent=11 // pred_check
          %p675 = pneg %p418
        $region78: #{sequence_encoder_svtr.1} parent=11 // pred_check_branch
          %677 = sbr.rel (%p675) target = $region80
        $region79: #{sequence_encoder_svtr.1} parent=11 // pred_region
          _
        $region80: #{sequence_encoder_svtr.1} parent=11 // pred_fallthru
          _
        // Predicated region
        $region81: #{sequence_encoder_svtr.1} parent=11 // pred_check
          %p678 = pneg %p439
        $region82: #{sequence_encoder_svtr.1} parent=11 // pred_check_branch
          %680 = sbr.rel (%p678) target = $region84
        $region83: #{sequence_encoder_svtr.1} parent=11 // pred_region
          _
        $region84: #{sequence_encoder_svtr.1} parent=11 // pred_fallthru
          _
        // Predicated region
        $region85: #{sequence_encoder_svtr.1} parent=11 // pred_check
          %p681 = pneg %p460
        $region86: #{sequence_encoder_svtr.1} parent=11 // pred_check_branch
          %683 = sbr.rel (%p681) target = $region88
        $region87: #{sequence_encoder_svtr.1} parent=11 // pred_region
          _
        $region88: #{sequence_encoder_svtr.1} parent=11 // pred_fallthru
          _
        // Predicated region
        $region89: #{sequence_encoder_svtr.1} parent=11 // pred_check
          %p684 = pneg %p481
        $region90: #{sequence_encoder_svtr.1} parent=11 // pred_check_branch
          %686 = sbr.rel (%p684) target = $region92
        $region91: #{sequence_encoder_svtr.1} parent=11 // pred_region
          _
        $region92: #{sequence_encoder_svtr.1} parent=11 // pred_fallthru
          _
        // Predicated region
        $region93: #{sequence_encoder_svtr.1} parent=11 // pred_check
          %p687 = pneg %p502
        $region94: #{sequence_encoder_svtr.1} parent=11 // pred_check_branch
          %689 = sbr.rel (%p687) target = $region96
        $region95: #{sequence_encoder_svtr.1} parent=11 // pred_region
          _
        $region96: #{sequence_encoder_svtr.1} parent=11 // pred_fallthru
          _
        // Predicated region
        $region97: #{sequence_encoder_svtr.1} parent=11 // pred_check
          %p690 = pneg %p523
        $region98: #{sequence_encoder_svtr.1} parent=11 // pred_check_branch
          %692 = sbr.rel (%p690) target = $region100
        $region99: #{sequence_encoder_svtr.1} parent=11 // pred_region
          _
        $region100: #{sequence_encoder_svtr.1} parent=11 // pred_fallthru
          _
        // Predicated region
        $region101: #{sequence_encoder_svtr.1} parent=11 // pred_check
          %p693 = pneg %p544
        $region102: #{sequence_encoder_svtr.1} parent=11 // pred_check_branch
          %695 = sbr.rel (%p693) target = $region104
        $region103: #{sequence_encoder_svtr.1} parent=11 // pred_region
          _
        $region104: #{sequence_encoder_svtr.1} parent=11 // pred_fallthru
          _
        // Predicated region
        $region105: #{sequence_encoder_svtr.1} parent=11 // pred_check
          %p696 = pneg %p565
        $region106: #{sequence_encoder_svtr.1} parent=11 // pred_check_branch
          %698 = sbr.rel (%p696) target = $region108
        $region107: #{sequence_encoder_svtr.1} parent=11 // pred_region
          _
        $region108: #{sequence_encoder_svtr.1} parent=11 // pred_fallthru
          _
        // Predicated region
        $region109: #{sequence_encoder_svtr.1} parent=11 // pred_check
          %p699 = pneg %p586
        $region110: #{sequence_encoder_svtr.1} parent=11 // pred_check_branch
          %701 = sbr.rel (%p699) target = $region112
        $region111: #{sequence_encoder_svtr.1} parent=11 // pred_region
          _
        $region112: #{sequence_encoder_svtr.1} parent=11 // pred_fallthru
          _
      $region12: #{sequence_encoder_svtr.1} parent=5 // pred_fallthru
        _
      %p702 = scmp.lt.s32.totalorder %s35, 2
      // Predicated region
      $region113: #{sequence_encoder_svtr.1} parent=5 // pred_check
        %p703 = pneg %p702
      $region114: #{sequence_encoder_svtr.1} parent=5 // pred_check_branch
        %705 = sbr.rel (%p703) target = $region116
      $region115: #{sequence_encoder_svtr.1} parent=5 // pred_region
        // Predicated region
        $region117: #{sequence_encoder_svtr.1} parent=115 // pred_check
          %p706 = pneg %p55
        $region118: #{sequence_encoder_svtr.1} parent=115 // pred_check_branch
          %708 = sbr.rel (%p706) target = $region120
        $region119: #{sequence_encoder_svtr.1} parent=115 // pred_region
          %p709 = scmp.lt.s32.totalorder %s35, 1
          %s710 = scalar_select %p709, %s35, 1
          %s711 = smul.addr %s710, 2
          %s712 = smul.addr %s711, 8
          %s713 = scalar_lea.vmem %s0, %s712
        $region120: #{sequence_encoder_svtr.1} parent=115 // pred_fallthru
          _
      $region116: #{sequence_encoder_svtr.1} parent=5 // pred_fallthru
        _
      %p714 = scmp.le.s32.totalorder 1, %s35
      %p715 = scmp.lt.s32.totalorder %s35, 3
      %p716 = pnand %p714, %p715
      %p717 = pneg %p716
      // Predicated region
      $region121: #{sequence_encoder_svtr.1} parent=5 // pred_check
        _
      $region122: #{sequence_encoder_svtr.1} parent=5 // pred_check_branch
        %719 = sbr.rel (%p716) target = $region124
      $region123: #{sequence_encoder_svtr.1} parent=5 // pred_region
        %s720 = ssub.s32 %s35, 1
        %p721 = scmp.lt.s32.totalorder %s40, 1
        %s722 = scalar_select %p721, %s40, 1
        %s723 = smul.addr %s722, 2
        %s724 = smul.addr %s723, 8
        %s725 = scalar_lea.vmem %s0, %s724
        %p726 = pneg %p61
        %p727 = pneg %p58
        %p728 = pneg %p82
        %p729 = pneg %p79
        %p730 = pneg %p103
        %p731 = pneg %p100
        %p732 = pneg %p124
        %p733 = pneg %p121
        %p734 = pneg %p145
        %p735 = pneg %p142
        %p736 = pneg %p166
        %p737 = pneg %p163
        %p738 = pneg %p187
        %p739 = pneg %p184
        %p740 = pneg %p208
        %p741 = pneg %p205
        %p742 = pneg %p229
        %p743 = pneg %p226
        %p744 = pneg %p250
        %p745 = pneg %p247
        %p746 = pneg %p271
        %p747 = pneg %p268
        %p748 = pneg %p292
        %p749 = pneg %p289
        %p750 = pneg %p313
        %p751 = pneg %p310
        %p752 = pneg %p334
        %p753 = pneg %p331
        %p754 = pneg %p355
        %p755 = pneg %p352
        %p756 = pneg %p376
        %p757 = pneg %p373
        %p758 = pneg %p397
        %p759 = pneg %p394
        %p760 = pneg %p418
        %p761 = pneg %p415
        %p762 = pneg %p439
        %p763 = pneg %p436
        %p764 = pneg %p460
        %p765 = pneg %p457
        %p766 = pneg %p481
        %p767 = pneg %p478
        %p768 = pneg %p502
        %p769 = pneg %p499
        %p770 = pneg %p523
        %p771 = pneg %p520
        %p772 = pneg %p544
        %p773 = pneg %p541
        %p774 = pneg %p565
        %p775 = pneg %p562
        %p776 = pneg %p586
        %p777 = pneg %p583
        %p778 = pneg %p612
        %p779 = pneg %p609
        %s780 = sand.u32 %s599, 1
        %s781 = scalar_lea.sflag [#allocation3], %s780
        %s782 = sand.u32 %s599, 1
        %s783 = smul.addr %s782, 16
        %s784 = scalar_lea.vmem [#allocation2], %s783
        %p785 = scmp.lt.s32.totalorder %s40, 1
        %s786 = scalar_select %p785, %s40, 1
        %s787 = smul.addr %s786, 2
        %s788 = smul.addr %s787, 8
        %s789 = scalar_lea.vmem %s0, %s788
        %v791 = vld [vmem:[%s789] sm:$0xff]
        %v792 = vld [vmem:[%s789 + $0x8] sm:$0xff]
        %vm795 = vcmask 1040384
        %v796 = vrot.slane %v791, 7
        %v797 = vrot.slane %v792, 7
        %v798 = vsel %vm795, %v796, %v797
        %v801 = vsel %vm795, 0.0, %v796
        %vm802 = vcmask 1046528
        %v803 = vrot.slane %v791, 1
        %v804 = vrot.slane %v792, 1
        %v805 = vsel %vm802, %v803, %v804
        %v807 = vsel %vm802, %v804, 0.0
        %808 = vrot.lane.b32.xlu0 %v791, 32
        %v809 = vpop.permute.xlu0 %808
        %810 = vrot.lane.b32.xlu0 %v792, 32
        %v811 = vpop.permute.xlu0 %810
        %815 = vrot.lane.b32.xlu0 %v805, 64
        %v816 = vpop.permute.xlu0 %815
        %817 = vrot.lane.b32.xlu0 %v807, 64
        %v818 = vpop.permute.xlu0 %817
        %vm821 = vcmask 261120
        %v822 = vsel %vm821, %v801, %v809
        %v823 = vsel %vm821, %v798, %v811
        %vm824 = vcmask 523264
        %v825 = vsel %vm824, %v822, %v816
        %v826 = vsel %vm824, %v823, %v818
        %v827 = vpack.c.bf16 %v826, %v825
        %v828 = vld [vmem:[%s1] sm:$0xf]
        %v829 = vld [vmem:[%s1 + $0x4] sm:$0xf]
        %v830 = vld [vmem:[%s1 + $0x8] sm:$0xf]
        %v831 = vld [vmem:[%s1 + $0xc] sm:$0xf]
        %v832 = vld [vmem:[%s1 + $0x10] sm:$0xf]
        %v833 = vld [vmem:[%s1 + $0x14] sm:$0xf]
        %v834 = vld [vmem:[%s1 + $0x18] sm:$0xf]
        %v835 = vld [vmem:[%s1 + $0x1c] sm:$0xf]
        %v836 = vld [vmem:[%s1 + $0x20] sm:$0xf]
        %v837 = vld [vmem:[%s1 + $0x24] sm:$0xf]
        %v838 = vld [vmem:[%s1 + $0x28] sm:$0xf]
        %v839 = vld [vmem:[%s1 + $0x2c] sm:$0xf]
        %v840 = vld [vmem:[%s2] sm:$0x1]
        %v842 = vlaneseq
        %v843 = vshrl.u32 %v842, 7
        %v844 = vsub.s32 0, %v843
        %v845 = vrot.slane %v840, %v844
        %v859 = vunpack.c.l.b16 %v828
        %v860 = vunpack.c.l.b16 %v829
        %v861 = vunpack.c.l.b16 %v830
        %v862 = vunpack.c.l.b16 %v831
        %v863 = vunpack.c.l.b16 %v832
        %v864 = vunpack.c.l.b16 %v833
        %v865 = vunpack.c.l.b16 %v834
        %v866 = vunpack.c.l.b16 %v835
        %v867 = vunpack.c.l.b16 %v836
        %v868 = vunpack.c.l.b16 %v837
        %v869 = vunpack.c.l.b16 %v838
        %v870 = vunpack.c.l.b16 %v839
        %v871 = vpack.c.b16 %v860, %v859
        %v872 = vpack.c.b16 %v862, %v861
        %v873 = vpack.c.b16 %v864, %v863
        %v874 = vpack.c.b16 %v866, %v865
        %v875 = vpack.c.b16 %v868, %v867
        %v876 = vpack.c.b16 %v870, %v869
        %vm883 = vcmask 785408
        %v885 = vsel %vm883, %v827, 0
        %887 = vmatprep.subr.bf16.mxu0 0
        %888 = vmatpush1.bf16.msra.mxu0 %v871
        %889 = vmatprep.subr.bf16.mxu0 0
        %890 = vmatpush1.bf16.msra.mxu0 %v872
        %891 = vmatprep.subr.bf16.mxu0 0
        %892 = vmatpush1.bf16.msra.mxu0 %v873
        %893 = vmatprep.subr.bf16.mxu0 0
        %894 = vmatpush1.bf16.msra.mxu0 %v874
        %895 = vmatprep.subr.bf16.mxu0 0
        %896 = vmatpush1.bf16.msra.mxu0 %v875
        %897 = vmatprep.subr.bf16.mxu0 0
        %898 = vmatpush1.bf16.msra.mxu0 %v876
        %899 = vmatprep.subr.bf16.mxu0 0
        %900 = vmatpush1.bf16.msra.mxu0 0
        %901 = vmatprep.subr.bf16.mxu0 0
        %902 = vmatpush1.bf16.msra.mxu0 0
        %903 = vmatprep.subr.bf16.mxu0 0
        %904 = vmatpush1.bf16.msra.mxu0 0
        %905 = vmatprep.subr.bf16.mxu0 0
        %906 = vmatpush1.bf16.msra.mxu0 0
        %907 = vmatprep.subr.bf16.mxu0 0
        %908 = vmatpush1.bf16.msra.mxu0 0
        %909 = vmatprep.subr.bf16.mxu0 0
        %910 = vmatpush1.bf16.msra.mxu0 0
        %911 = vmatprep.subr.bf16.mxu0 0
        %912 = vmatpush1.bf16.msra.mxu0 0
        %913 = vmatprep.subr.bf16.mxu0 0
        %914 = vmatpush1.bf16.msra.mxu0 0
        %915 = vmatprep.subr.bf16.mxu0 0
        %916 = vmatpush1.bf16.msra.mxu0 0
        %917 = vmatprep.subr.bf16.mxu0 0
        %918 = vmatpush1.bf16.msra.mxu0 0
        %919 = vmatprep.mubr.bf16.mxu0 0
        %920 = vmatmul.mubr.bf16.gmra.mrb[0].mxu0 %v885
        %v921 = vpop.f32.mrb[0].mxu0
        %v922 = vadd.f32 %v845, %v921
        %v923 = vpop.f32.mrb[0].mxu0
        %v924 = vpop.f32.mrb[0].mxu0
        %v925 = vadd.f32 %v845, %v924
        %v926 = vpop.f32.mrb[0].mxu0
        %927 = vdwg.mxu0
        %v928 = vxor.u32 %v922, 2147483648
        %v929 = vxor.u32 %v925, 2147483648
        %v930 = vmul.f32 %v928, 1.442695
        %v931 = vpow.pop %v930
        %v932 = vmul.f32 %v929, 1.442695
        %v933 = vpow.pop %v932
        %v934 = vadd.f32 %v931, 1.0
        %v935 = vadd.f32 %v933, 1.0
        %v936 = vrcp.pop %v934
        %v937 = vmul.f32 1.0, %v936
        %v938 = vrcp.pop %v935
        %v939 = vmul.f32 1.0, %v938
        %v940 = vmul.f32 %v922, %v937
        %v941 = vmul.f32 %v925, %v939
        %v942 = vld [vmem:[%s3] sm:$0x3]
        %v943 = vld [vmem:[%s4] sm:$0x1]
        %v944 = vpack.c.bf16 %v941, %v940
        %v946 = vlaneseq
        %v947 = vshrl.u32 %v946, 7
        %v948 = vsub.s32 0, %v947
        %v949 = vrot.slane %v943, %v948
        %vm951 = vcmask 31744
        %v953 = vsel %vm951, %v944, 0
        %vm955 = vcmask 1041408
        %v957 = vsel %vm955, %v942, 0
        %959 = vmatprep.subr.bf16.mxu0 0
        %960 = vmatpush1.bf16.msra.mxu0 %v957
        %961 = vmatprep.subr.bf16.mxu0 0
        %962 = vmatpush1.bf16.msra.mxu0 0
        %963 = vmatprep.subr.bf16.mxu0 0
        %964 = vmatpush1.bf16.msra.mxu0 0
        %965 = vmatprep.subr.bf16.mxu0 0
        %966 = vmatpush1.bf16.msra.mxu0 0
        %967 = vmatprep.subr.bf16.mxu0 0
        %968 = vmatpush1.bf16.msra.mxu0 0
        %969 = vmatprep.subr.bf16.mxu0 0
        %970 = vmatpush1.bf16.msra.mxu0 0
        %971 = vmatprep.subr.bf16.mxu0 0
        %972 = vmatpush1.bf16.msra.mxu0 0
        %973 = vmatprep.subr.bf16.mxu0 0
        %974 = vmatpush1.bf16.msra.mxu0 0
        %975 = vmatprep.subr.bf16.mxu0 0
        %976 = vmatpush1.bf16.msra.mxu0 0
        %977 = vmatprep.subr.bf16.mxu0 0
        %978 = vmatpush1.bf16.msra.mxu0 0
        %979 = vmatprep.subr.bf16.mxu0 0
        %980 = vmatpush1.bf16.msra.mxu0 0
        %981 = vmatprep.subr.bf16.mxu0 0
        %982 = vmatpush1.bf16.msra.mxu0 0
        %983 = vmatprep.subr.bf16.mxu0 0
        %984 = vmatpush1.bf16.msra.mxu0 0
        %985 = vmatprep.subr.bf16.mxu0 0
        %986 = vmatpush1.bf16.msra.mxu0 0
        %987 = vmatprep.subr.bf16.mxu0 0
        %988 = vmatpush1.bf16.msra.mxu0 0
        %989 = vmatprep.subr.bf16.mxu0 0
        %990 = vmatpush1.bf16.msra.mxu0 0
        %991 = vmatprep.mubr.bf16.mxu0 0
        %992 = vmatmul.mubr.bf16.gmra.mrb[0].mxu0 %v953
        %v993 = vpop.f32.mrb[0].mxu0
        %v994 = vadd.f32 %v949, %v993
        %v995 = vpop.f32.mrb[0].mxu0
        %v996 = vpop.f32.mrb[0].mxu0
        %v997 = vadd.f32 %v949, %v996
        %v998 = vpop.f32.mrb[0].mxu0
        %999 = vdwg.mxu0
        %v1000 = vxor.u32 %v994, 2147483648
        %v1001 = vxor.u32 %v997, 2147483648
        %v1002 = vmul.f32 %v1000, 1.442695
        %v1003 = vpow.pop %v1002
        %v1004 = vmul.f32 %v1001, 1.442695
        %v1005 = vpow.pop %v1004
        %v1006 = vadd.f32 %v1003, 1.0
        %v1007 = vadd.f32 %v1005, 1.0
        %v1008 = vrcp.pop %v1006
        %v1009 = vmul.f32 1.0, %v1008
        %v1010 = vrcp.pop %v1007
        %v1011 = vmul.f32 1.0, %v1010
        %v1012 = vmul.f32 %v994, %v1009
        %v1013 = vmul.f32 %v997, %v1011
        %v1014 = vld [vmem:[%s5] sm:$0x1]
        %v1015 = vld [vmem:[%s6] sm:$0x1]
        %v1016 = vsel %vm821, %v1012, 0.0
        %1017 = vadd.xlane.f32.xlu0 %v1016
        %v1018 = vpop.xlane.xlu0 %1017
        %v1019 = vsel %vm821, %v1013, 0.0
        %1020 = vadd.xlane.f32.xlu0 %v1019
        %v1021 = vpop.xlane.xlu0 %1020
        %v1022 = vrcp.pop 32.0
        %v1023 = vmul.f32 %v1018, %v1022
        %v1024 = vmul.f32 %v1021, %v1022
        %v1025 = vsub.f32 %v1012, %v1023
        %v1026 = vsub.f32 %v1013, %v1024
        %v1027 = vmul.f32 %v1025, %v1025
        %v1028 = vmul.f32 %v1026, %v1026
        %v1029 = vsel %vm821, %v1027, 0.0
        %1030 = vadd.xlane.f32.xlu0 %v1029
        %v1031 = vpop.xlane.xlu0 %1030
        %v1032 = vsel %vm821, %v1028, 0.0
        %1033 = vadd.xlane.f32.xlu0 %v1032
        %v1034 = vpop.xlane.xlu0 %1033
        %v1035 = vmul.f32 %v1031, %v1022
        %v1036 = vmul.f32 %v1034, %v1022
        %v1037 = vadd.f32 %v1035, 1e-05
        %v1038 = vadd.f32 %v1036, 1e-05
        %v1039 = vrsqrt.pop %v1037
        %v1040 = vrsqrt.pop %v1038
        %v1041 = vmul.f32 %v1025, %v1039
        %v1042 = vmul.f32 %v1026, %v1040
        %v1044 = vlaneseq
        %v1045 = vshrl.u32 %v1044, 7
        %v1046 = vsub.s32 0, %v1045
        %v1047 = vrot.slane %v1014, %v1046
        %v1049 = vmul.f32 %v1041, %v1047
        %v1050 = vmul.f32 %v1042, %v1047
        %v1052 = vlaneseq
        %v1053 = vshrl.u32 %v1052, 7
        %v1054 = vsub.s32 0, %v1053
        %v1055 = vrot.slane %v1015, %v1054
        %v1057 = vadd.f32 %v1049, %v1055
        %v1058 = vadd.f32 %v1050, %v1055
        %v1059 = vld [vmem:[%s7] sm:$0xf]
        %v1060 = vld [vmem:[%s7 + $0x4] sm:$0xf]
        %v1061 = vld [vmem:[%s7 + $0x8] sm:$0xf]
        %v1062 = vld [vmem:[%s7 + $0xc] sm:$0xf]
        %v1063 = vld [vmem:[%s8] sm:$0x1]
        %v1064 = vpack.c.bf16 %v1058, %v1057
        %v1066 = vlaneseq
        %v1067 = vshrl.u32 %v1066, 7
        %v1068 = vsub.s32 0, %v1067
        %v1069 = vrot.slane %v1063, %v1068
        %v1075 = vunpack.c.l.b16 %v1059
        %v1076 = vunpack.c.l.b16 %v1060
        %v1077 = vunpack.c.l.b16 %v1061
        %v1078 = vunpack.c.l.b16 %v1062
        %v1079 = vpack.c.b16 %v1076, %v1075
        %v1080 = vpack.c.b16 %v1078, %v1077
        %v1084 = vsel %vm821, %v1064, 0
        %1086 = vmatprep.subr.bf16.mxu0 0
        %1087 = vmatpush1.bf16.msra.mxu0 %v1079
        %1088 = vmatprep.subr.bf16.mxu0 0
        %1089 = vmatpush1.bf16.msra.mxu0 %v1080
        %1090 = vmatprep.subr.bf16.mxu0 0
        %1091 = vmatpush1.bf16.msra.mxu0 0
        %1092 = vmatprep.subr.bf16.mxu0 0
        %1093 = vmatpush1.bf16.msra.mxu0 0
        %1094 = vmatprep.subr.bf16.mxu0 0
        %1095 = vmatpush1.bf16.msra.mxu0 0
        %1096 = vmatprep.subr.bf16.mxu0 0
        %1097 = vmatpush1.bf16.msra.mxu0 0
        %1098 = vmatprep.subr.bf16.mxu0 0
        %1099 = vmatpush1.bf16.msra.mxu0 0
        %1100 = vmatprep.subr.bf16.mxu0 0
        %1101 = vmatpush1.bf16.msra.mxu0 0
        %1102 = vmatprep.subr.bf16.mxu0 0
        %1103 = vmatpush1.bf16.msra.mxu0 0
        %1104 = vmatprep.subr.bf16.mxu0 0
        %1105 = vmatpush1.bf16.msra.mxu0 0
        %1106 = vmatprep.subr.bf16.mxu0 0
        %1107 = vmatpush1.bf16.msra.mxu0 0
        %1108 = vmatprep.subr.bf16.mxu0 0
        %1109 = vmatpush1.bf16.msra.mxu0 0
        %1110 = vmatprep.subr.bf16.mxu0 0
        %1111 = vmatpush1.bf16.msra.mxu0 0
        %1112 = vmatprep.subr.bf16.mxu0 0
        %1113 = vmatpush1.bf16.msra.mxu0 0
        %1114 = vmatprep.subr.bf16.mxu0 0
        %1115 = vmatpush1.bf16.msra.mxu0 0
        %1116 = vmatprep.subr.bf16.mxu0 0
        %1117 = vmatpush1.bf16.msra.mxu0 0
        %1118 = vmatprep.mubr.bf16.mxu0 0
        %1119 = vmatmul.mubr.bf16.gmra.mrb[0].mxu0 %v1084
        %v1120 = vpop.f32.mrb[0].mxu0
        %v1121 = vadd.f32 %v1069, %v1120
        %v1122 = vpop.f32.mrb[0].mxu0
        %v1123 = vpop.f32.mrb[0].mxu0
        %v1124 = vadd.f32 %v1069, %v1123
        %v1125 = vpop.f32.mrb[0].mxu0
        %1126 = vdwg.mxu0
        %v1127 = vpack.c.bf16 %v1124, %v1121
        %1129 = vrot.lane.b32.xlu0 %v1127, 96
        %v1130 = vpop.permute.xlu0 %1129
        %vm1131 = vcmask 64512
        %v1133 = vsel %vm1131, %v1127, 0
        %v1136 = vsel %vm1131, %v1130, 0
        %1138 = vmatprep.subr.bf16.mxu0 0
        %1139 = vmatpush1.bf16.xpose.msra.mxu0 %v1136
        %1140 = vmatprep.subr.bf16.mxu0 0
        %1141 = vmatpush1.bf16.xpose.msra.mxu0 0
        %1142 = vmatprep.subr.bf16.mxu0 0
        %1143 = vmatpush1.bf16.xpose.msra.mxu0 0
        %1144 = vmatprep.subr.bf16.mxu0 0
        %1145 = vmatpush1.bf16.xpose.msra.mxu0 0
        %1146 = vmatprep.subr.bf16.mxu0 0
        %1147 = vmatpush1.bf16.xpose.msra.mxu0 0
        %1148 = vmatprep.subr.bf16.mxu0 0
        %1149 = vmatpush1.bf16.xpose.msra.mxu0 0
        %1150 = vmatprep.subr.bf16.mxu0 0
        %1151 = vmatpush1.bf16.xpose.msra.mxu0 0
        %1152 = vmatprep.subr.bf16.mxu0 0
        %1153 = vmatpush1.bf16.xpose.msra.mxu0 0
        %1154 = vmatprep.subr.bf16.mxu0 0
        %1155 = vmatpush1.bf16.xpose.msra.mxu0 0
        %1156 = vmatprep.subr.bf16.mxu0 0
        %1157 = vmatpush1.bf16.xpose.msra.mxu0 0
        %1158 = vmatprep.subr.bf16.mxu0 0
        %1159 = vmatpush1.bf16.xpose.msra.mxu0 0
        %1160 = vmatprep.subr.bf16.mxu0 0
        %1161 = vmatpush1.bf16.xpose.msra.mxu0 0
        %1162 = vmatprep.subr.bf16.mxu0 0
        %1163 = vmatpush1.bf16.xpose.msra.mxu0 0
        %1164 = vmatprep.subr.bf16.mxu0 0
        %1165 = vmatpush1.bf16.xpose.msra.mxu0 0
        %1166 = vmatprep.subr.bf16.mxu0 0
        %1167 = vmatpush1.bf16.xpose.msra.mxu0 0
        %1168 = vmatprep.subr.bf16.mxu0 0
        %1169 = vmatpush1.bf16.xpose.msra.mxu0 0
        %1170 = vmatprep.mubr.bf16.mxu0 0
        %1171 = vmatmul.mubr.bf16.gmra.mrb[0].mxu0 %v1133
        %v1172 = vpop.f32.mrb[0].mxu0
        %v1173 = vadd.f32 0.0, %v1172
        %v1174 = vpop.f32.mrb[0].mxu0
        %v1175 = vpop.f32.mrb[0].mxu0
        %v1176 = vadd.f32 0.0, %v1175
        %v1177 = vpop.f32.mrb[0].mxu0
        %1178 = vdwg.mxu0
        %v1179 = vmul.f32 %v1173, 0.35355338
        %v1180 = vmul.f32 %v1176, 0.35355338
        %vm1181 = vcmask 130048
        %v1182 = vsel %vm1181, %v1179, -inf
        %1183 = vmax.xlane.f32.xlu0 %v1182
        %v1184 = vpop.xlane.xlu0 %1183
        %v1185 = vsel %vm1181, %v1180, -inf
        %1186 = vmax.xlane.f32.xlu0 %v1185
        %v1187 = vpop.xlane.xlu0 %1186
        %v1188 = vsub.f32 %v1179, %v1184
        %v1189 = vsub.f32 %v1180, %v1187
        %v1190 = vmul.f32 %v1188, 1.442695
        %v1191 = vpow.pop %v1190
        %v1192 = vmul.f32 %v1189, 1.442695
        %v1193 = vpow.pop %v1192
        %v1194 = vsel %vm1181, %v1191, 0.0
        %1195 = vadd.xlane.f32.xlu0 %v1194
        %v1196 = vpop.xlane.xlu0 %1195
        %v1197 = vsel %vm1181, %v1193, 0.0
        %1198 = vadd.xlane.f32.xlu0 %v1197
        %v1199 = vpop.xlane.xlu0 %1198
        %v1200 = vrcp.pop %v1196
        %v1201 = vrcp.pop %v1199
        %v1202 = vmul.f32 %v1191, %v1200
        %v1203 = vmul.f32 %v1193, %v1201
        %v1204 = vpack.c.bf16 %v1203, %v1202
        %1205 = vrot.lane.b32.xlu0 %v1127, 64
        %v1206 = vpop.permute.xlu0 %1205
        %v1209 = vsel %vm1181, %v1204, 0
        %1211 = vmatprep.subr.bf16.mxu0 0
        %1212 = vmatpush1.bf16.msra.mxu0 %v1206
        %1213 = vmatprep.subr.bf16.mxu0 0
        %1214 = vmatpush1.bf16.msra.mxu0 0
        %1215 = vmatprep.subr.bf16.mxu0 0
        %1216 = vmatpush1.bf16.msra.mxu0 0
        %1217 = vmatprep.subr.bf16.mxu0 0
        %1218 = vmatpush1.bf16.msra.mxu0 0
        %1219 = vmatprep.subr.bf16.mxu0 0
        %1220 = vmatpush1.bf16.msra.mxu0 0
        %1221 = vmatprep.subr.bf16.mxu0 0
        %1222 = vmatpush1.bf16.msra.mxu0 0
        %1223 = vmatprep.subr.bf16.mxu0 0
        %1224 = vmatpush1.bf16.msra.mxu0 0
        %1225 = vmatprep.subr.bf16.mxu0 0
        %1226 = vmatpush1.bf16.msra.mxu0 0
        %1227 = vmatprep.subr.bf16.mxu0 0
        %1228 = vmatpush1.bf16.msra.mxu0 0
        %1229 = vmatprep.subr.bf16.mxu0 0
        %1230 = vmatpush1.bf16.msra.mxu0 0
        %1231 = vmatprep.subr.bf16.mxu0 0
        %1232 = vmatpush1.bf16.msra.mxu0 0
        %1233 = vmatprep.subr.bf16.mxu0 0
        %1234 = vmatpush1.bf16.msra.mxu0 0
        %1235 = vmatprep.subr.bf16.mxu0 0
        %1236 = vmatpush1.bf16.msra.mxu0 0
        %1237 = vmatprep.subr.bf16.mxu0 0
        %1238 = vmatpush1.bf16.msra.mxu0 0
        %1239 = vmatprep.subr.bf16.mxu0 0
        %1240 = vmatpush1.bf16.msra.mxu0 0
        %1241 = vmatprep.subr.bf16.mxu0 0
        %1242 = vmatpush1.bf16.msra.mxu0 0
        %1243 = vmatprep.mubr.bf16.mxu0 0
        %1244 = vmatmul.mubr.bf16.gmra.mrb[0].mxu0 %v1209
        %v1245 = vpop.f32.mrb[0].mxu0
        %v1246 = vadd.f32 0.0, %v1245
        %v1247 = vpop.f32.mrb[0].mxu0
        %v1248 = vpop.f32.mrb[0].mxu0
        %v1249 = vadd.f32 0.0, %v1248
        %v1250 = vpop.f32.mrb[0].mxu0
        %1251 = vdwg.mxu0
        %1252 = vrot.lane.b32.xlu0 %v1127, 120
        %v1253 = vpop.permute.xlu0 %1252
        %1254 = vrot.lane.b32.xlu0 %v1127, 88
        %v1255 = vpop.permute.xlu0 %1254
        %v1257 = vsel %vm1131, %v1253, 0
        %v1260 = vsel %vm1131, %v1255, 0
        %1262 = vmatprep.subr.bf16.mxu0 0
        %1263 = vmatpush1.bf16.xpose.msra.mxu0 %v1260
        %1264 = vmatprep.subr.bf16.mxu0 0
        %1265 = vmatpush1.bf16.xpose.msra.mxu0 0
        %1266 = vmatprep.subr.bf16.mxu0 0
        %1267 = vmatpush1.bf16.xpose.msra.mxu0 0
        %1268 = vmatprep.subr.bf16.mxu0 0
        %1269 = vmatpush1.bf16.xpose.msra.mxu0 0
        %1270 = vmatprep.subr.bf16.mxu0 0
        %1271 = vmatpush1.bf16.xpose.msra.mxu0 0
        %1272 = vmatprep.subr.bf16.mxu0 0
        %1273 = vmatpush1.bf16.xpose.msra.mxu0 0
        %1274 = vmatprep.subr.bf16.mxu0 0
        %1275 = vmatpush1.bf16.xpose.msra.mxu0 0
        %1276 = vmatprep.subr.bf16.mxu0 0
        %1277 = vmatpush1.bf16.xpose.msra.mxu0 0
        %1278 = vmatprep.subr.bf16.mxu0 0
        %1279 = vmatpush1.bf16.xpose.msra.mxu0 0
        %1280 = vmatprep.subr.bf16.mxu0 0
        %1281 = vmatpush1.bf16.xpose.msra.mxu0 0
        %1282 = vmatprep.subr.bf16.mxu0 0
        %1283 = vmatpush1.bf16.xpose.msra.mxu0 0
        %1284 = vmatprep.subr.bf16.mxu0 0
        %1285 = vmatpush1.bf16.xpose.msra.mxu0 0
        %1286 = vmatprep.subr.bf16.mxu0 0
        %1287 = vmatpush1.bf16.xpose.msra.mxu0 0
        %1288 = vmatprep.subr.bf16.mxu0 0
        %1289 = vmatpush1.bf16.xpose.msra.mxu0 0
        %1290 = vmatprep.subr.bf16.mxu0 0
        %1291 = vmatpush1.bf16.xpose.msra.mxu0 0
        %1292 = vmatprep.subr.bf16.mxu0 0
        %1293 = vmatpush1.bf16.xpose.msra.mxu0 0
        %1294 = vmatprep.mubr.bf16.mxu0 0
        %1295 = vmatmul.mubr.bf16.gmra.mrb[0].mxu0 %v1257
        %v1296 = vpop.f32.mrb[0].mxu0
        %v1297 = vadd.f32 0.0, %v1296
        %v1298 = vpop.f32.mrb[0].mxu0
        %v1299 = vpop.f32.mrb[0].mxu0
        %v1300 = vadd.f32 0.0, %v1299
        %v1301 = vpop.f32.mrb[0].mxu0
        %1302 = vdwg.mxu0
        %v1303 = vmul.f32 %v1297, 0.35355338
        %v1304 = vmul.f32 %v1300, 0.35355338
        %v1305 = vsel %vm1181, %v1303, -inf
        %1306 = vmax.xlane.f32.xlu0 %v1305
        %v1307 = vpop.xlane.xlu0 %1306
        %v1308 = vsel %vm1181, %v1304, -inf
        %1309 = vmax.xlane.f32.xlu0 %v1308
        %v1310 = vpop.xlane.xlu0 %1309
        %v1311 = vsub.f32 %v1303, %v1307
        %v1312 = vsub.f32 %v1304, %v1310
        %v1313 = vmul.f32 %v1311, 1.442695
        %v1314 = vpow.pop %v1313
        %v1315 = vmul.f32 %v1312, 1.442695
        %v1316 = vpow.pop %v1315
        %v1317 = vsel %vm1181, %v1314, 0.0
        %1318 = vadd.xlane.f32.xlu0 %v1317
        %v1319 = vpop.xlane.xlu0 %1318
        %v1320 = vsel %vm1181, %v1316, 0.0
        %1321 = vadd.xlane.f32.xlu0 %v1320
        %v1322 = vpop.xlane.xlu0 %1321
        %v1323 = vrcp.pop %v1319
        %v1324 = vrcp.pop %v1322
        %v1325 = vmul.f32 %v1314, %v1323
        %v1326 = vmul.f32 %v1316, %v1324
        %v1327 = vpack.c.bf16 %v1326, %v1325
        %1328 = vrot.lane.b32.xlu0 %v1127, 56
        %v1329 = vpop.permute.xlu0 %1328
        %v1332 = vsel %vm1181, %v1327, 0
        %1334 = vmatprep.subr.bf16.mxu0 0
        %1335 = vmatpush1.bf16.msra.mxu0 %v1329
        %1336 = vmatprep.subr.bf16.mxu0 0
        %1337 = vmatpush1.bf16.msra.mxu0 0
        %1338 = vmatprep.subr.bf16.mxu0 0
        %1339 = vmatpush1.bf16.msra.mxu0 0
        %1340 = vmatprep.subr.bf16.mxu0 0
        %1341 = vmatpush1.bf16.msra.mxu0 0
        %1342 = vmatprep.subr.bf16.mxu0 0
        %1343 = vmatpush1.bf16.msra.mxu0 0
        %1344 = vmatprep.subr.bf16.mxu0 0
        %1345 = vmatpush1.bf16.msra.mxu0 0
        %1346 = vmatprep.subr.bf16.mxu0 0
        %1347 = vmatpush1.bf16.msra.mxu0 0
        %1348 = vmatprep.subr.bf16.mxu0 0
        %1349 = vmatpush1.bf16.msra.mxu0 0
        %1350 = vmatprep.subr.bf16.mxu0 0
        %1351 = vmatpush1.bf16.msra.mxu0 0
        %1352 = vmatprep.subr.bf16.mxu0 0
        %1353 = vmatpush1.bf16.msra.mxu0 0
        %1354 = vmatprep.subr.bf16.mxu0 0
        %1355 = vmatpush1.bf16.msra.mxu0 0
        %1356 = vmatprep.subr.bf16.mxu0 0
        %1357 = vmatpush1.bf16.msra.mxu0 0
        %1358 = vmatprep.subr.bf16.mxu0 0
        %1359 = vmatpush1.bf16.msra.mxu0 0
        %1360 = vmatprep.subr.bf16.mxu0 0
        %1361 = vmatpush1.bf16.msra.mxu0 0
        %1362 = vmatprep.subr.bf16.mxu0 0
        %1363 = vmatpush1.bf16.msra.mxu0 0
        %1364 = vmatprep.subr.bf16.mxu0 0
        %1365 = vmatpush1.bf16.msra.mxu0 0
        %1366 = vmatprep.mubr.bf16.mxu0 0
        %1367 = vmatmul.mubr.bf16.gmra.mrb[0].mxu0 %v1332
        %v1368 = vpop.f32.mrb[0].mxu0
        %v1369 = vadd.f32 0.0, %v1368
        %v1370 = vpop.f32.mrb[0].mxu0
        %v1371 = vpop.f32.mrb[0].mxu0
        %v1372 = vadd.f32 0.0, %v1371
        %v1373 = vpop.f32.mrb[0].mxu0
        %1374 = vdwg.mxu0
        %1375 = vrot.lane.b32.xlu0 %v1127, 112
        %v1376 = vpop.permute.xlu0 %1375
        %1377 = vrot.lane.b32.xlu0 %v1127, 80
        %v1378 = vpop.permute.xlu0 %1377
        %v1380 = vsel %vm1131, %v1376, 0
        %v1383 = vsel %vm1131, %v1378, 0
        %1385 = vmatprep.subr.bf16.mxu0 0
        %1386 = vmatpush1.bf16.xpose.msra.mxu0 %v1383
        %1387 = vmatprep.subr.bf16.mxu0 0
        %1388 = vmatpush1.bf16.xpose.msra.mxu0 0
        %1389 = vmatprep.subr.bf16.mxu0 0
        %1390 = vmatpush1.bf16.xpose.msra.mxu0 0
        %1391 = vmatprep.subr.bf16.mxu0 0
        %1392 = vmatpush1.bf16.xpose.msra.mxu0 0
        %1393 = vmatprep.subr.bf16.mxu0 0
        %1394 = vmatpush1.bf16.xpose.msra.mxu0 0
        %1395 = vmatprep.subr.bf16.mxu0 0
        %1396 = vmatpush1.bf16.xpose.msra.mxu0 0
        %1397 = vmatprep.subr.bf16.mxu0 0
        %1398 = vmatpush1.bf16.xpose.msra.mxu0 0
        %1399 = vmatprep.subr.bf16.mxu0 0
        %1400 = vmatpush1.bf16.xpose.msra.mxu0 0
        %1401 = vmatprep.subr.bf16.mxu0 0
        %1402 = vmatpush1.bf16.xpose.msra.mxu0 0
        %1403 = vmatprep.subr.bf16.mxu0 0
        %1404 = vmatpush1.bf16.xpose.msra.mxu0 0
        %1405 = vmatprep.subr.bf16.mxu0 0
        %1406 = vmatpush1.bf16.xpose.msra.mxu0 0
        %1407 = vmatprep.subr.bf16.mxu0 0
        %1408 = vmatpush1.bf16.xpose.msra.mxu0 0
        %1409 = vmatprep.subr.bf16.mxu0 0
        %1410 = vmatpush1.bf16.xpose.msra.mxu0 0
        %1411 = vmatprep.subr.bf16.mxu0 0
        %1412 = vmatpush1.bf16.xpose.msra.mxu0 0
        %1413 = vmatprep.subr.bf16.mxu0 0
        %1414 = vmatpush1.bf16.xpose.msra.mxu0 0
        %1415 = vmatprep.subr.bf16.mxu0 0
        %1416 = vmatpush1.bf16.xpose.msra.mxu0 0
        %1417 = vmatprep.mubr.bf16.mxu0 0
        %1418 = vmatmul.mubr.bf16.gmra.mrb[0].mxu0 %v1380
        %v1419 = vpop.f32.mrb[0].mxu0
        %v1420 = vadd.f32 0.0, %v1419
        %v1421 = vpop.f32.mrb[0].mxu0
        %v1422 = vpop.f32.mrb[0].mxu0
        %v1423 = vadd.f32 0.0, %v1422
        %v1424 = vpop.f32.mrb[0].mxu0
        %1425 = vdwg.mxu0
        %v1426 = vmul.f32 %v1420, 0.35355338
        %v1427 = vmul.f32 %v1423, 0.35355338
        %v1428 = vsel %vm1181, %v1426, -inf
        %1429 = vmax.xlane.f32.xlu0 %v1428
        %v1430 = vpop.xlane.xlu0 %1429
        %v1431 = vsel %vm1181, %v1427, -inf
        %1432 = vmax.xlane.f32.xlu0 %v1431
        %v1433 = vpop.xlane.xlu0 %1432
        %v1434 = vsub.f32 %v1426, %v1430
        %v1435 = vsub.f32 %v1427, %v1433
        %v1436 = vmul.f32 %v1434, 1.442695
        %v1437 = vpow.pop %v1436
        %v1438 = vmul.f32 %v1435, 1.442695
        %v1439 = vpow.pop %v1438
        %v1440 = vsel %vm1181, %v1437, 0.0
        %1441 = vadd.xlane.f32.xlu0 %v1440
        %v1442 = vpop.xlane.xlu0 %1441
        %v1443 = vsel %vm1181, %v1439, 0.0
        %1444 = vadd.xlane.f32.xlu0 %v1443
        %v1445 = vpop.xlane.xlu0 %1444
        %v1446 = vrcp.pop %v1442
        %v1447 = vrcp.pop %v1445
        %v1448 = vmul.f32 %v1437, %v1446
        %v1449 = vmul.f32 %v1439, %v1447
        %v1450 = vpack.c.bf16 %v1449, %v1448
        %1451 = vrot.lane.b32.xlu0 %v1127, 48
        %v1452 = vpop.permute.xlu0 %1451
        %v1455 = vsel %vm1181, %v1450, 0
        %1457 = vmatprep.subr.bf16.mxu0 0
        %1458 = vmatpush1.bf16.msra.mxu0 %v1452
        %1459 = vmatprep.subr.bf16.mxu0 0
        %1460 = vmatpush1.bf16.msra.mxu0 0
        %1461 = vmatprep.subr.bf16.mxu0 0
        %1462 = vmatpush1.bf16.msra.mxu0 0
        %1463 = vmatprep.subr.bf16.mxu0 0
        %1464 = vmatpush1.bf16.msra.mxu0 0
        %1465 = vmatprep.subr.bf16.mxu0 0
        %1466 = vmatpush1.bf16.msra.mxu0 0
        %1467 = vmatprep.subr.bf16.mxu0 0
        %1468 = vmatpush1.bf16.msra.mxu0 0
        %1469 = vmatprep.subr.bf16.mxu0 0
        %1470 = vmatpush1.bf16.msra.mxu0 0
        %1471 = vmatprep.subr.bf16.mxu0 0
        %1472 = vmatpush1.bf16.msra.mxu0 0
        %1473 = vmatprep.subr.bf16.mxu0 0
        %1474 = vmatpush1.bf16.msra.mxu0 0
        %1475 = vmatprep.subr.bf16.mxu0 0
        %1476 = vmatpush1.bf16.msra.mxu0 0
        %1477 = vmatprep.subr.bf16.mxu0 0
        %1478 = vmatpush1.bf16.msra.mxu0 0
        %1479 = vmatprep.subr.bf16.mxu0 0
        %1480 = vmatpush1.bf16.msra.mxu0 0
        %1481 = vmatprep.subr.bf16.mxu0 0
        %1482 = vmatpush1.bf16.msra.mxu0 0
        %1483 = vmatprep.subr.bf16.mxu0 0
        %1484 = vmatpush1.bf16.msra.mxu0 0
        %1485 = vmatprep.subr.bf16.mxu0 0
        %1486 = vmatpush1.bf16.msra.mxu0 0
        %1487 = vmatprep.subr.bf16.mxu0 0
        %1488 = vmatpush1.bf16.msra.mxu0 0
        %1489 = vmatprep.mubr.bf16.mxu0 0
        %1490 = vmatmul.mubr.bf16.gmra.mrb[0].mxu0 %v1455
        %v1491 = vpop.f32.mrb[0].mxu0
        %v1492 = vadd.f32 0.0, %v1491
        %v1493 = vpop.f32.mrb[0].mxu0
        %v1494 = vpop.f32.mrb[0].mxu0
        %v1495 = vadd.f32 0.0, %v1494
        %v1496 = vpop.f32.mrb[0].mxu0
        %1497 = vdwg.mxu0
        %1498 = vrot.lane.b32.xlu0 %v1127, 104
        %v1499 = vpop.permute.xlu0 %1498
        %1500 = vrot.lane.b32.xlu0 %v1127, 72
        %v1501 = vpop.permute.xlu0 %1500
        %v1503 = vsel %vm1131, %v1499, 0
        %v1506 = vsel %vm1131, %v1501, 0
        %1508 = vmatprep.subr.bf16.mxu0 0
        %1509 = vmatpush1.bf16.xpose.msra.mxu0 %v1506
        %1510 = vmatprep.subr.bf16.mxu0 0
        %1511 = vmatpush1.bf16.xpose.msra.mxu0 0
        %1512 = vmatprep.subr.bf16.mxu0 0
        %1513 = vmatpush1.bf16.xpose.msra.mxu0 0
        %1514 = vmatprep.subr.bf16.mxu0 0
        %1515 = vmatpush1.bf16.xpose.msra.mxu0 0
        %1516 = vmatprep.subr.bf16.mxu0 0
        %1517 = vmatpush1.bf16.xpose.msra.mxu0 0
        %1518 = vmatprep.subr.bf16.mxu0 0
        %1519 = vmatpush1.bf16.xpose.msra.mxu0 0
        %1520 = vmatprep.subr.bf16.mxu0 0
        %1521 = vmatpush1.bf16.xpose.msra.mxu0 0
        %1522 = vmatprep.subr.bf16.mxu0 0
        %1523 = vmatpush1.bf16.xpose.msra.mxu0 0
        %1524 = vmatprep.subr.bf16.mxu0 0
        %1525 = vmatpush1.bf16.xpose.msra.mxu0 0
        %1526 = vmatprep.subr.bf16.mxu0 0
        %1527 = vmatpush1.bf16.xpose.msra.mxu0 0
        %1528 = vmatprep.subr.bf16.mxu0 0
        %1529 = vmatpush1.bf16.xpose.msra.mxu0 0
        %1530 = vmatprep.subr.bf16.mxu0 0
        %1531 = vmatpush1.bf16.xpose.msra.mxu0 0
        %1532 = vmatprep.subr.bf16.mxu0 0
        %1533 = vmatpush1.bf16.xpose.msra.mxu0 0
        %1534 = vmatprep.subr.bf16.mxu0 0
        %1535 = vmatpush1.bf16.xpose.msra.mxu0 0
        %1536 = vmatprep.subr.bf16.mxu0 0
        %1537 = vmatpush1.bf16.xpose.msra.mxu0 0
        %1538 = vmatprep.subr.bf16.mxu0 0
        %1539 = vmatpush1.bf16.xpose.msra.mxu0 0
        %1540 = vmatprep.mubr.bf16.mxu0 0
        %1541 = vmatmul.mubr.bf16.gmra.mrb[0].mxu0 %v1503
        %v1542 = vpop.f32.mrb[0].mxu0
        %v1543 = vadd.f32 0.0, %v1542
        %v1544 = vpop.f32.mrb[0].mxu0
        %v1545 = vpop.f32.mrb[0].mxu0
        %v1546 = vadd.f32 0.0, %v1545
        %v1547 = vpop.f32.mrb[0].mxu0
        %1548 = vdwg.mxu0
        %v1549 = vmul.f32 %v1543, 0.35355338
        %v1550 = vmul.f32 %v1546, 0.35355338
        %v1551 = vsel %vm1181, %v1549, -inf
        %1552 = vmax.xlane.f32.xlu0 %v1551
        %v1553 = vpop.xlane.xlu0 %1552
        %v1554 = vsel %vm1181, %v1550, -inf
        %1555 = vmax.xlane.f32.xlu0 %v1554
        %v1556 = vpop.xlane.xlu0 %1555
        %v1557 = vsub.f32 %v1549, %v1553
        %v1558 = vsub.f32 %v1550, %v1556
        %v1559 = vmul.f32 %v1557, 1.442695
        %v1560 = vpow.pop %v1559
        %v1561 = vmul.f32 %v1558, 1.442695
        %v1562 = vpow.pop %v1561
        %v1563 = vsel %vm1181, %v1560, 0.0
        %1564 = vadd.xlane.f32.xlu0 %v1563
        %v1565 = vpop.xlane.xlu0 %1564
        %v1566 = vsel %vm1181, %v1562, 0.0
        %1567 = vadd.xlane.f32.xlu0 %v1566
        %v1568 = vpop.xlane.xlu0 %1567
        %v1569 = vrcp.pop %v1565
        %v1570 = vrcp.pop %v1568
        %v1571 = vmul.f32 %v1560, %v1569
        %v1572 = vmul.f32 %v1562, %v1570
        %v1573 = vpack.c.bf16 %v1572, %v1571
        %1574 = vrot.lane.b32.xlu0 %v1127, 40
        %v1575 = vpop.permute.xlu0 %1574
        %v1578 = vsel %vm1181, %v1573, 0
        %1580 = vmatprep.subr.bf16.mxu0 0
        %1581 = vmatpush1.bf16.msra.mxu0 %v1575
        %1582 = vmatprep.subr.bf16.mxu0 0
        %1583 = vmatpush1.bf16.msra.mxu0 0
        %1584 = vmatprep.subr.bf16.mxu0 0
        %1585 = vmatpush1.bf16.msra.mxu0 0
        %1586 = vmatprep.subr.bf16.mxu0 0
        %1587 = vmatpush1.bf16.msra.mxu0 0
        %1588 = vmatprep.subr.bf16.mxu0 0
        %1589 = vmatpush1.bf16.msra.mxu0 0
        %1590 = vmatprep.subr.bf16.mxu0 0
        %1591 = vmatpush1.bf16.msra.mxu0 0
        %1592 = vmatprep.subr.bf16.mxu0 0
        %1593 = vmatpush1.bf16.msra.mxu0 0
        %1594 = vmatprep.subr.bf16.mxu0 0
        %1595 = vmatpush1.bf16.msra.mxu0 0
        %1596 = vmatprep.subr.bf16.mxu0 0
        %1597 = vmatpush1.bf16.msra.mxu0 0
        %1598 = vmatprep.subr.bf16.mxu0 0
        %1599 = vmatpush1.bf16.msra.mxu0 0
        %1600 = vmatprep.subr.bf16.mxu0 0
        %1601 = vmatpush1.bf16.msra.mxu0 0
        %1602 = vmatprep.subr.bf16.mxu0 0
        %1603 = vmatpush1.bf16.msra.mxu0 0
        %1604 = vmatprep.subr.bf16.mxu0 0
        %1605 = vmatpush1.bf16.msra.mxu0 0
        %1606 = vmatprep.subr.bf16.mxu0 0
        %1607 = vmatpush1.bf16.msra.mxu0 0
        %1608 = vmatprep.subr.bf16.mxu0 0
        %1609 = vmatpush1.bf16.msra.mxu0 0
        %1610 = vmatprep.subr.bf16.mxu0 0
        %1611 = vmatpush1.bf16.msra.mxu0 0
        %1612 = vmatprep.mubr.bf16.mxu0 0
        %1613 = vmatmul.mubr.bf16.gmra.mrb[0].mxu0 %v1578
        %v1614 = vpop.f32.mrb[0].mxu0
        %v1615 = vadd.f32 0.0, %v1614
        %v1616 = vpop.f32.mrb[0].mxu0
        %v1617 = vpop.f32.mrb[0].mxu0
        %v1618 = vadd.f32 0.0, %v1617
        %v1619 = vpop.f32.mrb[0].mxu0
        %1620 = vdwg.mxu0
        %1623 = vrot.lane.b32.xlu0 %v1369, 8
        %v1624 = vpop.permute.xlu0 %1623
        %1625 = vrot.lane.b32.xlu0 %v1372, 8
        %v1626 = vpop.permute.xlu0 %1625
        %1631 = vrot.lane.b32.xlu0 %v1492, 16
        %v1632 = vpop.permute.xlu0 %1631
        %1633 = vrot.lane.b32.xlu0 %v1495, 16
        %v1634 = vpop.permute.xlu0 %1633
        %1639 = vrot.lane.b32.xlu0 %v1615, 24
        %v1640 = vpop.permute.xlu0 %1639
        %1641 = vrot.lane.b32.xlu0 %v1618, 24
        %v1642 = vpop.permute.xlu0 %1641
        %v1645 = vsel %vm1131, %v1246, %v1624
        %v1646 = vsel %vm1131, %v1249, %v1626
        %v1647 = vsel %vm1181, %v1645, %v1632
        %v1648 = vsel %vm1181, %v1646, %v1634
        %vm1649 = vcmask 195584
        %v1650 = vsel %vm1649, %v1647, %v1640
        %v1651 = vsel %vm1649, %v1648, %v1642
        %v1652 = vld [vmem:[%s9] sm:$0xf]
        %v1653 = vld [vmem:[%s9 + $0x4] sm:$0xf]
        %v1654 = vld [vmem:[%s9 + $0x8] sm:$0xf]
        %v1655 = vld [vmem:[%s9 + $0xc] sm:$0xf]
        %v1656 = vld [vmem:[%s10] sm:$0x1]
        %v1657 = vpack.c.bf16 %v1651, %v1650
        %v1659 = vlaneseq
        %v1660 = vshrl.u32 %v1659, 7
        %v1661 = vsub.s32 0, %v1660
        %v1662 = vrot.slane %v1656, %v1661
        %v1668 = vunpack.c.l.b16 %v1652
        %v1669 = vunpack.c.l.b16 %v1653
        %v1670 = vunpack.c.l.b16 %v1654
        %v1671 = vunpack.c.l.b16 %v1655
        %v1672 = vpack.c.b16 %v1669, %v1668
        %v1673 = vpack.c.b16 %v1671, %v1670
        %v1677 = vsel %vm821, %v1657, 0
        %1679 = vmatprep.subr.bf16.mxu0 0
        %1680 = vmatpush1.bf16.msra.mxu0 %v1672
        %1681 = vmatprep.subr.bf16.mxu0 0
        %1682 = vmatpush1.bf16.msra.mxu0 %v1673
        %1683 = vmatprep.subr.bf16.mxu0 0
        %1684 = vmatpush1.bf16.msra.mxu0 0
        %1685 = vmatprep.subr.bf16.mxu0 0
        %1686 = vmatpush1.bf16.msra.mxu0 0
        %1687 = vmatprep.subr.bf16.mxu0 0
        %1688 = vmatpush1.bf16.msra.mxu0 0
        %1689 = vmatprep.subr.bf16.mxu0 0
        %1690 = vmatpush1.bf16.msra.mxu0 0
        %1691 = vmatprep.subr.bf16.mxu0 0
        %1692 = vmatpush1.bf16.msra.mxu0 0
        %1693 = vmatprep.subr.bf16.mxu0 0
        %1694 = vmatpush1.bf16.msra.mxu0 0
        %1695 = vmatprep.subr.bf16.mxu0 0
        %1696 = vmatpush1.bf16.msra.mxu0 0
        %1697 = vmatprep.subr.bf16.mxu0 0
        %1698 = vmatpush1.bf16.msra.mxu0 0
        %1699 = vmatprep.subr.bf16.mxu0 0
        %1700 = vmatpush1.bf16.msra.mxu0 0
        %1701 = vmatprep.subr.bf16.mxu0 0
        %1702 = vmatpush1.bf16.msra.mxu0 0
        %1703 = vmatprep.subr.bf16.mxu0 0
        %1704 = vmatpush1.bf16.msra.mxu0 0
        %1705 = vmatprep.subr.bf16.mxu0 0
        %1706 = vmatpush1.bf16.msra.mxu0 0
        %1707 = vmatprep.subr.bf16.mxu0 0
        %1708 = vmatpush1.bf16.msra.mxu0 0
        %1709 = vmatprep.subr.bf16.mxu0 0
        %1710 = vmatpush1.bf16.msra.mxu0 0
        %1711 = vmatprep.mubr.bf16.mxu0 0
        %1712 = vmatmul.mubr.bf16.gmra.mrb[0].mxu0 %v1677
        %v1713 = vpop.f32.mrb[0].mxu0
        %v1714 = vadd.f32 %v1662, %v1713
        %v1715 = vpop.f32.mrb[0].mxu0
        %v1716 = vpop.f32.mrb[0].mxu0
        %v1717 = vadd.f32 %v1662, %v1716
        %v1718 = vpop.f32.mrb[0].mxu0
        %1719 = vdwg.mxu0
        %v1720 = vadd.f32 %v1012, %v1714
        %v1721 = vadd.f32 %v1013, %v1717
        %v1722 = vld [vmem:[%s11] sm:$0x1]
        %v1723 = vld [vmem:[%s12] sm:$0x1]
        %v1724 = vsel %vm821, %v1720, 0.0
        %1725 = vadd.xlane.f32.xlu0 %v1724
        %v1726 = vpop.xlane.xlu0 %1725
        %v1727 = vsel %vm821, %v1721, 0.0
        %1728 = vadd.xlane.f32.xlu0 %v1727
        %v1729 = vpop.xlane.xlu0 %1728
        %v1730 = vmul.f32 %v1726, %v1022
        %v1731 = vmul.f32 %v1729, %v1022
        %v1732 = vsub.f32 %v1720, %v1730
        %v1733 = vsub.f32 %v1721, %v1731
        %v1734 = vmul.f32 %v1732, %v1732
        %v1735 = vmul.f32 %v1733, %v1733
        %v1736 = vsel %vm821, %v1734, 0.0
        %1737 = vadd.xlane.f32.xlu0 %v1736
        %v1738 = vpop.xlane.xlu0 %1737
        %v1739 = vsel %vm821, %v1735, 0.0
        %1740 = vadd.xlane.f32.xlu0 %v1739
        %v1741 = vpop.xlane.xlu0 %1740
        %v1742 = vmul.f32 %v1738, %v1022
        %v1743 = vmul.f32 %v1741, %v1022
        %v1744 = vadd.f32 %v1742, 1e-05
        %v1745 = vadd.f32 %v1743, 1e-05
        %v1746 = vrsqrt.pop %v1744
        %v1747 = vrsqrt.pop %v1745
        %v1748 = vmul.f32 %v1732, %v1746
        %v1749 = vmul.f32 %v1733, %v1747
        %v1751 = vlaneseq
        %v1752 = vshrl.u32 %v1751, 7
        %v1753 = vsub.s32 0, %v1752
        %v1754 = vrot.slane %v1722, %v1753
        %v1756 = vmul.f32 %v1748, %v1754
        %v1757 = vmul.f32 %v1749, %v1754
        %v1759 = vlaneseq
        %v1760 = vshrl.u32 %v1759, 7
        %v1761 = vsub.s32 0, %v1760
        %v1762 = vrot.slane %v1723, %v1761
        %v1764 = vadd.f32 %v1756, %v1762
        %v1765 = vadd.f32 %v1757, %v1762
        %v1766 = vld [vmem:[%s13] sm:$0xf]
        %v1767 = vld [vmem:[%s13 + $0x4] sm:$0xf]
        %v1768 = vld [vmem:[%s13 + $0x8] sm:$0xf]
        %v1769 = vld [vmem:[%s13 + $0xc] sm:$0xf]
        %v1770 = vld [vmem:[%s14] sm:$0x1]
        %v1771 = vpack.c.bf16 %v1765, %v1764
        %v1773 = vlaneseq
        %v1774 = vshrl.u32 %v1773, 7
        %v1775 = vsub.s32 0, %v1774
        %v1776 = vrot.slane %v1770, %v1775
        %v1782 = vunpack.c.l.b16 %v1766
        %v1783 = vunpack.c.l.b16 %v1767
        %v1784 = vunpack.c.l.b16 %v1768
        %v1785 = vunpack.c.l.b16 %v1769
        %v1786 = vpack.c.b16 %v1783, %v1782
        %v1787 = vpack.c.b16 %v1785, %v1784
        %v1791 = vsel %vm821, %v1771, 0
        %1793 = vmatprep.subr.bf16.mxu0 0
        %1794 = vmatpush1.bf16.msra.mxu0 %v1786
        %1795 = vmatprep.subr.bf16.mxu0 0
        %1796 = vmatpush1.bf16.msra.mxu0 %v1787
        %1797 = vmatprep.subr.bf16.mxu0 0
        %1798 = vmatpush1.bf16.msra.mxu0 0
        %1799 = vmatprep.subr.bf16.mxu0 0
        %1800 = vmatpush1.bf16.msra.mxu0 0
        %1801 = vmatprep.subr.bf16.mxu0 0
        %1802 = vmatpush1.bf16.msra.mxu0 0
        %1803 = vmatprep.subr.bf16.mxu0 0
        %1804 = vmatpush1.bf16.msra.mxu0 0
        %1805 = vmatprep.subr.bf16.mxu0 0
        %1806 = vmatpush1.bf16.msra.mxu0 0
        %1807 = vmatprep.subr.bf16.mxu0 0
        %1808 = vmatpush1.bf16.msra.mxu0 0
        %1809 = vmatprep.subr.bf16.mxu0 0
        %1810 = vmatpush1.bf16.msra.mxu0 0
        %1811 = vmatprep.subr.bf16.mxu0 0
        %1812 = vmatpush1.bf16.msra.mxu0 0
        %1813 = vmatprep.subr.bf16.mxu0 0
        %1814 = vmatpush1.bf16.msra.mxu0 0
        %1815 = vmatprep.subr.bf16.mxu0 0
        %1816 = vmatpush1.bf16.msra.mxu0 0
        %1817 = vmatprep.subr.bf16.mxu0 0
        %1818 = vmatpush1.bf16.msra.mxu0 0
        %1819 = vmatprep.subr.bf16.mxu0 0
        %1820 = vmatpush1.bf16.msra.mxu0 0
        %1821 = vmatprep.subr.bf16.mxu0 0
        %1822 = vmatpush1.bf16.msra.mxu0 0
        %1823 = vmatprep.subr.bf16.mxu0 0
        %1824 = vmatpush1.bf16.msra.mxu0 0
        %1825 = vmatprep.mubr.bf16.mxu0 0
        %1826 = vmatmul.mubr.bf16.gmra.mrb[0].mxu0 %v1791
        %v1827 = vpop.f32.mrb[0].mxu0
        %v1828 = vadd.f32 %v1776, %v1827
        %v1829 = vpop.f32.mrb[0].mxu0
        %v1830 = vpop.f32.mrb[0].mxu0
        %v1831 = vadd.f32 %v1776, %v1830
        %v1832 = vpop.f32.mrb[0].mxu0
        %1833 = vdwg.mxu0
        %v1834 = vmul.f32 %v1828, 0.5
        %v1835 = vmul.f32 %v1831, 0.5
        %v1836 = vmul.f32 %v1828, 0.70710677
        %v1837 = vmul.f32 %v1831, 0.70710677
        %v1838 = verf.f32.pop %v1836
        %v1839 = verf.f32.pop %v1837
        %v1840 = vadd.f32 %v1838, 1.0
        %v1841 = vadd.f32 %v1839, 1.0
        %v1842 = vmul.f32 %v1834, %v1840
        %v1843 = vmul.f32 %v1835, %v1841
        %v1844 = vld [vmem:[%s15] sm:$0xf]
        %v1845 = vld [vmem:[%s15 + $0x4] sm:$0xf]
        %v1846 = vld [vmem:[%s15 + $0x8] sm:$0xf]
        %v1847 = vld [vmem:[%s15 + $0xc] sm:$0xf]
        %v1848 = vld [vmem:[%s15 + $0x10] sm:$0xf]
        %v1849 = vld [vmem:[%s15 + $0x14] sm:$0xf]
        %v1850 = vld [vmem:[%s15 + $0x18] sm:$0xf]
        %v1851 = vld [vmem:[%s15 + $0x1c] sm:$0xf]
        %v1852 = vld [vmem:[%s16] sm:$0x1]
        %v1853 = vpack.c.bf16 %v1843, %v1842
        %v1855 = vlaneseq
        %v1856 = vshrl.u32 %v1855, 7
        %v1857 = vsub.s32 0, %v1856
        %v1858 = vrot.slane %v1852, %v1857
        %v1868 = vunpack.c.l.b16 %v1844
        %v1869 = vunpack.c.l.b16 %v1845
        %v1870 = vunpack.c.l.b16 %v1846
        %v1871 = vunpack.c.l.b16 %v1847
        %v1872 = vunpack.c.l.b16 %v1848
        %v1873 = vunpack.c.l.b16 %v1849
        %v1874 = vunpack.c.l.b16 %v1850
        %v1875 = vunpack.c.l.b16 %v1851
        %v1876 = vpack.c.b16 %v1869, %v1868
        %v1877 = vpack.c.b16 %v1871, %v1870
        %v1878 = vpack.c.b16 %v1873, %v1872
        %v1879 = vpack.c.b16 %v1875, %v1874
        %v1885 = vsel %vm824, %v1853, 0
        %1887 = vmatprep.subr.bf16.mxu0 0
        %1888 = vmatpush1.bf16.msra.mxu0 %v1876
        %1889 = vmatprep.subr.bf16.mxu0 0
        %1890 = vmatpush1.bf16.msra.mxu0 %v1877
        %1891 = vmatprep.subr.bf16.mxu0 0
        %1892 = vmatpush1.bf16.msra.mxu0 %v1878
        %1893 = vmatprep.subr.bf16.mxu0 0
        %1894 = vmatpush1.bf16.msra.mxu0 %v1879
        %1895 = vmatprep.subr.bf16.mxu0 0
        %1896 = vmatpush1.bf16.msra.mxu0 0
        %1897 = vmatprep.subr.bf16.mxu0 0
        %1898 = vmatpush1.bf16.msra.mxu0 0
        %1899 = vmatprep.subr.bf16.mxu0 0
        %1900 = vmatpush1.bf16.msra.mxu0 0
        %1901 = vmatprep.subr.bf16.mxu0 0
        %1902 = vmatpush1.bf16.msra.mxu0 0
        %1903 = vmatprep.subr.bf16.mxu0 0
        %1904 = vmatpush1.bf16.msra.mxu0 0
        %1905 = vmatprep.subr.bf16.mxu0 0
        %1906 = vmatpush1.bf16.msra.mxu0 0
        %1907 = vmatprep.subr.bf16.mxu0 0
        %1908 = vmatpush1.bf16.msra.mxu0 0
        %1909 = vmatprep.subr.bf16.mxu0 0
        %1910 = vmatpush1.bf16.msra.mxu0 0
        %1911 = vmatprep.subr.bf16.mxu0 0
        %1912 = vmatpush1.bf16.msra.mxu0 0
        %1913 = vmatprep.subr.bf16.mxu0 0
        %1914 = vmatpush1.bf16.msra.mxu0 0
        %1915 = vmatprep.subr.bf16.mxu0 0
        %1916 = vmatpush1.bf16.msra.mxu0 0
        %1917 = vmatprep.subr.bf16.mxu0 0
        %1918 = vmatpush1.bf16.msra.mxu0 0
        %1919 = vmatprep.mubr.bf16.mxu0 0
        %1920 = vmatmul.mubr.bf16.gmra.mrb[0].mxu0 %v1885
        %v1921 = vpop.f32.mrb[0].mxu0
        %v1922 = vadd.f32 %v1858, %v1921
        %v1923 = vpop.f32.mrb[0].mxu0
        %v1924 = vpop.f32.mrb[0].mxu0
        %v1925 = vadd.f32 %v1858, %v1924
        %v1926 = vpop.f32.mrb[0].mxu0
        %1927 = vdwg.mxu0
        %v1928 = vadd.f32 %v1720, %v1922
        %v1929 = vadd.f32 %v1721, %v1925
        %s1930 = scalar_lea.vmem %s5, 1
        %v1931 = vld [vmem:[%s1930] sm:$0x1]
        %s1932 = scalar_lea.vmem %s6, 1
        %v1933 = vld [vmem:[%s1932] sm:$0x1]
        %v1934 = vsel %vm821, %v1928, 0.0
        %1935 = vadd.xlane.f32.xlu0 %v1934
        %v1936 = vpop.xlane.xlu0 %1935
        %v1937 = vsel %vm821, %v1929, 0.0
        %1938 = vadd.xlane.f32.xlu0 %v1937
        %v1939 = vpop.xlane.xlu0 %1938
        %v1940 = vmul.f32 %v1936, %v1022
        %v1941 = vmul.f32 %v1939, %v1022
        %v1942 = vsub.f32 %v1928, %v1940
        %v1943 = vsub.f32 %v1929, %v1941
        %v1944 = vmul.f32 %v1942, %v1942
        %v1945 = vmul.f32 %v1943, %v1943
        %v1946 = vsel %vm821, %v1944, 0.0
        %1947 = vadd.xlane.f32.xlu0 %v1946
        %v1948 = vpop.xlane.xlu0 %1947
        %v1949 = vsel %vm821, %v1945, 0.0
        %1950 = vadd.xlane.f32.xlu0 %v1949
        %v1951 = vpop.xlane.xlu0 %1950
        %v1952 = vmul.f32 %v1948, %v1022
        %v1953 = vmul.f32 %v1951, %v1022
        %v1954 = vadd.f32 %v1952, 1e-05
        %v1955 = vadd.f32 %v1953, 1e-05
        %v1956 = vrsqrt.pop %v1954
        %v1957 = vrsqrt.pop %v1955
        %v1958 = vmul.f32 %v1942, %v1956
        %v1959 = vmul.f32 %v1943, %v1957
        %v1961 = vlaneseq
        %v1962 = vshrl.u32 %v1961, 7
        %v1963 = vsub.s32 0, %v1962
        %v1964 = vrot.slane %v1931, %v1963
        %v1966 = vmul.f32 %v1958, %v1964
        %v1967 = vmul.f32 %v1959, %v1964
        %v1969 = vlaneseq
        %v1970 = vshrl.u32 %v1969, 7
        %v1971 = vsub.s32 0, %v1970
        %v1972 = vrot.slane %v1933, %v1971
        %v1974 = vadd.f32 %v1966, %v1972
        %v1975 = vadd.f32 %v1967, %v1972
        %s1976 = scalar_lea.vmem %s7, 16
        %v1977 = vld [vmem:[%s1976] sm:$0xf]
        %v1978 = vld [vmem:[%s1976 + $0x4] sm:$0xf]
        %v1979 = vld [vmem:[%s1976 + $0x8] sm:$0xf]
        %v1980 = vld [vmem:[%s1976 + $0xc] sm:$0xf]
        %s1981 = scalar_lea.vmem %s8, 1
        %v1982 = vld [vmem:[%s1981] sm:$0x1]
        %v1983 = vpack.c.bf16 %v1975, %v1974
        %v1985 = vlaneseq
        %v1986 = vshrl.u32 %v1985, 7
        %v1987 = vsub.s32 0, %v1986
        %v1988 = vrot.slane %v1982, %v1987
        %v1994 = vunpack.c.l.b16 %v1977
        %v1995 = vunpack.c.l.b16 %v1978
        %v1996 = vunpack.c.l.b16 %v1979
        %v1997 = vunpack.c.l.b16 %v1980
        %v1998 = vpack.c.b16 %v1995, %v1994
        %v1999 = vpack.c.b16 %v1997, %v1996
        %v2003 = vsel %vm821, %v1983, 0
        %2005 = vmatprep.subr.bf16.mxu0 0
        %2006 = vmatpush1.bf16.msra.mxu0 %v1998
        %2007 = vmatprep.subr.bf16.mxu0 0
        %2008 = vmatpush1.bf16.msra.mxu0 %v1999
        %2009 = vmatprep.subr.bf16.mxu0 0
        %2010 = vmatpush1.bf16.msra.mxu0 0
        %2011 = vmatprep.subr.bf16.mxu0 0
        %2012 = vmatpush1.bf16.msra.mxu0 0
        %2013 = vmatprep.subr.bf16.mxu0 0
        %2014 = vmatpush1.bf16.msra.mxu0 0
        %2015 = vmatprep.subr.bf16.mxu0 0
        %2016 = vmatpush1.bf16.msra.mxu0 0
        %2017 = vmatprep.subr.bf16.mxu0 0
        %2018 = vmatpush1.bf16.msra.mxu0 0
        %2019 = vmatprep.subr.bf16.mxu0 0
        %2020 = vmatpush1.bf16.msra.mxu0 0
        %2021 = vmatprep.subr.bf16.mxu0 0
        %2022 = vmatpush1.bf16.msra.mxu0 0
        %2023 = vmatprep.subr.bf16.mxu0 0
        %2024 = vmatpush1.bf16.msra.mxu0 0
        %2025 = vmatprep.subr.bf16.mxu0 0
        %2026 = vmatpush1.bf16.msra.mxu0 0
        %2027 = vmatprep.subr.bf16.mxu0 0
        %2028 = vmatpush1.bf16.msra.mxu0 0
        %2029 = vmatprep.subr.bf16.mxu0 0
        %2030 = vmatpush1.bf16.msra.mxu0 0
        %2031 = vmatprep.subr.bf16.mxu0 0
        %2032 = vmatpush1.bf16.msra.mxu0 0
        %2033 = vmatprep.subr.bf16.mxu0 0
        %2034 = vmatpush1.bf16.msra.mxu0 0
        %2035 = vmatprep.subr.bf16.mxu0 0
        %2036 = vmatpush1.bf16.msra.mxu0 0
        %2037 = vmatprep.mubr.bf16.mxu0 0
        %2038 = vmatmul.mubr.bf16.gmra.mrb[0].mxu0 %v2003
        %v2039 = vpop.f32.mrb[0].mxu0
        %v2040 = vadd.f32 %v1988, %v2039
        %v2041 = vpop.f32.mrb[0].mxu0
        %v2042 = vpop.f32.mrb[0].mxu0
        %v2043 = vadd.f32 %v1988, %v2042
        %v2044 = vpop.f32.mrb[0].mxu0
        %2045 = vdwg.mxu0
        %v2046 = vpack.c.bf16 %v2043, %v2040
        %2048 = vrot.lane.b32.xlu0 %v2046, 96
        %v2049 = vpop.permute.xlu0 %2048
        %v2051 = vsel %vm1131, %v2046, 0
        %v2054 = vsel %vm1131, %v2049, 0
        %2056 = vmatprep.subr.bf16.mxu0 0
        %2057 = vmatpush1.bf16.xpose.msra.mxu0 %v2054
        %2058 = vmatprep.subr.bf16.mxu0 0
        %2059 = vmatpush1.bf16.xpose.msra.mxu0 0
        %2060 = vmatprep.subr.bf16.mxu0 0
        %2061 = vmatpush1.bf16.xpose.msra.mxu0 0
        %2062 = vmatprep.subr.bf16.mxu0 0
        %2063 = vmatpush1.bf16.xpose.msra.mxu0 0
        %2064 = vmatprep.subr.bf16.mxu0 0
        %2065 = vmatpush1.bf16.xpose.msra.mxu0 0
        %2066 = vmatprep.subr.bf16.mxu0 0
        %2067 = vmatpush1.bf16.xpose.msra.mxu0 0
        %2068 = vmatprep.subr.bf16.mxu0 0
        %2069 = vmatpush1.bf16.xpose.msra.mxu0 0
        %2070 = vmatprep.subr.bf16.mxu0 0
        %2071 = vmatpush1.bf16.xpose.msra.mxu0 0
        %2072 = vmatprep.subr.bf16.mxu0 0
        %2073 = vmatpush1.bf16.xpose.msra.mxu0 0
        %2074 = vmatprep.subr.bf16.mxu0 0
        %2075 = vmatpush1.bf16.xpose.msra.mxu0 0
        %2076 = vmatprep.subr.bf16.mxu0 0
        %2077 = vmatpush1.bf16.xpose.msra.mxu0 0
        %2078 = vmatprep.subr.bf16.mxu0 0
        %2079 = vmatpush1.bf16.xpose.msra.mxu0 0
        %2080 = vmatprep.subr.bf16.mxu0 0
        %2081 = vmatpush1.bf16.xpose.msra.mxu0 0
        %2082 = vmatprep.subr.bf16.mxu0 0
        %2083 = vmatpush1.bf16.xpose.msra.mxu0 0
        %2084 = vmatprep.subr.bf16.mxu0 0
        %2085 = vmatpush1.bf16.xpose.msra.mxu0 0
        %2086 = vmatprep.subr.bf16.mxu0 0
        %2087 = vmatpush1.bf16.xpose.msra.mxu0 0
        %2088 = vmatprep.mubr.bf16.mxu0 0
        %2089 = vmatmul.mubr.bf16.gmra.mrb[0].mxu0 %v2051
        %v2090 = vpop.f32.mrb[0].mxu0
        %v2091 = vadd.f32 0.0, %v2090
        %v2092 = vpop.f32.mrb[0].mxu0
        %v2093 = vpop.f32.mrb[0].mxu0
        %v2094 = vadd.f32 0.0, %v2093
        %v2095 = vpop.f32.mrb[0].mxu0
        %2096 = vdwg.mxu0
        %v2097 = vmul.f32 %v2091, 0.35355338
        %v2098 = vmul.f32 %v2094, 0.35355338
        %v2099 = vsel %vm1181, %v2097, -inf
        %2100 = vmax.xlane.f32.xlu0 %v2099
        %v2101 = vpop.xlane.xlu0 %2100
        %v2102 = vsel %vm1181, %v2098, -inf
        %2103 = vmax.xlane.f32.xlu0 %v2102
        %v2104 = vpop.xlane.xlu0 %2103
        %v2105 = vsub.f32 %v2097, %v2101
        %v2106 = vsub.f32 %v2098, %v2104
        %v2107 = vmul.f32 %v2105, 1.442695
        %v2108 = vpow.pop %v2107
        %v2109 = vmul.f32 %v2106, 1.442695
        %v2110 = vpow.pop %v2109
        %v2111 = vsel %vm1181, %v2108, 0.0
        %2112 = vadd.xlane.f32.xlu0 %v2111
        %v2113 = vpop.xlane.xlu0 %2112
        %v2114 = vsel %vm1181, %v2110, 0.0
        %2115 = vadd.xlane.f32.xlu0 %v2114
        %v2116 = vpop.xlane.xlu0 %2115
        %v2117 = vrcp.pop %v2113
        %v2118 = vrcp.pop %v2116
        %v2119 = vmul.f32 %v2108, %v2117
        %v2120 = vmul.f32 %v2110, %v2118
        %v2121 = vpack.c.bf16 %v2120, %v2119
        %2122 = vrot.lane.b32.xlu0 %v2046, 64
        %v2123 = vpop.permute.xlu0 %2122
        %v2126 = vsel %vm1181, %v2121, 0
        %2128 = vmatprep.subr.bf16.mxu0 0
        %2129 = vmatpush1.bf16.msra.mxu0 %v2123
        %2130 = vmatprep.subr.bf16.mxu0 0
        %2131 = vmatpush1.bf16.msra.mxu0 0
        %2132 = vmatprep.subr.bf16.mxu0 0
        %2133 = vmatpush1.bf16.msra.mxu0 0
        %2134 = vmatprep.subr.bf16.mxu0 0
        %2135 = vmatpush1.bf16.msra.mxu0 0
        %2136 = vmatprep.subr.bf16.mxu0 0
        %2137 = vmatpush1.bf16.msra.mxu0 0
        %2138 = vmatprep.subr.bf16.mxu0 0
        %2139 = vmatpush1.bf16.msra.mxu0 0
        %2140 = vmatprep.subr.bf16.mxu0 0
        %2141 = vmatpush1.bf16.msra.mxu0 0
        %2142 = vmatprep.subr.bf16.mxu0 0
        %2143 = vmatpush1.bf16.msra.mxu0 0
        %2144 = vmatprep.subr.bf16.mxu0 0
        %2145 = vmatpush1.bf16.msra.mxu0 0
        %2146 = vmatprep.subr.bf16.mxu0 0
        %2147 = vmatpush1.bf16.msra.mxu0 0
        %2148 = vmatprep.subr.bf16.mxu0 0
        %2149 = vmatpush1.bf16.msra.mxu0 0
        %2150 = vmatprep.subr.bf16.mxu0 0
        %2151 = vmatpush1.bf16.msra.mxu0 0
        %2152 = vmatprep.subr.bf16.mxu0 0
        %2153 = vmatpush1.bf16.msra.mxu0 0
        %2154 = vmatprep.subr.bf16.mxu0 0
        %2155 = vmatpush1.bf16.msra.mxu0 0
        %2156 = vmatprep.subr.bf16.mxu0 0
        %2157 = vmatpush1.bf16.msra.mxu0 0
        %2158 = vmatprep.subr.bf16.mxu0 0
        %2159 = vmatpush1.bf16.msra.mxu0 0
        %2160 = vmatprep.mubr.bf16.mxu0 0
        %2161 = vmatmul.mubr.bf16.gmra.mrb[0].mxu0 %v2126
        %v2162 = vpop.f32.mrb[0].mxu0
        %v2163 = vadd.f32 0.0, %v2162
        %v2164 = vpop.f32.mrb[0].mxu0
        %v2165 = vpop.f32.mrb[0].mxu0
        %v2166 = vadd.f32 0.0, %v2165
        %v2167 = vpop.f32.mrb[0].mxu0
        %2168 = vdwg.mxu0
        %2169 = vrot.lane.b32.xlu0 %v2046, 120
        %v2170 = vpop.permute.xlu0 %2169
        %2171 = vrot.lane.b32.xlu0 %v2046, 88
        %v2172 = vpop.permute.xlu0 %2171
        %v2174 = vsel %vm1131, %v2170, 0
        %v2177 = vsel %vm1131, %v2172, 0
        %2179 = vmatprep.subr.bf16.mxu0 0
        %2180 = vmatpush1.bf16.xpose.msra.mxu0 %v2177
        %2181 = vmatprep.subr.bf16.mxu0 0
        %2182 = vmatpush1.bf16.xpose.msra.mxu0 0
        %2183 = vmatprep.subr.bf16.mxu0 0
        %2184 = vmatpush1.bf16.xpose.msra.mxu0 0
        %2185 = vmatprep.subr.bf16.mxu0 0
        %2186 = vmatpush1.bf16.xpose.msra.mxu0 0
        %2187 = vmatprep.subr.bf16.mxu0 0
        %2188 = vmatpush1.bf16.xpose.msra.mxu0 0
        %2189 = vmatprep.subr.bf16.mxu0 0
        %2190 = vmatpush1.bf16.xpose.msra.mxu0 0
        %2191 = vmatprep.subr.bf16.mxu0 0
        %2192 = vmatpush1.bf16.xpose.msra.mxu0 0
        %2193 = vmatprep.subr.bf16.mxu0 0
        %2194 = vmatpush1.bf16.xpose.msra.mxu0 0
        %2195 = vmatprep.subr.bf16.mxu0 0
        %2196 = vmatpush1.bf16.xpose.msra.mxu0 0
        %2197 = vmatprep.subr.bf16.mxu0 0
        %2198 = vmatpush1.bf16.xpose.msra.mxu0 0
        %2199 = vmatprep.subr.bf16.mxu0 0
        %2200 = vmatpush1.bf16.xpose.msra.mxu0 0
        %2201 = vmatprep.subr.bf16.mxu0 0
        %2202 = vmatpush1.bf16.xpose.msra.mxu0 0
        %2203 = vmatprep.subr.bf16.mxu0 0
        %2204 = vmatpush1.bf16.xpose.msra.mxu0 0
        %2205 = vmatprep.subr.bf16.mxu0 0
        %2206 = vmatpush1.bf16.xpose.msra.mxu0 0
        %2207 = vmatprep.subr.bf16.mxu0 0
        %2208 = vmatpush1.bf16.xpose.msra.mxu0 0
        %2209 = vmatprep.subr.bf16.mxu0 0
        %2210 = vmatpush1.bf16.xpose.msra.mxu0 0
        %2211 = vmatprep.mubr.bf16.mxu0 0
        %2212 = vmatmul.mubr.bf16.gmra.mrb[0].mxu0 %v2174
        %v2213 = vpop.f32.mrb[0].mxu0
        %v2214 = vadd.f32 0.0, %v2213
        %v2215 = vpop.f32.mrb[0].mxu0
        %v2216 = vpop.f32.mrb[0].mxu0
        %v2217 = vadd.f32 0.0, %v2216
        %v2218 = vpop.f32.mrb[0].mxu0
        %2219 = vdwg.mxu0
        %v2220 = vmul.f32 %v2214, 0.35355338
        %v2221 = vmul.f32 %v2217, 0.35355338
        %v2222 = vsel %vm1181, %v2220, -inf
        %2223 = vmax.xlane.f32.xlu0 %v2222
        %v2224 = vpop.xlane.xlu0 %2223
        %v2225 = vsel %vm1181, %v2221, -inf
        %2226 = vmax.xlane.f32.xlu0 %v2225
        %v2227 = vpop.xlane.xlu0 %2226
        %v2228 = vsub.f32 %v2220, %v2224
        %v2229 = vsub.f32 %v2221, %v2227
        %v2230 = vmul.f32 %v2228, 1.442695
        %v2231 = vpow.pop %v2230
        %v2232 = vmul.f32 %v2229, 1.442695
        %v2233 = vpow.pop %v2232
        %v2234 = vsel %vm1181, %v2231, 0.0
        %2235 = vadd.xlane.f32.xlu0 %v2234
        %v2236 = vpop.xlane.xlu0 %2235
        %v2237 = vsel %vm1181, %v2233, 0.0
        %2238 = vadd.xlane.f32.xlu0 %v2237
        %v2239 = vpop.xlane.xlu0 %2238
        %v2240 = vrcp.pop %v2236
        %v2241 = vrcp.pop %v2239
        %v2242 = vmul.f32 %v2231, %v2240
        %v2243 = vmul.f32 %v2233, %v2241
        %v2244 = vpack.c.bf16 %v2243, %v2242
        %2245 = vrot.lane.b32.xlu0 %v2046, 56
        %v2246 = vpop.permute.xlu0 %2245
        %v2249 = vsel %vm1181, %v2244, 0
        %2251 = vmatprep.subr.bf16.mxu0 0
        %2252 = vmatpush1.bf16.msra.mxu0 %v2246
        %2253 = vmatprep.subr.bf16.mxu0 0
        %2254 = vmatpush1.bf16.msra.mxu0 0
        %2255 = vmatprep.subr.bf16.mxu0 0
        %2256 = vmatpush1.bf16.msra.mxu0 0
        %2257 = vmatprep.subr.bf16.mxu0 0
        %2258 = vmatpush1.bf16.msra.mxu0 0
        %2259 = vmatprep.subr.bf16.mxu0 0
        %2260 = vmatpush1.bf16.msra.mxu0 0
        %2261 = vmatprep.subr.bf16.mxu0 0
        %2262 = vmatpush1.bf16.msra.mxu0 0
        %2263 = vmatprep.subr.bf16.mxu0 0
        %2264 = vmatpush1.bf16.msra.mxu0 0
        %2265 = vmatprep.subr.bf16.mxu0 0
        %2266 = vmatpush1.bf16.msra.mxu0 0
        %2267 = vmatprep.subr.bf16.mxu0 0
        %2268 = vmatpush1.bf16.msra.mxu0 0
        %2269 = vmatprep.subr.bf16.mxu0 0
        %2270 = vmatpush1.bf16.msra.mxu0 0
        %2271 = vmatprep.subr.bf16.mxu0 0
        %2272 = vmatpush1.bf16.msra.mxu0 0
        %2273 = vmatprep.subr.bf16.mxu0 0
        %2274 = vmatpush1.bf16.msra.mxu0 0
        %2275 = vmatprep.subr.bf16.mxu0 0
        %2276 = vmatpush1.bf16.msra.mxu0 0
        %2277 = vmatprep.subr.bf16.mxu0 0
        %2278 = vmatpush1.bf16.msra.mxu0 0
        %2279 = vmatprep.subr.bf16.mxu0 0
        %2280 = vmatpush1.bf16.msra.mxu0 0
        %2281 = vmatprep.subr.bf16.mxu0 0
        %2282 = vmatpush1.bf16.msra.mxu0 0
        %2283 = vmatprep.mubr.bf16.mxu0 0
        %2284 = vmatmul.mubr.bf16.gmra.mrb[0].mxu0 %v2249
        %v2285 = vpop.f32.mrb[0].mxu0
        %v2286 = vadd.f32 0.0, %v2285
        %v2287 = vpop.f32.mrb[0].mxu0
        %v2288 = vpop.f32.mrb[0].mxu0
        %v2289 = vadd.f32 0.0, %v2288
        %v2290 = vpop.f32.mrb[0].mxu0
        %2291 = vdwg.mxu0
        %2292 = vrot.lane.b32.xlu0 %v2046, 112
        %v2293 = vpop.permute.xlu0 %2292
        %2294 = vrot.lane.b32.xlu0 %v2046, 80
        %v2295 = vpop.permute.xlu0 %2294
        %v2297 = vsel %vm1131, %v2293, 0
        %v2300 = vsel %vm1131, %v2295, 0
        %2302 = vmatprep.subr.bf16.mxu0 0
        %2303 = vmatpush1.bf16.xpose.msra.mxu0 %v2300
        %2304 = vmatprep.subr.bf16.mxu0 0
        %2305 = vmatpush1.bf16.xpose.msra.mxu0 0
        %2306 = vmatprep.subr.bf16.mxu0 0
        %2307 = vmatpush1.bf16.xpose.msra.mxu0 0
        %2308 = vmatprep.subr.bf16.mxu0 0
        %2309 = vmatpush1.bf16.xpose.msra.mxu0 0
        %2310 = vmatprep.subr.bf16.mxu0 0
        %2311 = vmatpush1.bf16.xpose.msra.mxu0 0
        %2312 = vmatprep.subr.bf16.mxu0 0
        %2313 = vmatpush1.bf16.xpose.msra.mxu0 0
        %2314 = vmatprep.subr.bf16.mxu0 0
        %2315 = vmatpush1.bf16.xpose.msra.mxu0 0
        %2316 = vmatprep.subr.bf16.mxu0 0
        %2317 = vmatpush1.bf16.xpose.msra.mxu0 0
        %2318 = vmatprep.subr.bf16.mxu0 0
        %2319 = vmatpush1.bf16.xpose.msra.mxu0 0
        %2320 = vmatprep.subr.bf16.mxu0 0
        %2321 = vmatpush1.bf16.xpose.msra.mxu0 0
        %2322 = vmatprep.subr.bf16.mxu0 0
        %2323 = vmatpush1.bf16.xpose.msra.mxu0 0
        %2324 = vmatprep.subr.bf16.mxu0 0
        %2325 = vmatpush1.bf16.xpose.msra.mxu0 0
        %2326 = vmatprep.subr.bf16.mxu0 0
        %2327 = vmatpush1.bf16.xpose.msra.mxu0 0
        %2328 = vmatprep.subr.bf16.mxu0 0
        %2329 = vmatpush1.bf16.xpose.msra.mxu0 0
        %2330 = vmatprep.subr.bf16.mxu0 0
        %2331 = vmatpush1.bf16.xpose.msra.mxu0 0
        %2332 = vmatprep.subr.bf16.mxu0 0
        %2333 = vmatpush1.bf16.xpose.msra.mxu0 0
        %2334 = vmatprep.mubr.bf16.mxu0 0
        %2335 = vmatmul.mubr.bf16.gmra.mrb[0].mxu0 %v2297
        %v2336 = vpop.f32.mrb[0].mxu0
        %v2337 = vadd.f32 0.0, %v2336
        %v2338 = vpop.f32.mrb[0].mxu0
        %v2339 = vpop.f32.mrb[0].mxu0
        %v2340 = vadd.f32 0.0, %v2339
        %v2341 = vpop.f32.mrb[0].mxu0
        %2342 = vdwg.mxu0
        %v2343 = vmul.f32 %v2337, 0.35355338
        %v2344 = vmul.f32 %v2340, 0.35355338
        %v2345 = vsel %vm1181, %v2343, -inf
        %2346 = vmax.xlane.f32.xlu0 %v2345
        %v2347 = vpop.xlane.xlu0 %2346
        %v2348 = vsel %vm1181, %v2344, -inf
        %2349 = vmax.xlane.f32.xlu0 %v2348
        %v2350 = vpop.xlane.xlu0 %2349
        %v2351 = vsub.f32 %v2343, %v2347
        %v2352 = vsub.f32 %v2344, %v2350
        %v2353 = vmul.f32 %v2351, 1.442695
        %v2354 = vpow.pop %v2353
        %v2355 = vmul.f32 %v2352, 1.442695
        %v2356 = vpow.pop %v2355
        %v2357 = vsel %vm1181, %v2354, 0.0
        %2358 = vadd.xlane.f32.xlu0 %v2357
        %v2359 = vpop.xlane.xlu0 %2358
        %v2360 = vsel %vm1181, %v2356, 0.0
        %2361 = vadd.xlane.f32.xlu0 %v2360
        %v2362 = vpop.xlane.xlu0 %2361
        %v2363 = vrcp.pop %v2359
        %v2364 = vrcp.pop %v2362
        %v2365 = vmul.f32 %v2354, %v2363
        %v2366 = vmul.f32 %v2356, %v2364
        %v2367 = vpack.c.bf16 %v2366, %v2365
        %2368 = vrot.lane.b32.xlu0 %v2046, 48
        %v2369 = vpop.permute.xlu0 %2368
        %v2372 = vsel %vm1181, %v2367, 0
        %2374 = vmatprep.subr.bf16.mxu0 0
        %2375 = vmatpush1.bf16.msra.mxu0 %v2369
        %2376 = vmatprep.subr.bf16.mxu0 0
        %2377 = vmatpush1.bf16.msra.mxu0 0
        %2378 = vmatprep.subr.bf16.mxu0 0
        %2379 = vmatpush1.bf16.msra.mxu0 0
        %2380 = vmatprep.subr.bf16.mxu0 0
        %2381 = vmatpush1.bf16.msra.mxu0 0
        %2382 = vmatprep.subr.bf16.mxu0 0
        %2383 = vmatpush1.bf16.msra.mxu0 0
        %2384 = vmatprep.subr.bf16.mxu0 0
        %2385 = vmatpush1.bf16.msra.mxu0 0
        %2386 = vmatprep.subr.bf16.mxu0 0
        %2387 = vmatpush1.bf16.msra.mxu0 0
        %2388 = vmatprep.subr.bf16.mxu0 0
        %2389 = vmatpush1.bf16.msra.mxu0 0
        %2390 = vmatprep.subr.bf16.mxu0 0
        %2391 = vmatpush1.bf16.msra.mxu0 0
        %2392 = vmatprep.subr.bf16.mxu0 0
        %2393 = vmatpush1.bf16.msra.mxu0 0
        %2394 = vmatprep.subr.bf16.mxu0 0
        %2395 = vmatpush1.bf16.msra.mxu0 0
        %2396 = vmatprep.subr.bf16.mxu0 0
        %2397 = vmatpush1.bf16.msra.mxu0 0
        %2398 = vmatprep.subr.bf16.mxu0 0
        %2399 = vmatpush1.bf16.msra.mxu0 0
        %2400 = vmatprep.subr.bf16.mxu0 0
        %2401 = vmatpush1.bf16.msra.mxu0 0
        %2402 = vmatprep.subr.bf16.mxu0 0
        %2403 = vmatpush1.bf16.msra.mxu0 0
        %2404 = vmatprep.subr.bf16.mxu0 0
        %2405 = vmatpush1.bf16.msra.mxu0 0
        %2406 = vmatprep.mubr.bf16.mxu0 0
        %2407 = vmatmul.mubr.bf16.gmra.mrb[0].mxu0 %v2372
        %v2408 = vpop.f32.mrb[0].mxu0
        %v2409 = vadd.f32 0.0, %v2408
        %v2410 = vpop.f32.mrb[0].mxu0
        %v2411 = vpop.f32.mrb[0].mxu0
        %v2412 = vadd.f32 0.0, %v2411
        %v2413 = vpop.f32.mrb[0].mxu0
        %2414 = vdwg.mxu0
        %2415 = vrot.lane.b32.xlu0 %v2046, 104
        %v2416 = vpop.permute.xlu0 %2415
        %2417 = vrot.lane.b32.xlu0 %v2046, 72
        %v2418 = vpop.permute.xlu0 %2417
        %v2420 = vsel %vm1131, %v2416, 0
        %v2423 = vsel %vm1131, %v2418, 0
        %2425 = vmatprep.subr.bf16.mxu0 0
        %2426 = vmatpush1.bf16.xpose.msra.mxu0 %v2423
        %2427 = vmatprep.subr.bf16.mxu0 0
        %2428 = vmatpush1.bf16.xpose.msra.mxu0 0
        %2429 = vmatprep.subr.bf16.mxu0 0
        %2430 = vmatpush1.bf16.xpose.msra.mxu0 0
        %2431 = vmatprep.subr.bf16.mxu0 0
        %2432 = vmatpush1.bf16.xpose.msra.mxu0 0
        %2433 = vmatprep.subr.bf16.mxu0 0
        %2434 = vmatpush1.bf16.xpose.msra.mxu0 0
        %2435 = vmatprep.subr.bf16.mxu0 0
        %2436 = vmatpush1.bf16.xpose.msra.mxu0 0
        %2437 = vmatprep.subr.bf16.mxu0 0
        %2438 = vmatpush1.bf16.xpose.msra.mxu0 0
        %2439 = vmatprep.subr.bf16.mxu0 0
        %2440 = vmatpush1.bf16.xpose.msra.mxu0 0
        %2441 = vmatprep.subr.bf16.mxu0 0
        %2442 = vmatpush1.bf16.xpose.msra.mxu0 0
        %2443 = vmatprep.subr.bf16.mxu0 0
        %2444 = vmatpush1.bf16.xpose.msra.mxu0 0
        %2445 = vmatprep.subr.bf16.mxu0 0
        %2446 = vmatpush1.bf16.xpose.msra.mxu0 0
        %2447 = vmatprep.subr.bf16.mxu0 0
        %2448 = vmatpush1.bf16.xpose.msra.mxu0 0
        %2449 = vmatprep.subr.bf16.mxu0 0
        %2450 = vmatpush1.bf16.xpose.msra.mxu0 0
        %2451 = vmatprep.subr.bf16.mxu0 0
        %2452 = vmatpush1.bf16.xpose.msra.mxu0 0
        %2453 = vmatprep.subr.bf16.mxu0 0
        %2454 = vmatpush1.bf16.xpose.msra.mxu0 0
        %2455 = vmatprep.subr.bf16.mxu0 0
        %2456 = vmatpush1.bf16.xpose.msra.mxu0 0
        %2457 = vmatprep.mubr.bf16.mxu0 0
        %2458 = vmatmul.mubr.bf16.gmra.mrb[0].mxu0 %v2420
        %v2459 = vpop.f32.mrb[0].mxu0
        %v2460 = vadd.f32 0.0, %v2459
        %v2461 = vpop.f32.mrb[0].mxu0
        %v2462 = vpop.f32.mrb[0].mxu0
        %v2463 = vadd.f32 0.0, %v2462
        %v2464 = vpop.f32.mrb[0].mxu0
        %2465 = vdwg.mxu0
        %v2466 = vmul.f32 %v2460, 0.35355338
        %v2467 = vmul.f32 %v2463, 0.35355338
        %v2468 = vsel %vm1181, %v2466, -inf
        %2469 = vmax.xlane.f32.xlu0 %v2468
        %v2470 = vpop.xlane.xlu0 %2469
        %v2471 = vsel %vm1181, %v2467, -inf
        %2472 = vmax.xlane.f32.xlu0 %v2471
        %v2473 = vpop.xlane.xlu0 %2472
        %v2474 = vsub.f32 %v2466, %v2470
        %v2475 = vsub.f32 %v2467, %v2473
        %v2476 = vmul.f32 %v2474, 1.442695
        %v2477 = vpow.pop %v2476
        %v2478 = vmul.f32 %v2475, 1.442695
        %v2479 = vpow.pop %v2478
        %v2480 = vsel %vm1181, %v2477, 0.0
        %2481 = vadd.xlane.f32.xlu0 %v2480
        %v2482 = vpop.xlane.xlu0 %2481
        %v2483 = vsel %vm1181, %v2479, 0.0
        %2484 = vadd.xlane.f32.xlu0 %v2483
        %v2485 = vpop.xlane.xlu0 %2484
        %v2486 = vrcp.pop %v2482
        %v2487 = vrcp.pop %v2485
        %v2488 = vmul.f32 %v2477, %v2486
        %v2489 = vmul.f32 %v2479, %v2487
        %v2490 = vpack.c.bf16 %v2489, %v2488
        %2491 = vrot.lane.b32.xlu0 %v2046, 40
        %v2492 = vpop.permute.xlu0 %2491
        %v2495 = vsel %vm1181, %v2490, 0
        %2497 = vmatprep.subr.bf16.mxu0 0
        %2498 = vmatpush1.bf16.msra.mxu0 %v2492
        %2499 = vmatprep.subr.bf16.mxu0 0
        %2500 = vmatpush1.bf16.msra.mxu0 0
        %2501 = vmatprep.subr.bf16.mxu0 0
        %2502 = vmatpush1.bf16.msra.mxu0 0
        %2503 = vmatprep.subr.bf16.mxu0 0
        %2504 = vmatpush1.bf16.msra.mxu0 0
        %2505 = vmatprep.subr.bf16.mxu0 0
        %2506 = vmatpush1.bf16.msra.mxu0 0
        %2507 = vmatprep.subr.bf16.mxu0 0
        %2508 = vmatpush1.bf16.msra.mxu0 0
        %2509 = vmatprep.subr.bf16.mxu0 0
        %2510 = vmatpush1.bf16.msra.mxu0 0
        %2511 = vmatprep.subr.bf16.mxu0 0
        %2512 = vmatpush1.bf16.msra.mxu0 0
        %2513 = vmatprep.subr.bf16.mxu0 0
        %2514 = vmatpush1.bf16.msra.mxu0 0
        %2515 = vmatprep.subr.bf16.mxu0 0
        %2516 = vmatpush1.bf16.msra.mxu0 0
        %2517 = vmatprep.subr.bf16.mxu0 0
        %2518 = vmatpush1.bf16.msra.mxu0 0
        %2519 = vmatprep.subr.bf16.mxu0 0
        %2520 = vmatpush1.bf16.msra.mxu0 0
        %2521 = vmatprep.subr.bf16.mxu0 0
        %2522 = vmatpush1.bf16.msra.mxu0 0
        %2523 = vmatprep.subr.bf16.mxu0 0
        %2524 = vmatpush1.bf16.msra.mxu0 0
        %2525 = vmatprep.subr.bf16.mxu0 0
        %2526 = vmatpush1.bf16.msra.mxu0 0
        %2527 = vmatprep.subr.bf16.mxu0 0
        %2528 = vmatpush1.bf16.msra.mxu0 0
        %2529 = vmatprep.mubr.bf16.mxu0 0
        %2530 = vmatmul.mubr.bf16.gmra.mrb[0].mxu0 %v2495
        %v2531 = vpop.f32.mrb[0].mxu0
        %v2532 = vadd.f32 0.0, %v2531
        %v2533 = vpop.f32.mrb[0].mxu0
        %v2534 = vpop.f32.mrb[0].mxu0
        %v2535 = vadd.f32 0.0, %v2534
        %v2536 = vpop.f32.mrb[0].mxu0
        %2537 = vdwg.mxu0
        %2540 = vrot.lane.b32.xlu0 %v2286, 8
        %v2541 = vpop.permute.xlu0 %2540
        %2542 = vrot.lane.b32.xlu0 %v2289, 8
        %v2543 = vpop.permute.xlu0 %2542
        %2548 = vrot.lane.b32.xlu0 %v2409, 16
        %v2549 = vpop.permute.xlu0 %2548
        %2550 = vrot.lane.b32.xlu0 %v2412, 16
        %v2551 = vpop.permute.xlu0 %2550
        %2556 = vrot.lane.b32.xlu0 %v2532, 24
        %v2557 = vpop.permute.xlu0 %2556
        %2558 = vrot.lane.b32.xlu0 %v2535, 24
        %v2559 = vpop.permute.xlu0 %2558
        %v2562 = vsel %vm1131, %v2163, %v2541
        %v2563 = vsel %vm1131, %v2166, %v2543
        %v2564 = vsel %vm1181, %v2562, %v2549
        %v2565 = vsel %vm1181, %v2563, %v2551
        %v2566 = vsel %vm1649, %v2564, %v2557
        %v2567 = vsel %vm1649, %v2565, %v2559
        %s2568 = scalar_lea.vmem %s9, 16
        %v2569 = vld [vmem:[%s2568] sm:$0xf]
        %v2570 = vld [vmem:[%s2568 + $0x4] sm:$0xf]
        %v2571 = vld [vmem:[%s2568 + $0x8] sm:$0xf]
        %v2572 = vld [vmem:[%s2568 + $0xc] sm:$0xf]
        %s2573 = scalar_lea.vmem %s10, 1
        %v2574 = vld [vmem:[%s2573] sm:$0x1]
        %v2575 = vpack.c.bf16 %v2567, %v2566
        %v2577 = vlaneseq
        %v2578 = vshrl.u32 %v2577, 7
        %v2579 = vsub.s32 0, %v2578
        %v2580 = vrot.slane %v2574, %v2579
        %v2586 = vunpack.c.l.b16 %v2569
        %v2587 = vunpack.c.l.b16 %v2570
        %v2588 = vunpack.c.l.b16 %v2571
        %v2589 = vunpack.c.l.b16 %v2572
        %v2590 = vpack.c.b16 %v2587, %v2586
        %v2591 = vpack.c.b16 %v2589, %v2588
        %v2595 = vsel %vm821, %v2575, 0
        %2597 = vmatprep.subr.bf16.mxu0 0
        %2598 = vmatpush1.bf16.msra.mxu0 %v2590
        %2599 = vmatprep.subr.bf16.mxu0 0
        %2600 = vmatpush1.bf16.msra.mxu0 %v2591
        %2601 = vmatprep.subr.bf16.mxu0 0
        %2602 = vmatpush1.bf16.msra.mxu0 0
        %2603 = vmatprep.subr.bf16.mxu0 0
        %2604 = vmatpush1.bf16.msra.mxu0 0
        %2605 = vmatprep.subr.bf16.mxu0 0
        %2606 = vmatpush1.bf16.msra.mxu0 0
        %2607 = vmatprep.subr.bf16.mxu0 0
        %2608 = vmatpush1.bf16.msra.mxu0 0
        %2609 = vmatprep.subr.bf16.mxu0 0
        %2610 = vmatpush1.bf16.msra.mxu0 0
        %2611 = vmatprep.subr.bf16.mxu0 0
        %2612 = vmatpush1.bf16.msra.mxu0 0
        %2613 = vmatprep.subr.bf16.mxu0 0
        %2614 = vmatpush1.bf16.msra.mxu0 0
        %2615 = vmatprep.subr.bf16.mxu0 0
        %2616 = vmatpush1.bf16.msra.mxu0 0
        %2617 = vmatprep.subr.bf16.mxu0 0
        %2618 = vmatpush1.bf16.msra.mxu0 0
        %2619 = vmatprep.subr.bf16.mxu0 0
        %2620 = vmatpush1.bf16.msra.mxu0 0
        %2621 = vmatprep.subr.bf16.mxu0 0
        %2622 = vmatpush1.bf16.msra.mxu0 0
        %2623 = vmatprep.subr.bf16.mxu0 0
        %2624 = vmatpush1.bf16.msra.mxu0 0
        %2625 = vmatprep.subr.bf16.mxu0 0
        %2626 = vmatpush1.bf16.msra.mxu0 0
        %2627 = vmatprep.subr.bf16.mxu0 0
        %2628 = vmatpush1.bf16.msra.mxu0 0
        %2629 = vmatprep.mubr.bf16.mxu0 0
        %2630 = vmatmul.mubr.bf16.gmra.mrb[0].mxu0 %v2595
        %v2631 = vpop.f32.mrb[0].mxu0
        %v2632 = vadd.f32 %v2580, %v2631
        %v2633 = vpop.f32.mrb[0].mxu0
        %v2634 = vpop.f32.mrb[0].mxu0
        %v2635 = vadd.f32 %v2580, %v2634
        %v2636 = vpop.f32.mrb[0].mxu0
        %2637 = vdwg.mxu0
        %v2638 = vadd.f32 %v1928, %v2632
        %v2639 = vadd.f32 %v1929, %v2635
        %s2640 = scalar_lea.vmem %s11, 1
        %v2641 = vld [vmem:[%s2640] sm:$0x1]
        %s2642 = scalar_lea.vmem %s12, 1
        %v2643 = vld [vmem:[%s2642] sm:$0x1]
        %v2644 = vsel %vm821, %v2638, 0.0
        %2645 = vadd.xlane.f32.xlu0 %v2644
        %v2646 = vpop.xlane.xlu0 %2645
        %v2647 = vsel %vm821, %v2639, 0.0
        %2648 = vadd.xlane.f32.xlu0 %v2647
        %v2649 = vpop.xlane.xlu0 %2648
        %v2650 = vmul.f32 %v2646, %v1022
        %v2651 = vmul.f32 %v2649, %v1022
        %v2652 = vsub.f32 %v2638, %v2650
        %v2653 = vsub.f32 %v2639, %v2651
        %v2654 = vmul.f32 %v2652, %v2652
        %v2655 = vmul.f32 %v2653, %v2653
        %v2656 = vsel %vm821, %v2654, 0.0
        %2657 = vadd.xlane.f32.xlu0 %v2656
        %v2658 = vpop.xlane.xlu0 %2657
        %v2659 = vsel %vm821, %v2655, 0.0
        %2660 = vadd.xlane.f32.xlu0 %v2659
        %v2661 = vpop.xlane.xlu0 %2660
        %v2662 = vmul.f32 %v2658, %v1022
        %v2663 = vmul.f32 %v2661, %v1022
        %v2664 = vadd.f32 %v2662, 1e-05
        %v2665 = vadd.f32 %v2663, 1e-05
        %v2666 = vrsqrt.pop %v2664
        %v2667 = vrsqrt.pop %v2665
        %v2668 = vmul.f32 %v2652, %v2666
        %v2669 = vmul.f32 %v2653, %v2667
        %v2671 = vlaneseq
        %v2672 = vshrl.u32 %v2671, 7
        %v2673 = vsub.s32 0, %v2672
        %v2674 = vrot.slane %v2641, %v2673
        %v2676 = vmul.f32 %v2668, %v2674
        %v2677 = vmul.f32 %v2669, %v2674
        %v2679 = vlaneseq
        %v2680 = vshrl.u32 %v2679, 7
        %v2681 = vsub.s32 0, %v2680
        %v2682 = vrot.slane %v2643, %v2681
        %v2684 = vadd.f32 %v2676, %v2682
        %v2685 = vadd.f32 %v2677, %v2682
        %s2686 = scalar_lea.vmem %s13, 16
        %v2687 = vld [vmem:[%s2686] sm:$0xf]
        %v2688 = vld [vmem:[%s2686 + $0x4] sm:$0xf]
        %v2689 = vld [vmem:[%s2686 + $0x8] sm:$0xf]
        %v2690 = vld [vmem:[%s2686 + $0xc] sm:$0xf]
        %s2691 = scalar_lea.vmem %s14, 1
        %v2692 = vld [vmem:[%s2691] sm:$0x1]
        %v2693 = vpack.c.bf16 %v2685, %v2684
        %v2695 = vlaneseq
        %v2696 = vshrl.u32 %v2695, 7
        %v2697 = vsub.s32 0, %v2696
        %v2698 = vrot.slane %v2692, %v2697
        %v2704 = vunpack.c.l.b16 %v2687
        %v2705 = vunpack.c.l.b16 %v2688
        %v2706 = vunpack.c.l.b16 %v2689
        %v2707 = vunpack.c.l.b16 %v2690
        %v2708 = vpack.c.b16 %v2705, %v2704
        %v2709 = vpack.c.b16 %v2707, %v2706
        %v2713 = vsel %vm821, %v2693, 0
        %2715 = vmatprep.subr.bf16.mxu0 0
        %2716 = vmatpush1.bf16.msra.mxu0 %v2708
        %2717 = vmatprep.subr.bf16.mxu0 0
        %2718 = vmatpush1.bf16.msra.mxu0 %v2709
        %2719 = vmatprep.subr.bf16.mxu0 0
        %2720 = vmatpush1.bf16.msra.mxu0 0
        %2721 = vmatprep.subr.bf16.mxu0 0
        %2722 = vmatpush1.bf16.msra.mxu0 0
        %2723 = vmatprep.subr.bf16.mxu0 0
        %2724 = vmatpush1.bf16.msra.mxu0 0
        %2725 = vmatprep.subr.bf16.mxu0 0
        %2726 = vmatpush1.bf16.msra.mxu0 0
        %2727 = vmatprep.subr.bf16.mxu0 0
        %2728 = vmatpush1.bf16.msra.mxu0 0
        %2729 = vmatprep.subr.bf16.mxu0 0
        %2730 = vmatpush1.bf16.msra.mxu0 0
        %2731 = vmatprep.subr.bf16.mxu0 0
        %2732 = vmatpush1.bf16.msra.mxu0 0
        %2733 = vmatprep.subr.bf16.mxu0 0
        %2734 = vmatpush1.bf16.msra.mxu0 0
        %2735 = vmatprep.subr.bf16.mxu0 0
        %2736 = vmatpush1.bf16.msra.mxu0 0
        %2737 = vmatprep.subr.bf16.mxu0 0
        %2738 = vmatpush1.bf16.msra.mxu0 0
        %2739 = vmatprep.subr.bf16.mxu0 0
        %2740 = vmatpush1.bf16.msra.mxu0 0
        %2741 = vmatprep.subr.bf16.mxu0 0
        %2742 = vmatpush1.bf16.msra.mxu0 0
        %2743 = vmatprep.subr.bf16.mxu0 0
        %2744 = vmatpush1.bf16.msra.mxu0 0
        %2745 = vmatprep.subr.bf16.mxu0 0
        %2746 = vmatpush1.bf16.msra.mxu0 0
        %2747 = vmatprep.mubr.bf16.mxu0 0
        %2748 = vmatmul.mubr.bf16.gmra.mrb[0].mxu0 %v2713
        %v2749 = vpop.f32.mrb[0].mxu0
        %v2750 = vadd.f32 %v2698, %v2749
        %v2751 = vpop.f32.mrb[0].mxu0
        %v2752 = vpop.f32.mrb[0].mxu0
        %v2753 = vadd.f32 %v2698, %v2752
        %v2754 = vpop.f32.mrb[0].mxu0
        %2755 = vdwg.mxu0
        %v2756 = vmul.f32 %v2750, 0.5
        %v2757 = vmul.f32 %v2753, 0.5
        %v2758 = vmul.f32 %v2750, 0.70710677
        %v2759 = vmul.f32 %v2753, 0.70710677
        %v2760 = verf.f32.pop %v2758
        %v2761 = verf.f32.pop %v2759
        %v2762 = vadd.f32 %v2760, 1.0
        %v2763 = vadd.f32 %v2761, 1.0
        %v2764 = vmul.f32 %v2756, %v2762
        %v2765 = vmul.f32 %v2757, %v2763
        %s2766 = scalar_lea.vmem %s15, 32
        %v2767 = vld [vmem:[%s2766] sm:$0xf]
        %v2768 = vld [vmem:[%s2766 + $0x4] sm:$0xf]
        %v2769 = vld [vmem:[%s2766 + $0x8] sm:$0xf]
        %v2770 = vld [vmem:[%s2766 + $0xc] sm:$0xf]
        %v2771 = vld [vmem:[%s2766 + $0x10] sm:$0xf]
        %v2772 = vld [vmem:[%s2766 + $0x14] sm:$0xf]
        %v2773 = vld [vmem:[%s2766 + $0x18] sm:$0xf]
        %v2774 = vld [vmem:[%s2766 + $0x1c] sm:$0xf]
        %s2775 = scalar_lea.vmem %s16, 1
        %v2776 = vld [vmem:[%s2775] sm:$0x1]
        %v2777 = vpack.c.bf16 %v2765, %v2764
        %v2779 = vlaneseq
        %v2780 = vshrl.u32 %v2779, 7
        %v2781 = vsub.s32 0, %v2780
        %v2782 = vrot.slane %v2776, %v2781
        %v2792 = vunpack.c.l.b16 %v2767
        %v2793 = vunpack.c.l.b16 %v2768
        %v2794 = vunpack.c.l.b16 %v2769
        %v2795 = vunpack.c.l.b16 %v2770
        %v2796 = vunpack.c.l.b16 %v2771
        %v2797 = vunpack.c.l.b16 %v2772
        %v2798 = vunpack.c.l.b16 %v2773
        %v2799 = vunpack.c.l.b16 %v2774
        %v2800 = vpack.c.b16 %v2793, %v2792
        %v2801 = vpack.c.b16 %v2795, %v2794
        %v2802 = vpack.c.b16 %v2797, %v2796
        %v2803 = vpack.c.b16 %v2799, %v2798
        %v2809 = vsel %vm824, %v2777, 0
        %2811 = vmatprep.subr.bf16.mxu0 0
        %2812 = vmatpush1.bf16.msra.mxu0 %v2800
        %2813 = vmatprep.subr.bf16.mxu0 0
        %2814 = vmatpush1.bf16.msra.mxu0 %v2801
        %2815 = vmatprep.subr.bf16.mxu0 0
        %2816 = vmatpush1.bf16.msra.mxu0 %v2802
        %2817 = vmatprep.subr.bf16.mxu0 0
        %2818 = vmatpush1.bf16.msra.mxu0 %v2803
        %2819 = vmatprep.subr.bf16.mxu0 0
        %2820 = vmatpush1.bf16.msra.mxu0 0
        %2821 = vmatprep.subr.bf16.mxu0 0
        %2822 = vmatpush1.bf16.msra.mxu0 0
        %2823 = vmatprep.subr.bf16.mxu0 0
        %2824 = vmatpush1.bf16.msra.mxu0 0
        %2825 = vmatprep.subr.bf16.mxu0 0
        %2826 = vmatpush1.bf16.msra.mxu0 0
        %2827 = vmatprep.subr.bf16.mxu0 0
        %2828 = vmatpush1.bf16.msra.mxu0 0
        %2829 = vmatprep.subr.bf16.mxu0 0
        %2830 = vmatpush1.bf16.msra.mxu0 0
        %2831 = vmatprep.subr.bf16.mxu0 0
        %2832 = vmatpush1.bf16.msra.mxu0 0
        %2833 = vmatprep.subr.bf16.mxu0 0
        %2834 = vmatpush1.bf16.msra.mxu0 0
        %2835 = vmatprep.subr.bf16.mxu0 0
        %2836 = vmatpush1.bf16.msra.mxu0 0
        %2837 = vmatprep.subr.bf16.mxu0 0
        %2838 = vmatpush1.bf16.msra.mxu0 0
        %2839 = vmatprep.subr.bf16.mxu0 0
        %2840 = vmatpush1.bf16.msra.mxu0 0
        %2841 = vmatprep.subr.bf16.mxu0 0
        %2842 = vmatpush1.bf16.msra.mxu0 0
        %2843 = vmatprep.mubr.bf16.mxu0 0
        %2844 = vmatmul.mubr.bf16.gmra.mrb[0].mxu0 %v2809
        %v2845 = vpop.f32.mrb[0].mxu0
        %v2846 = vadd.f32 %v2782, %v2845
        %v2847 = vpop.f32.mrb[0].mxu0
        %v2848 = vpop.f32.mrb[0].mxu0
        %v2849 = vadd.f32 %v2782, %v2848
        %v2850 = vpop.f32.mrb[0].mxu0
        %2851 = vdwg.mxu0
        %v2852 = vadd.f32 %v2638, %v2846
        %v2853 = vadd.f32 %v2639, %v2849
        %v2854 = vld [vmem:[%s17] sm:$0x1]
        %v2855 = vld [vmem:[%s18] sm:$0x1]
        %v2856 = vsel %vm821, %v2852, 0.0
        %2857 = vadd.xlane.f32.xlu0 %v2856
        %v2858 = vpop.xlane.xlu0 %2857
        %v2859 = vsel %vm821, %v2853, 0.0
        %2860 = vadd.xlane.f32.xlu0 %v2859
        %v2861 = vpop.xlane.xlu0 %2860
        %v2862 = vmul.f32 %v2858, %v1022
        %v2863 = vmul.f32 %v2861, %v1022
        %v2864 = vsub.f32 %v2852, %v2862
        %v2865 = vsub.f32 %v2853, %v2863
        %v2866 = vmul.f32 %v2864, %v2864
        %v2867 = vmul.f32 %v2865, %v2865
        %v2868 = vsel %vm821, %v2866, 0.0
        %2869 = vadd.xlane.f32.xlu0 %v2868
        %v2870 = vpop.xlane.xlu0 %2869
        %v2871 = vsel %vm821, %v2867, 0.0
        %2872 = vadd.xlane.f32.xlu0 %v2871
        %v2873 = vpop.xlane.xlu0 %2872
        %v2874 = vmul.f32 %v2870, %v1022
        %v2875 = vmul.f32 %v2873, %v1022
        %v2876 = vadd.f32 %v2874, 1e-05
        %v2877 = vadd.f32 %v2875, 1e-05
        %v2878 = vrsqrt.pop %v2876
        %v2879 = vrsqrt.pop %v2877
        %v2880 = vmul.f32 %v2864, %v2878
        %v2881 = vmul.f32 %v2865, %v2879
        %v2883 = vlaneseq
        %v2884 = vshrl.u32 %v2883, 7
        %v2885 = vsub.s32 0, %v2884
        %v2886 = vrot.slane %v2854, %v2885
        %v2888 = vmul.f32 %v2880, %v2886
        %v2889 = vmul.f32 %v2881, %v2886
        %v2891 = vlaneseq
        %v2892 = vshrl.u32 %v2891, 7
        %v2893 = vsub.s32 0, %v2892
        %v2894 = vrot.slane %v2855, %v2893
        %v2896 = vadd.f32 %v2888, %v2894
        %v2897 = vadd.f32 %v2889, %v2894
        %v2898 = vld [vmem:[%s19] sm:$0xf]
        %v2899 = vld [vmem:[%s19 + $0x4] sm:$0xf]
        %v2900 = vld [vmem:[%s19 + $0x8] sm:$0xf]
        %v2901 = vld [vmem:[%s19 + $0xc] sm:$0xf]
        %v2902 = vld [vmem:[%s20] sm:$0x1]
        %v2903 = vpack.c.bf16 %v2897, %v2896
        %v2905 = vlaneseq
        %v2906 = vshrl.u32 %v2905, 7
        %v2907 = vsub.s32 0, %v2906
        %v2908 = vrot.slane %v2902, %v2907
        %v2914 = vunpack.c.l.b16 %v2898
        %v2915 = vunpack.c.l.b16 %v2899
        %v2916 = vunpack.c.l.b16 %v2900
        %v2917 = vunpack.c.l.b16 %v2901
        %v2918 = vpack.c.b16 %v2915, %v2914
        %v2919 = vpack.c.b16 %v2917, %v2916
        %v2923 = vsel %vm821, %v2903, 0
        %2925 = vmatprep.subr.bf16.mxu0 0
        %2926 = vmatpush1.bf16.msra.mxu0 %v2918
        %2927 = vmatprep.subr.bf16.mxu0 0
        %2928 = vmatpush1.bf16.msra.mxu0 %v2919
        %2929 = vmatprep.subr.bf16.mxu0 0
        %2930 = vmatpush1.bf16.msra.mxu0 0
        %2931 = vmatprep.subr.bf16.mxu0 0
        %2932 = vmatpush1.bf16.msra.mxu0 0
        %2933 = vmatprep.subr.bf16.mxu0 0
        %2934 = vmatpush1.bf16.msra.mxu0 0
        %2935 = vmatprep.subr.bf16.mxu0 0
        %2936 = vmatpush1.bf16.msra.mxu0 0
        %2937 = vmatprep.subr.bf16.mxu0 0
        %2938 = vmatpush1.bf16.msra.mxu0 0
        %2939 = vmatprep.subr.bf16.mxu0 0
        %2940 = vmatpush1.bf16.msra.mxu0 0
        %2941 = vmatprep.subr.bf16.mxu0 0
        %2942 = vmatpush1.bf16.msra.mxu0 0
        %2943 = vmatprep.subr.bf16.mxu0 0
        %2944 = vmatpush1.bf16.msra.mxu0 0
        %2945 = vmatprep.subr.bf16.mxu0 0
        %2946 = vmatpush1.bf16.msra.mxu0 0
        %2947 = vmatprep.subr.bf16.mxu0 0
        %2948 = vmatpush1.bf16.msra.mxu0 0
        %2949 = vmatprep.subr.bf16.mxu0 0
        %2950 = vmatpush1.bf16.msra.mxu0 0
        %2951 = vmatprep.subr.bf16.mxu0 0
        %2952 = vmatpush1.bf16.msra.mxu0 0
        %2953 = vmatprep.subr.bf16.mxu0 0
        %2954 = vmatpush1.bf16.msra.mxu0 0
        %2955 = vmatprep.subr.bf16.mxu0 0
        %2956 = vmatpush1.bf16.msra.mxu0 0
        %2957 = vmatprep.mubr.bf16.mxu0 0
        %2958 = vmatmul.mubr.bf16.gmra.mrb[0].mxu0 %v2923
        %v2959 = vpop.f32.mrb[0].mxu0
        %v2960 = vadd.f32 %v2908, %v2959
        %v2961 = vpop.f32.mrb[0].mxu0
        %v2962 = vpop.f32.mrb[0].mxu0
        %v2963 = vadd.f32 %v2908, %v2962
        %v2964 = vpop.f32.mrb[0].mxu0
        %2965 = vdwg.mxu0
        %v2966 = vxor.u32 %v2960, 2147483648
        %v2967 = vxor.u32 %v2963, 2147483648
        %v2968 = vmul.f32 %v2966, 1.442695
        %v2969 = vpow.pop %v2968
        %v2970 = vmul.f32 %v2967, 1.442695
        %v2971 = vpow.pop %v2970
        %v2972 = vadd.f32 %v2969, 1.0
        %v2973 = vadd.f32 %v2971, 1.0
        %v2974 = vrcp.pop %v2972
        %v2975 = vmul.f32 1.0, %v2974
        %v2976 = vrcp.pop %v2973
        %v2977 = vmul.f32 1.0, %v2976
        %v2978 = vmul.f32 %v2960, %v2975
        %v2979 = vmul.f32 %v2963, %v2977
        %v2980 = vld [vmem:[%s21] sm:$0xf]
        %v2981 = vld [vmem:[%s21 + $0x4] sm:$0xf]
        %v2982 = vld [vmem:[%s21 + $0x8] sm:$0xf]
        %v2983 = vld [vmem:[%s21 + $0xc] sm:$0xf]
        %v2984 = vld [vmem:[%s21 + $0x10] sm:$0xf]
        %v2985 = vld [vmem:[%s21 + $0x14] sm:$0xf]
        %v2986 = vld [vmem:[%s21 + $0x18] sm:$0xf]
        %v2987 = vld [vmem:[%s21 + $0x1c] sm:$0xf]
        %v2988 = vld [vmem:[%s21 + $0x20] sm:$0xf]
        %v2989 = vld [vmem:[%s21 + $0x24] sm:$0xf]
        %v2990 = vld [vmem:[%s21 + $0x28] sm:$0xf]
        %v2991 = vld [vmem:[%s21 + $0x2c] sm:$0xf]
        %v2994 = vrot.slane %v2978, 7
        %v2995 = vrot.slane %v2979, 7
        %v2996 = vsel %vm795, %v2994, %v2995
        %v2999 = vsel %vm795, 0.0, %v2994
        %v3000 = vrot.slane %v2978, 1
        %v3001 = vrot.slane %v2979, 1
        %v3002 = vsel %vm802, %v3000, %v3001
        %v3004 = vsel %vm802, %v3001, 0.0
        %3005 = vrot.lane.b32.xlu0 %v2978, 32
        %v3006 = vpop.permute.xlu0 %3005
        %3007 = vrot.lane.b32.xlu0 %v2979, 32
        %v3008 = vpop.permute.xlu0 %3007
        %3012 = vrot.lane.b32.xlu0 %v3002, 64
        %v3013 = vpop.permute.xlu0 %3012
        %3014 = vrot.lane.b32.xlu0 %v3004, 64
        %v3015 = vpop.permute.xlu0 %3014
        %v3018 = vsel %vm821, %v2999, %v3006
        %v3019 = vsel %vm821, %v2996, %v3008
        %v3020 = vsel %vm824, %v3018, %v3013
        %v3021 = vsel %vm824, %v3019, %v3015
        %v3022 = vpack.c.bf16 %v3021, %v3020
        %v3023 = vld [vmem:[%s22] sm:$0xf]
        %v3024 = vld [vmem:[%s22 + $0x4] sm:$0xf]
        %v3025 = vld [vmem:[%s22 + $0x8] sm:$0xf]
        %v3026 = vld [vmem:[%s22 + $0xc] sm:$0xf]
        %v3027 = vld [vmem:[%s22 + $0x10] sm:$0xf]
        %v3028 = vld [vmem:[%s22 + $0x14] sm:$0xf]
        %v3029 = vld [vmem:[%s22 + $0x18] sm:$0xf]
        %v3030 = vld [vmem:[%s22 + $0x1c] sm:$0xf]
        %v3031 = vld [vmem:[%s22 + $0x20] sm:$0xf]
        %v3032 = vld [vmem:[%s22 + $0x24] sm:$0xf]
        %v3033 = vld [vmem:[%s22 + $0x28] sm:$0xf]
        %v3034 = vld [vmem:[%s22 + $0x2c] sm:$0xf]
        %v3047 = vunpack.c.l.b16 %v3023
        %v3048 = vunpack.c.l.b16 %v3024
        %v3049 = vunpack.c.l.b16 %v3025
        %v3050 = vunpack.c.l.b16 %v3026
        %v3051 = vunpack.c.l.b16 %v3027
        %v3052 = vunpack.c.l.b16 %v3028
        %v3053 = vunpack.c.l.b16 %v3029
        %v3054 = vunpack.c.l.b16 %v3030
        %v3055 = vunpack.c.l.b16 %v3031
        %v3056 = vunpack.c.l.b16 %v3032
        %v3057 = vunpack.c.l.b16 %v3033
        %v3058 = vunpack.c.l.b16 %v3034
        %v3059 = vpack.c.b16 %v3048, %v3047
        %v3060 = vpack.c.b16 %v3050, %v3049
        %v3061 = vpack.c.b16 %v3052, %v3051
        %v3062 = vpack.c.b16 %v3054, %v3053
        %v3063 = vpack.c.b16 %v3056, %v3055
        %v3064 = vpack.c.b16 %v3058, %v3057
        %v3072 = vsel %vm883, %v3022, 0
        %3074 = vmatprep.subr.bf16.mxu0 0
        %3075 = vmatpush1.bf16.msra.mxu0 %v3059
        %3076 = vmatprep.subr.bf16.mxu0 0
        %3077 = vmatpush1.bf16.msra.mxu0 %v3060
        %3078 = vmatprep.subr.bf16.mxu0 0
        %3079 = vmatpush1.bf16.msra.mxu0 %v3061
        %3080 = vmatprep.subr.bf16.mxu0 0
        %3081 = vmatpush1.bf16.msra.mxu0 %v3062
        %3082 = vmatprep.subr.bf16.mxu0 0
        %3083 = vmatpush1.bf16.msra.mxu0 %v3063
        %3084 = vmatprep.subr.bf16.mxu0 0
        %3085 = vmatpush1.bf16.msra.mxu0 %v3064
        %3086 = vmatprep.subr.bf16.mxu0 0
        %3087 = vmatpush1.bf16.msra.mxu0 0
        %3088 = vmatprep.subr.bf16.mxu0 0
        %3089 = vmatpush1.bf16.msra.mxu0 0
        %3090 = vmatprep.subr.bf16.mxu0 0
        %3091 = vmatpush1.bf16.msra.mxu0 0
        %3092 = vmatprep.subr.bf16.mxu0 0
        %3093 = vmatpush1.bf16.msra.mxu0 0
        %3094 = vmatprep.subr.bf16.mxu0 0
        %3095 = vmatpush1.bf16.msra.mxu0 0
        %3096 = vmatprep.subr.bf16.mxu0 0
        %3097 = vmatpush1.bf16.msra.mxu0 0
        %3098 = vmatprep.subr.bf16.mxu0 0
        %3099 = vmatpush1.bf16.msra.mxu0 0
        %3100 = vmatprep.subr.bf16.mxu0 0
        %3101 = vmatpush1.bf16.msra.mxu0 0
        %3102 = vmatprep.subr.bf16.mxu0 0
        %3103 = vmatpush1.bf16.msra.mxu0 0
        %3104 = vmatprep.subr.bf16.mxu0 0
        %3105 = vmatpush1.bf16.msra.mxu0 0
        %3106 = vmatprep.mubr.bf16.mxu0 0
        %3107 = vmatmul.mubr.bf16.gmra.mrb[0].mxu0 %v3072
        %v3108 = vpop.f32.mrb[0].mxu0
        %v3109 = vadd.f32 0.0, %v3108
        %v3110 = vpop.f32.mrb[0].mxu0
        %v3111 = vpop.f32.mrb[0].mxu0
        %v3112 = vadd.f32 0.0, %v3111
        %v3113 = vpop.f32.mrb[0].mxu0
        %3114 = vdwg.mxu0
        %v3127 = vunpack.c.l.b16 %v2980
        %v3128 = vunpack.c.l.b16 %v2981
        %v3129 = vunpack.c.l.b16 %v2982
        %v3130 = vunpack.c.l.b16 %v2983
        %v3131 = vunpack.c.l.b16 %v2984
        %v3132 = vunpack.c.l.b16 %v2985
        %v3133 = vunpack.c.l.b16 %v2986
        %v3134 = vunpack.c.l.b16 %v2987
        %v3135 = vunpack.c.l.b16 %v2988
        %v3136 = vunpack.c.l.b16 %v2989
        %v3137 = vunpack.c.l.b16 %v2990
        %v3138 = vunpack.c.l.b16 %v2991
        %v3139 = vpack.c.b16 %v3128, %v3127
        %v3140 = vpack.c.b16 %v3130, %v3129
        %v3141 = vpack.c.b16 %v3132, %v3131
        %v3142 = vpack.c.b16 %v3134, %v3133
        %v3143 = vpack.c.b16 %v3136, %v3135
        %v3144 = vpack.c.b16 %v3138, %v3137
        %3151 = vmatprep.subr.bf16.mxu0 0
        %3152 = vmatpush1.bf16.msra.mxu0 %v3139
        %3153 = vmatprep.subr.bf16.mxu0 0
        %3154 = vmatpush1.bf16.msra.mxu0 %v3140
        %3155 = vmatprep.subr.bf16.mxu0 0
        %3156 = vmatpush1.bf16.msra.mxu0 %v3141
        %3157 = vmatprep.subr.bf16.mxu0 0
        %3158 = vmatpush1.bf16.msra.mxu0 %v3142
        %3159 = vmatprep.subr.bf16.mxu0 0
        %3160 = vmatpush1.bf16.msra.mxu0 %v3143
        %3161 = vmatprep.subr.bf16.mxu0 0
        %3162 = vmatpush1.bf16.msra.mxu0 %v3144
        %3163 = vmatprep.subr.bf16.mxu0 0
        %3164 = vmatpush1.bf16.msra.mxu0 0
        %3165 = vmatprep.subr.bf16.mxu0 0
        %3166 = vmatpush1.bf16.msra.mxu0 0
        %3167 = vmatprep.subr.bf16.mxu0 0
        %3168 = vmatpush1.bf16.msra.mxu0 0
        %3169 = vmatprep.subr.bf16.mxu0 0
        %3170 = vmatpush1.bf16.msra.mxu0 0
        %3171 = vmatprep.subr.bf16.mxu0 0
        %3172 = vmatpush1.bf16.msra.mxu0 0
        %3173 = vmatprep.subr.bf16.mxu0 0
        %3174 = vmatpush1.bf16.msra.mxu0 0
        %3175 = vmatprep.subr.bf16.mxu0 0
        %3176 = vmatpush1.bf16.msra.mxu0 0
        %3177 = vmatprep.subr.bf16.mxu0 0
        %3178 = vmatpush1.bf16.msra.mxu0 0
        %3179 = vmatprep.subr.bf16.mxu0 0
        %3180 = vmatpush1.bf16.msra.mxu0 0
        %3181 = vmatprep.subr.bf16.mxu0 0
        %3182 = vmatpush1.bf16.msra.mxu0 0
        %3183 = vmatprep.mubr.bf16.mxu0 0
        %3184 = vmatmul.mubr.bf16.gmra.mrb[0].mxu0 %v885
        %v3185 = vpop.f32.mrb[0].mxu0
        %v3186 = vadd.f32 %v3109, %v3185
        %v3187 = vpop.f32.mrb[0].mxu0
        %v3188 = vpop.f32.mrb[0].mxu0
        %v3189 = vadd.f32 %v3112, %v3188
        %v3190 = vpop.f32.mrb[0].mxu0
        %3191 = vdwg.mxu0
        %v3192 = vld [vmem:[%s23] sm:$0x1]
        %v3194 = vlaneseq
        %v3195 = vshrl.u32 %v3194, 7
        %v3196 = vsub.s32 0, %v3195
        %v3197 = vrot.slane %v3192, %v3196
        %v3199 = vadd.f32 %v3186, %v3197
        %v3200 = vadd.f32 %v3189, %v3197
        %v3201 = vxor.u32 %v3199, 2147483648
        %v3202 = vxor.u32 %v3200, 2147483648
        %v3203 = vmul.f32 %v3201, 1.442695
        %v3204 = vpow.pop %v3203
        %v3205 = vmul.f32 %v3202, 1.442695
        %v3206 = vpow.pop %v3205
        %v3207 = vadd.f32 %v3204, 1.0
        %v3208 = vadd.f32 %v3206, 1.0
        %v3209 = vrcp.pop %v3207
        %v3210 = vmul.f32 1.0, %v3209
        %v3211 = vrcp.pop %v3208
        %v3212 = vmul.f32 1.0, %v3211
        %v3213 = vmul.f32 %v3199, %v3210
        %v3214 = vmul.f32 %v3200, %v3212
        %v3215 = vld [vmem:[%s24] sm:$0x3]
        %v3216 = vld [vmem:[%s25] sm:$0x1]
        %v3217 = vpack.c.bf16 %v3214, %v3213
        %v3219 = vlaneseq
        %v3220 = vshrl.u32 %v3219, 7
        %v3221 = vsub.s32 0, %v3220
        %v3222 = vrot.slane %v3216, %v3221
        %v3225 = vsel %vm951, %v3217, 0
        %v3228 = vsel %vm955, %v3215, 0
        %3230 = vmatprep.subr.bf16.mxu0 0
        %3231 = vmatpush1.bf16.msra.mxu0 %v3228
        %3232 = vmatprep.subr.bf16.mxu0 0
        %3233 = vmatpush1.bf16.msra.mxu0 0
        %3234 = vmatprep.subr.bf16.mxu0 0
        %3235 = vmatpush1.bf16.msra.mxu0 0
        %3236 = vmatprep.subr.bf16.mxu0 0
        %3237 = vmatpush1.bf16.msra.mxu0 0
        %3238 = vmatprep.subr.bf16.mxu0 0
        %3239 = vmatpush1.bf16.msra.mxu0 0
        %3240 = vmatprep.subr.bf16.mxu0 0
        %3241 = vmatpush1.bf16.msra.mxu0 0
        %3242 = vmatprep.subr.bf16.mxu0 0
        %3243 = vmatpush1.bf16.msra.mxu0 0
        %3244 = vmatprep.subr.bf16.mxu0 0
        %3245 = vmatpush1.bf16.msra.mxu0 0
        %3246 = vmatprep.subr.bf16.mxu0 0
        %3247 = vmatpush1.bf16.msra.mxu0 0
        %3248 = vmatprep.subr.bf16.mxu0 0
        %3249 = vmatpush1.bf16.msra.mxu0 0
        %3250 = vmatprep.subr.bf16.mxu0 0
        %3251 = vmatpush1.bf16.msra.mxu0 0
        %3252 = vmatprep.subr.bf16.mxu0 0
        %3253 = vmatpush1.bf16.msra.mxu0 0
        %3254 = vmatprep.subr.bf16.mxu0 0
        %3255 = vmatpush1.bf16.msra.mxu0 0
        %3256 = vmatprep.subr.bf16.mxu0 0
        %3257 = vmatpush1.bf16.msra.mxu0 0
        %3258 = vmatprep.subr.bf16.mxu0 0
        %3259 = vmatpush1.bf16.msra.mxu0 0
        %3260 = vmatprep.subr.bf16.mxu0 0
        %3261 = vmatpush1.bf16.msra.mxu0 0
        %3262 = vmatprep.mubr.bf16.mxu0 0
        %3263 = vmatmul.mubr.bf16.gmra.mrb[0].mxu0 %v3225
        %v3264 = vpop.f32.mrb[0].mxu0
        %v3265 = vadd.f32 %v3222, %v3264
        %v3266 = vpop.f32.mrb[0].mxu0
        %v3267 = vpop.f32.mrb[0].mxu0
        %v3268 = vadd.f32 %v3222, %v3267
        %v3269 = vpop.f32.mrb[0].mxu0
        %3270 = vdwg.mxu0
        %v3271 = vxor.u32 %v3265, 2147483648
        %v3272 = vxor.u32 %v3268, 2147483648
        %v3273 = vmul.f32 %v3271, 1.442695
        %v3274 = vpow.pop %v3273
        %v3275 = vmul.f32 %v3272, 1.442695
        %v3276 = vpow.pop %v3275
        %v3277 = vadd.f32 %v3274, 1.0
        %v3278 = vadd.f32 %v3276, 1.0
        %v3279 = vrcp.pop %v3277
        %v3280 = vmul.f32 1.0, %v3279
        %v3281 = vrcp.pop %v3278
        %v3282 = vmul.f32 1.0, %v3281
        %v3283 = vmul.f32 %v3265, %v3280
        %v3284 = vmul.f32 %v3268, %v3282
        %3285 = vst.msk [vmem:[%s784] sm:$0xff] %vm1181, %v3283
        %3286 = vst.msk [vmem:[%s784 + $0x8] sm:$0xff] %vm1181, %v3284
        %s3287 = sand.u32 %s599, 1
        %s3288 = scalar_lea.sflag [#allocation3], %s3287
        %s3289 = sand.u32 %s599, 1
        %s3290 = smul.addr %s3289, 16
        %s3291 = scalar_lea.vmem [#allocation2], %s3290
        // Predicated region
        $region125: #{sequence_encoder_svtr.1} parent=123 // pred_check
          %p3292 = pneg %p609
        $region126: #{sequence_encoder_svtr.1} parent=123 // pred_check_branch
          %3294 = sbr.rel (%p3292) target = $region128
        $region127: #{sequence_encoder_svtr.1} parent=123 // pred_region
          %s3296 = ssub.s32 256, 256
          %3297 = vsyncadd %s3288, %s3296
          %s3298 = smul.addr %s40, 2
          %s3299 = smul.addr %s3298, 128
          %s3300 = scalar_lea.hbm %s26, %s3299
          %s3301 = sshll.u32 %s3291, 4
          %s3302 = int_to_ptr.vmem [resolvable:$true] %s3301
          %3307 = dma.vmem_to_hbm [thread:$0]  %s3302, 256, %s3300, %s3288, 128, 128, 8
        $region128: #{sequence_encoder_svtr.1} parent=123 // pred_fallthru
          _
      $region124: #{sequence_encoder_svtr.1} parent=5 // pred_fallthru
        _
      %p3308 = scmp.le.s32.totalorder 2, %s35
      // Predicated region
      $region129: #{sequence_encoder_svtr.1} parent=5 // pred_check
        %p3309 = pneg %p3308
      $region130: #{sequence_encoder_svtr.1} parent=5 // pred_check_branch
        %3311 = sbr.rel (%p3309) target = $region132
      $region131: #{sequence_encoder_svtr.1} parent=5 // pred_region
        %s3312 = ssub.s32 %s35, 2
        // Predicated region
        $region133: #{sequence_encoder_svtr.1} parent=131 // pred_check
          %p3313 = pneg %p615
        $region134: #{sequence_encoder_svtr.1} parent=131 // pred_check_branch
          %3315 = sbr.rel (%p3313) target = $region136
        $region135: #{sequence_encoder_svtr.1} parent=131 // pred_region
          %s3316 = sand.u32 %s600, 1
          %s3317 = scalar_lea.sflag [#allocation3], %s3316
          %s3318 = sand.u32 %s600, 1
          %s3319 = smul.addr %s3318, 16
          %s3320 = scalar_lea.vmem [#allocation2], %s3319
          %3321 = dma.done %s3317, 256
        $region136: #{sequence_encoder_svtr.1} parent=131 // pred_fallthru
          _
      $region132: #{sequence_encoder_svtr.1} parent=5 // pred_fallthru
        _
    $region6: #{sequence_encoder_svtr.1} parent=1 // loop_footer
      %s39 = sadd.s32 1, %s35
    $region7: #{sequence_encoder_svtr.1} parent=1 // loop_footer_branch
      %34 = sbr.rel target = $region3
    $region8: #{sequence_encoder_svtr.1} parent=1 // loop_exit
      _
    %3322 = vsyncpa [#allocation3], 1
    %s3323 = scalar_lea.sflag [#allocation3], 1
    %3324 = vsyncpa %s3323, 1

</llo_original>
